<compile_context>
chip_gen: v5e
topology: v5e:2x2
jax: 0.10.0
libtpu: 0.0.40
codegen_flags: <defaults>
</compile_context>

<pallas_src>
import jax
import jax.numpy as jnp
from jax import lax
from jax.experimental import pallas as pl
from jax.experimental.pallas import tpu as pltpu

NEG_SLOPE = 0.2
BN_EPS = 1e-5
# Worst-case resident set with TM=1024, TK=4096, TN=256 is ~22 MiB, so 48 MiB
# is safe on v7x (64 MiB physical VMEM) and generous on v5e/v6e (128 MiB).
VMEM_LIMIT_BYTES = 48 * 1024 * 1024


# ---------------- helpers ----------------

def _largest_tile(dim, cap, align):
    """Largest divisor of `dim` that is <= cap and a multiple of `align`.
    Falls back to the full dim (always a legal block extent)."""
    if dim <= cap:
        return dim
    t = (cap // align) * align
    while t >= align:
        if dim % t == 0:
            return t
        t -= align
    return dim


_TN_CAP = None


def _tn_cap():
    """MXU-native output-tile width per generation: 128 on v5e, 256 on v6e/v7x."""
    global _TN_CAP
    if _TN_CAP is None:
        try:
            kind = jax.devices()[0].device_kind.lower()
        except Exception:
            kind = ""
        _TN_CAP = 128 if "v5" in kind else 256
    return _TN_CAP


def _im2col(x_nhwc, kh, kw, stride, pad):
    N, H, W, C = x_nhwc.shape
    xp = jnp.pad(x_nhwc, ((0, 0), (pad, pad), (pad, pad), (0, 0)))
    OH = (H + 2 * pad - kh) // stride + 1
    OW = (W + 2 * pad - kw) // stride + 1
    cols = []
    for i in range(kh):
        for j in range(kw):
            cols.append(xp[:, i:i + stride * OH:stride, j:j + stride * OW:stride, :])
    patches = jnp.concatenate(cols, axis=-1).reshape(N * OH * OW, kh * kw * C)
    return patches, (N, OH, OW)


def _bn_scale_shift(s, sq, count, gamma, beta):
    """Training-mode BatchNorm scale/shift from batch sums (biased variance,
    matching PyTorch BN training normalization)."""
    mean = s / count
    var = sq / count - mean * mean
    # TODO(synk): E[y^2]-E[y]^2 can cancel for very large activations; fine at
    # DCGAN scales with f32 sums.
    invstd = lax.rsqrt(var + BN_EPS)
    scale = gamma.astype(jnp.float32) * invstd
    shift = beta.astype(jnp.float32) - mean * scale
    return scale, shift


# ---------------- Pallas kernels ----------------

def _conv_kernel_fullk(fuse_bn_stats):
    """Full-K matmul (no reduction grid axis): y = P @ W + b, fused epilogue."""
    if fuse_bn_stats:
        def kernel(p_ref, w_ref, b_ref, y_ref, sum_ref, sq_ref):
            y = jnp.dot(p_ref[...], w_ref[...],
                        preferred_element_type=jnp.float32) + b_ref[...]
            y_ref[...] = y.astype(y_ref.dtype)
            # Per-tile partial stats, reduced only along the leading axis
            # (VALU adds of (8, TN) vregs; no cross-sublane XLU reduce here).
            sg = sum_ref.shape[0]
            y3 = y.reshape(y.shape[0] // sg, sg, y.shape[1])
            sum_ref[...] = jnp.sum(y3, axis=0)
            sq_ref[...] = jnp.sum(y3 * y3, axis=0)
    else:
        def kernel(p_ref, w_ref, b_ref, y_ref):
            y = jnp.dot(p_ref[...], w_ref[...],
                        preferred_element_type=jnp.float32) + b_ref[...]
            y_ref[...] = jnp.where(y > 0, y, NEG_SLOPE * y).astype(y_ref.dtype)
    return kernel


def _conv_kernel_ktiled(fuse_bn_stats):
    """K-tiled matmul with f32 VMEM accumulator (only used when K > 4096)."""
    def kernel(p_ref, w_ref, b_ref, y_ref, *rest):
        if fuse_bn_stats:
            sum_ref, sq_ref, acc_ref = rest
        else:
            (acc_ref,) = rest
        ki = pl.program_id(2)

        @pl.when(ki == 0)
        def _():
            acc_ref[...] = jnp.zeros_like(acc_ref)

        acc_ref[...] += jnp.dot(p_ref[...], w_ref[...],
                                preferred_element_type=jnp.float32)

        @pl.when(ki == pl.num_programs(2) - 1)
        def _():
            y = acc_ref[...] + b_ref[...]
            if fuse_bn_stats:
                y_ref[...] = y.astype(y_ref.dtype)
                sg = sum_ref.shape[0]
                y3 = y.reshape(y.shape[0] // sg, sg, y.shape[1])
                sum_ref[...] = jnp.sum(y3, axis=0)
                sq_ref[...] = jnp.sum(y3 * y3, axis=0)
            else:
                y_ref[...] = jnp.where(y > 0, y, NEG_SLOPE * y).astype(y_ref.dtype)
    return kernel


# ---------------- conv wrapper ----------------

def conv2d_pallas(x_nhwc, w, b, stride, pad, *, fuse_bn_stats, prenorm=None):
    """Conv2d via im2col matmul.
    fuse_bn_stats=False -> fused bias+LeakyReLU, bf16 output.
    fuse_bn_stats=True  -> fused bias, bf16 pre-activation + per-channel (sum, sumsq).
    prenorm=(scale, shift): previous layer's BN normalize + LeakyReLU, folded
    into this layer's patch construction (fused by XLA into the im2col build)."""
    cout, cin, kh, kw = w.shape

    if prenorm is not None:
        scale, shift = prenorm
        xf = x_nhwc.astype(jnp.float32) * scale + shift
        x_nhwc = jnp.where(xf > 0, xf, NEG_SLOPE * xf)

    # Pad Cin to a multiple of 8 so K = kh*kw*cin is lane-aligned (3 -> 8, so
    # K = 128 for the first 4x4 conv).  Zero padding is exact.
    cin_p = -(-cin // 8) * 8
    if cin_p != cin:
        x_nhwc = jnp.pad(x_nhwc, ((0, 0), (0, 0), (0, 0), (0, cin_p - cin)))
        w = jnp.pad(w, ((0, 0), (0, cin_p - cin), (0, 0), (0, 0)))
        cin = cin_p

    # bf16 operands for the MXU + half the im2col HBM traffic; accumulate in f32.
    patches, (N, OH, OW) = _im2col(x_nhwc.astype(jnp.bfloat16), kh, kw, stride, pad)
    M, K = patches.shape

    # Pad Cout up to a multiple of 128: lane-dense stores + full MXU width;
    # padded channels (zero weights / zero bias -> exactly zero) sliced later.
    cout_p = -(-cout // 128) * 128
    # (Cout, Cin, KH, KW) -> (KH, KW, Cin, Cout) to match patch feature ordering.
    w_mat = jnp.transpose(w, (2, 3, 1, 0)).reshape(K, cout).astype(jnp.bfloat16)
    b_row = b.reshape(1, cout).astype(jnp.float32)
    if cout_p != cout:
        w_mat = jnp.pad(w_mat, ((0, 0), (0, cout_p - cout)))
        b_row = jnp.pad(b_row, ((0, 0), (0, cout_p - cout)))

    TM = _largest_tile(M, 1024, 16)        # big M tiles, bf16-native alignment
    TK = _largest_tile(K, 4096, 128)       # TK == K for every layer at d<=128
    TN = _largest_tile(cout_p, _tn_cap(), 128)
    nmi = M // TM
    k_tiled = TK < K
    # Partial stats are (sg, TN) sublane blocks per (mi, ni) tile; sg=8 keeps
    # the block (8,128)-conformant (TM is a multiple of 16 whenever nmi > 1).
    sg = 8 if TM % 8 == 0 else 1

    if k_tiled:
        grid = (cout_p // TN, nmi, K // TK)            # ki innermost reduction
        p_spec = pl.BlockSpec((TM, TK), lambda ni, mi, ki: (mi, ki))
        w_spec = pl.BlockSpec((TK, TN), lambda ni, mi, ki: (ki, ni))
        b_spec = pl.BlockSpec((1, TN), lambda ni, mi, ki: (0, ni))
        y_spec = pl.BlockSpec((TM, TN), lambda ni, mi, ki: (mi, ni))
        s_spec = pl.BlockSpec((sg, TN), lambda ni, mi, ki: (mi, ni))
        scratch = [pltpu.VMEM((TM, TN), jnp.float32)]
        semantics = ("parallel", "parallel", "arbitrary")
        kernel = _conv_kernel_ktiled(fuse_bn_stats)
    else:
        # mi innermost: the (K, TN) weight strip's block index is independent of
        # mi, so it is DMA'd once per ni and reused across all M tiles.
        grid = (cout_p // TN, nmi)
        p_spec = pl.BlockSpec((TM, K), lambda ni, mi: (mi, 0))
        w_spec = pl.BlockSpec((K, TN), lambda ni, mi: (0, ni))
        b_spec = pl.BlockSpec((1, TN), lambda ni, mi: (0, ni))
        y_spec = pl.BlockSpec((TM, TN), lambda ni, mi: (mi, ni))
        s_spec = pl.BlockSpec((sg, TN), lambda ni, mi: (mi, ni))
        scratch = []
        semantics = ("parallel", "parallel")
        kernel = _conv_kernel_fullk(fuse_bn_stats)

    if fuse_bn_stats:
        out_shape = (jax.ShapeDtypeStruct((M, cout_p), jnp.bfloat16),
                     jax.ShapeDtypeStruct((nmi * sg, cout_p), jnp.float32),
                     jax.ShapeDtypeStruct((nmi * sg, cout_p), jnp.float32))
        out_specs = (y_spec, s_spec, s_spec)
    else:
        out_shape = jax.ShapeDtypeStruct((M, cout_p), jnp.bfloat16)
        out_specs = y_spec

    res = pl.pallas_call(
        kernel,
        out_shape=out_shape,
        grid=grid,
        in_specs=[p_spec, w_spec, b_spec],
        out_specs=out_specs,
        scratch_shapes=scratch,
        compiler_params=pltpu.CompilerParams(
            dimension_semantics=semantics,
            vmem_limit_bytes=VMEM_LIMIT_BYTES),
    )(patches, w_mat, b_row)

    if fuse_bn_stats:
        y, psum, psq = res
        s = jnp.sum(psum[:, :cout], axis=0)     # tiny XLA reduce over partials
        sq = jnp.sum(psq[:, :cout], axis=0)
        return (y[:, :cout], s, sq), (N, OH, OW, cout)
    return res[:, :cout], (N, OH, OW, cout)


def final_conv_sigmoid(x_nhwc, w, b):
    # Conv2d(8d, 1, 4, 1, 0) + Sigmoid.  Cout=1, M=N: too tiny for a Pallas call
    # (lane-width-1 output, fully masked stores) -> plain XLA per perf review.
    w_hwio = jnp.transpose(w, (2, 3, 1, 0)).astype(jnp.float32)  # (KH,KW,Cin,Cout)
    y = lax.conv_general_dilated(
        x_nhwc.astype(jnp.float32), w_hwio,
        window_strides=(1, 1), padding="VALID",
        dimension_numbers=("NHWC", "HWIO", "NHWC"))
    return jax.nn.sigmoid(y + b.reshape(1, 1, 1, -1))


# ---------------- Discriminator ----------------

def init_discriminator_params(key, d=8):
    # Conv2d(3,d)->Conv2d(d,2d)->Conv2d(2d,4d)->Conv2d(4d,8d)->Conv2d(8d,1), 4x4 kernels.
    layer_io = [(3, d), (d, 2 * d), (2 * d, 4 * d), (4 * d, 8 * d), (8 * d, 1)]
    params = []
    for li, (cin, cout) in enumerate(layer_io):
        key, wk = jax.random.split(key)
        w = 0.02 * jax.random.normal(wk, (cout, cin, 4, 4), jnp.float32)  # normal_init(0,.02)
        b = jnp.zeros((cout,), jnp.float32)
        entry = {"w": w, "b": b}
        if 1 <= li <= 3:  # BatchNorm after conv layers 2..4 (defaults: gamma=1, beta=0)
            entry["gamma"] = jnp.ones((cout,), jnp.float32)
            entry["beta"] = jnp.zeros((cout,), jnp.float32)
        params.append(entry)
    return params


def discriminator_forward(params, x_nchw):
    x = jnp.transpose(x_nchw, (0, 2, 3, 1)).astype(jnp.float32)  # NCHW -> NHWC

    # conv(3->d, k4 s2 p1) + LeakyReLU(0.2), fused in one Pallas matmul kernel.
    y, (N, OH, OW, C) = conv2d_pallas(x, params[0]["w"], params[0]["b"], 2, 1,
                                      fuse_bn_stats=False)
    x = y.reshape(N, OH, OW, C)
    prenorm = None

    # conv + BatchNorm batch-stats fused into the conv epilogue, three times.
    # Each layer's BN normalize + LeakyReLU is folded into the NEXT conv's
    # patch construction via (scale, shift) -> no standalone normalize pass.
    for li in (1, 2, 3):
        (y, s, sq), (N, OH, OW, C) = conv2d_pallas(
            x, params[li]["w"], params[li]["b"], 2, 1,
            fuse_bn_stats=True, prenorm=prenorm)
        prenorm = _bn_scale_shift(s, sq, N * OH * OW,
                                  params[li]["gamma"], params[li]["beta"])
        x = y.reshape(N, OH, OW, C)

    # Last BN normalize + LeakyReLU applied in XLA (tiny: N*16 x 8d), then
    # conv(8d->1, k4 s1 p0) + Sigmoid.
    scale, shift = prenorm
    xf = x.astype(jnp.float32) * scale + shift
    x = jnp.where(xf > 0, xf, NEG_SLOPE * xf)
    out_nhwc = final_conv_sigmoid(x, params[4]["w"], params[4]["b"])
    return jnp.transpose(out_nhwc, (0, 3, 1, 2))  # back to NCHW, shape (N, 1, 1, 1)


if __name__ == "__main__":
    key = jax.random.PRNGKey(0)
    key, pk, xk = jax.random.split(key, 3)
    d = 8  # small width for the synthetic test (PyTorch default is d=128)
    params = init_discriminator_params(pk, d=d)
    # DCGAN discriminator expects 64x64 images (5 convs: 64->32->16->8->4->1).
    x = jax.random.normal(xk, (2, 3, 64, 64), jnp.float32)  # NCHW
    fwd = jax.jit(discriminator_forward)
    out = jax.block_until_ready(fwd(params, x))
    assert out.shape == (2, 1, 1, 1), out.shape
    assert bool(jnp.all(jnp.isfinite(out)))
    assert bool(jnp.all((out >= 0.0) & (out <= 1.0)))  # sigmoid output range
    print("KERNEL_OK")
</pallas_src>

<mosaic_0001>
module attributes {stable_mosaic.version = 11 : i64} {
  func.func @kernel(%arg0: i32, %arg1: i32, %arg2: memref<1024x128xbf16, #tpu.memory_space<vmem>>, %arg3: memref<128x128xbf16, #tpu.memory_space<vmem>>, %arg4: memref<1x128xf32, #tpu.memory_space<vmem>>, %arg5: memref<1024x128xbf16, #tpu.memory_space<vmem>>) attributes {dimension_semantics = [#tpu.dimension_semantics<parallel>, #tpu.dimension_semantics<parallel>], iteration_bounds = array<i64: 1, 2>, scalar_prefetch = 0 : i64, scratch_operands = 0 : i64, tpu.core_type = #tpu.core_type<tc>, window_params = [{transform_indices = @transform_0, window_bounds = array<i64: 1024, 128>}, {transform_indices = @transform_1, window_bounds = array<i64: 128, 128>}, {transform_indices = @transform_2, window_bounds = array<i64: 1, 128>}, {transform_indices = @transform_3, window_bounds = array<i64: 1024, 128>}]} {
    %c0 = arith.constant 0 : index
    %c0_0 = arith.constant 0 : index
    %0 = vector.load %arg2[%c0, %c0_0] : memref<1024x128xbf16, #tpu.memory_space<vmem>>, vector<1024x128xbf16>
    %c0_1 = arith.constant 0 : index
    %c0_2 = arith.constant 0 : index
    %1 = vector.load %arg3[%c0_1, %c0_2] : memref<128x128xbf16, #tpu.memory_space<vmem>>, vector<128x128xbf16>
    %cst = arith.constant dense<0.000000e+00> : vector<1024x128xf32>
    %2 = tpu.matmul %0, %1, %cst {dimension_numbers = #tpu.dot_dimension_numbers<[1], [0], [0], [1], [0, 0, 1, 1], [], []>} : vector<1024x128xbf16>, vector<128x128xbf16>, vector<1024x128xf32> -> vector<1024x128xf32>
    %c0_3 = arith.constant 0 : index
    %c0_4 = arith.constant 0 : index
    %3 = vector.load %arg4[%c0_3, %c0_4] : memref<1x128xf32, #tpu.memory_space<vmem>>, vector<1x128xf32>
    %4 = vector.broadcast %3 : vector<1x128xf32> to vector<1024x128xf32>
    %5 = arith.addf %2, %4 : vector<1024x128xf32>
    %cst_5 = arith.constant 0.000000e+00 : f32
    %6 = vector.broadcast %cst_5 : f32 to vector<1024x128xf32>
    %7 = arith.cmpf ogt, %5, %6 : vector<1024x128xf32>
    %cst_6 = arith.constant 2.000000e-01 : f32
    %8 = vector.broadcast %cst_6 : f32 to vector<1024x128xf32>
    %9 = arith.mulf %8, %5 : vector<1024x128xf32>
    %10 = arith.select %7, %5, %9 : vector<1024x128xi1>, vector<1024x128xf32>
    %11 = arith.truncf %10 : vector<1024x128xf32> to vector<1024x128xbf16>
    %c0_7 = arith.constant 0 : index
    %c0_8 = arith.constant 0 : index
    %12 = vector.load %arg5[%c0_7, %c0_8] : memref<1024x128xbf16, #tpu.memory_space<vmem>>, vector<1024x128xbf16>
    tpu.vector_store %arg5[%c0_7, %c0_8], %11 {strides = array<i32>} : memref<1024x128xbf16, #tpu.memory_space<vmem>>, vector<1024x128xbf16>,
    return
  }
  func.func @transform_0(%arg0: i32, %arg1: i32) -> (i32, i32) {
    %c0_i32 = arith.constant 0 : i32
    %c0_i32_0 = arith.constant 0 : i32
    return %arg1, %c0_i32 : i32, i32
  }
  func.func @transform_1(%arg0: i32, %arg1: i32) -> (i32, i32) {
    %c0_i32 = arith.constant 0 : i32
    %c0_i32_0 = arith.constant 0 : i32
    return %c0_i32, %arg0 : i32, i32
  }
  func.func @transform_2(%arg0: i32, %arg1: i32) -> (i32, i32) {
    %c0_i32 = arith.constant 0 : i32
    %c0_i32_0 = arith.constant 0 : i32
    return %c0_i32, %arg0 : i32, i32
  }
  func.func @transform_3(%arg0: i32, %arg1: i32) -> (i32, i32) {
    %c0_i32 = arith.constant 0 : i32
    return %arg1, %arg0 : i32, i32
  }
}

module attributes {stable_mosaic.version = 11 : i64} {
  func.func @kernel(%arg0: i32, %arg1: i32, %arg2: memref<512x128xbf16, #tpu.memory_space<vmem>>, %arg3: memref<128x128xbf16, #tpu.memory_space<vmem>>, %arg4: memref<1x128xf32, #tpu.memory_space<vmem>>, %arg5: memref<512x128xbf16, #tpu.memory_space<vmem>>, %arg6: memref<8x128xf32, #tpu.memory_space<vmem>>, %arg7: memref<8x128xf32, #tpu.memory_space<vmem>>) attributes {dimension_semantics = [#tpu.dimension_semantics<parallel>, #tpu.dimension_semantics<parallel>], iteration_bounds = array<i64: 1, 1>, scalar_prefetch = 0 : i64, scratch_operands = 0 : i64, tpu.core_type = #tpu.core_type<tc>, window_params = [{transform_indices = @transform_0, window_bounds = array<i64: 512, 128>}, {transform_indices = @transform_1, window_bounds = array<i64: 128, 128>}, {transform_indices = @transform_2, window_bounds = array<i64: 1, 128>}, {transform_indices = @transform_3, window_bounds = array<i64: 512, 128>}, {transform_indices = @transform_4, window_bounds = array<i64: 8, 128>}, {transform_indices = @transform_5, window_bounds = array<i64: 8, 128>}]} {
    %c0 = arith.constant 0 : index
    %c0_0 = arith.constant 0 : index
    %0 = vector.load %arg2[%c0, %c0_0] : memref<512x128xbf16, #tpu.memory_space<vmem>>, vector<512x128xbf16>
    %c0_1 = arith.constant 0 : index
    %c0_2 = arith.constant 0 : index
    %1 = vector.load %arg3[%c0_1, %c0_2] : memref<128x128xbf16, #tpu.memory_space<vmem>>, vector<128x128xbf16>
    %cst = arith.constant dense<0.000000e+00> : vector<512x128xf32>
    %2 = tpu.matmul %0, %1, %cst {dimension_numbers = #tpu.dot_dimension_numbers<[1], [0], [0], [1], [0, 0, 1, 1], [], []>} : vector<512x128xbf16>, vector<128x128xbf16>, vector<512x128xf32> -> vector<512x128xf32>
    %c0_3 = arith.constant 0 : index
    %c0_4 = arith.constant 0 : index
    %3 = vector.load %arg4[%c0_3, %c0_4] : memref<1x128xf32, #tpu.memory_space<vmem>>, vector<1x128xf32>
    %4 = vector.broadcast %3 : vector<1x128xf32> to vector<512x128xf32>
    %5 = arith.addf %2, %4 : vector<512x128xf32>
    %6 = arith.truncf %5 : vector<512x128xf32> to vector<512x128xbf16>
    %c0_5 = arith.constant 0 : index
    %c0_6 = arith.constant 0 : index
    %7 = vector.load %arg5[%c0_5, %c0_6] : memref<512x128xbf16, #tpu.memory_space<vmem>>, vector<512x128xbf16>
    tpu.vector_store %arg5[%c0_5, %c0_6], %6 {strides = array<i32>} : memref<512x128xbf16, #tpu.memory_space<vmem>>, vector<512x128xbf16>,
    %8 = vector.shape_cast %5 : vector<512x128xf32> to vector<64x8x128xf32>
    %cst_7 = arith.constant dense<0.000000e+00> : vector<8x128xf32>
    %9 = vector.multi_reduction <add>, %8, %cst_7 [0] : vector<64x8x128xf32> to vector<8x128xf32>
    %c0_8 = arith.constant 0 : index
    %c0_9 = arith.constant 0 : index
    %10 = vector.load %arg6[%c0_8, %c0_9] : memref<8x128xf32, #tpu.memory_space<vmem>>, vector<8x128xf32>
    tpu.vector_store %arg6[%c0_8, %c0_9], %9 {strides = array<i32>} : memref<8x128xf32, #tpu.memory_space<vmem>>, vector<8x128xf32>,
    %11 = arith.mulf %8, %8 : vector<64x8x128xf32>
    %cst_10 = arith.constant dense<0.000000e+00> : vector<8x128xf32>
    %12 = vector.multi_reduction <add>, %11, %cst_10 [0] : vector<64x8x128xf32> to vector<8x128xf32>
    %c0_11 = arith.constant 0 : index
    %c0_12 = arith.constant 0 : index
    %13 = vector.load %arg7[%c0_11, %c0_12] : memref<8x128xf32, #tpu.memory_space<vmem>>, vector<8x128xf32>
    tpu.vector_store %arg7[%c0_11, %c0_12], %12 {strides = array<i32>} : memref<8x128xf32, #tpu.memory_space<vmem>>, vector<8x128xf32>,
    return
  }
  func.func @transform_0(%arg0: i32, %arg1: i32) -> (i32, i32) {
    %c0_i32 = arith.constant 0 : i32
    %c0_i32_0 = arith.constant 0 : i32
    return %arg1, %c0_i32 : i32, i32
  }
  func.func @transform_1(%arg0: i32, %arg1: i32) -> (i32, i32) {
    %c0_i32 = arith.constant 0 : i32
    %c0_i32_0 = arith.constant 0 : i32
    return %c0_i32, %arg0 : i32, i32
  }
  func.func @transform_2(%arg0: i32, %arg1: i32) -> (i32, i32) {
    %c0_i32 = arith.constant 0 : i32
    %c0_i32_0 = arith.constant 0 : i32
    return %c0_i32, %arg0 : i32, i32
  }
  func.func @transform_3(%arg0: i32, %arg1: i32) -> (i32, i32) {
    %c0_i32 = arith.constant 0 : i32
    return %arg1, %arg0 : i32, i32
  }
  func.func @transform_4(%arg0: i32, %arg1: i32) -> (i32, i32) {
    %c0_i32 = arith.constant 0 : i32
    return %arg1, %arg0 : i32, i32
  }
  func.func @transform_5(%arg0: i32, %arg1: i32) -> (i32, i32) {
    %c0_i32 = arith.constant 0 : i32
    return %arg1, %arg0 : i32, i32
  }
}

module attributes {stable_mosaic.version = 11 : i64} {
  func.func @kernel(%arg0: i32, %arg1: i32, %arg2: memref<128x256xbf16, #tpu.memory_space<vmem>>, %arg3: memref<256x128xbf16, #tpu.memory_space<vmem>>, %arg4: memref<1x128xf32, #tpu.memory_space<vmem>>, %arg5: memref<128x128xbf16, #tpu.memory_space<vmem>>, %arg6: memref<8x128xf32, #tpu.memory_space<vmem>>, %arg7: memref<8x128xf32, #tpu.memory_space<vmem>>) attributes {dimension_semantics = [#tpu.dimension_semantics<parallel>, #tpu.dimension_semantics<parallel>], iteration_bounds = array<i64: 1, 1>, scalar_prefetch = 0 : i64, scratch_operands = 0 : i64, tpu.core_type = #tpu.core_type<tc>, window_params = [{transform_indices = @transform_0, window_bounds = array<i64: 128, 256>}, {transform_indices = @transform_1, window_bounds = array<i64: 256, 128>}, {transform_indices = @transform_2, window_bounds = array<i64: 1, 128>}, {transform_indices = @transform_3, window_bounds = array<i64: 128, 128>}, {transform_indices = @transform_4, window_bounds = array<i64: 8, 128>}, {transform_indices = @transform_5, window_bounds = array<i64: 8, 128>}]} {
    %c0 = arith.constant 0 : index
    %c0_0 = arith.constant 0 : index
    %0 = vector.load %arg2[%c0, %c0_0] : memref<128x256xbf16, #tpu.memory_space<vmem>>, vector<128x256xbf16>
    %c0_1 = arith.constant 0 : index
    %c0_2 = arith.constant 0 : index
    %1 = vector.load %arg3[%c0_1, %c0_2] : memref<256x128xbf16, #tpu.memory_space<vmem>>, vector<256x128xbf16>
    %cst = arith.constant dense<0.000000e+00> : vector<128x128xf32>
    %2 = tpu.matmul %0, %1, %cst {dimension_numbers = #tpu.dot_dimension_numbers<[1], [0], [0], [1], [0, 0, 1, 1], [], []>} : vector<128x256xbf16>, vector<256x128xbf16>, vector<128x128xf32> -> vector<128x128xf32>
    %c0_3 = arith.constant 0 : index
    %c0_4 = arith.constant 0 : index
    %3 = vector.load %arg4[%c0_3, %c0_4] : memref<1x128xf32, #tpu.memory_space<vmem>>, vector<1x128xf32>
    %4 = vector.broadcast %3 : vector<1x128xf32> to vector<128x128xf32>
    %5 = arith.addf %2, %4 : vector<128x128xf32>
    %6 = arith.truncf %5 : vector<128x128xf32> to vector<128x128xbf16>
    %c0_5 = arith.constant 0 : index
    %c0_6 = arith.constant 0 : index
    %7 = vector.load %arg5[%c0_5, %c0_6] : memref<128x128xbf16, #tpu.memory_space<vmem>>, vector<128x128xbf16>
    tpu.vector_store %arg5[%c0_5, %c0_6], %6 {strides = array<i32>} : memref<128x128xbf16, #tpu.memory_space<vmem>>, vector<128x128xbf16>,
    %8 = vector.shape_cast %5 : vector<128x128xf32> to vector<16x8x128xf32>
    %cst_7 = arith.constant dense<0.000000e+00> : vector<8x128xf32>
    %9 = vector.multi_reduction <add>, %8, %cst_7 [0] : vector<16x8x128xf32> to vector<8x128xf32>
    %c0_8 = arith.constant 0 : index
    %c0_9 = arith.constant 0 : index
    %10 = vector.load %arg6[%c0_8, %c0_9] : memref<8x128xf32, #tpu.memory_space<vmem>>, vector<8x128xf32>
    tpu.vector_store %arg6[%c0_8, %c0_9], %9 {strides = array<i32>} : memref<8x128xf32, #tpu.memory_space<vmem>>, vector<8x128xf32>,
    %11 = arith.mulf %8, %8 : vector<16x8x128xf32>
    %cst_10 = arith.constant dense<0.000000e+00> : vector<8x128xf32>
    %12 = vector.multi_reduction <add>, %11, %cst_10 [0] : vector<16x8x128xf32> to vector<8x128xf32>
    %c0_11 = arith.constant 0 : index
    %c0_12 = arith.constant 0 : index
    %13 = vector.load %arg7[%c0_11, %c0_12] : memref<8x128xf32, #tpu.memory_space<vmem>>, vector<8x128xf32>
    tpu.vector_store %arg7[%c0_11, %c0_12], %12 {strides = array<i32>} : memref<8x128xf32, #tpu.memory_space<vmem>>, vector<8x128xf32>,
    return
  }
  func.func @transform_0(%arg0: i32, %arg1: i32) -> (i32, i32) {
    %c0_i32 = arith.constant 0 : i32
    %c0_i32_0 = arith.constant 0 : i32
    return %arg1, %c0_i32 : i32, i32
  }
  func.func @transform_1(%arg0: i32, %arg1: i32) -> (i32, i32) {
    %c0_i32 = arith.constant 0 : i32
    %c0_i32_0 = arith.constant 0 : i32
    return %c0_i32, %arg0 : i32, i32
  }
  func.func @transform_2(%arg0: i32, %arg1: i32) -> (i32, i32) {
    %c0_i32 = arith.constant 0 : i32
    %c0_i32_0 = arith.constant 0 : i32
    return %c0_i32, %arg0 : i32, i32
  }
  func.func @transform_3(%arg0: i32, %arg1: i32) -> (i32, i32) {
    %c0_i32 = arith.constant 0 : i32
    return %arg1, %arg0 : i32, i32
  }
  func.func @transform_4(%arg0: i32, %arg1: i32) -> (i32, i32) {
    %c0_i32 = arith.constant 0 : i32
    return %arg1, %arg0 : i32, i32
  }
  func.func @transform_5(%arg0: i32, %arg1: i32) -> (i32, i32) {
    %c0_i32 = arith.constant 0 : i32
    return %arg1, %arg0 : i32, i32
  }
}

module attributes {stable_mosaic.version = 11 : i64} {
  func.func @kernel(%arg0: i32, %arg1: i32, %arg2: memref<32x512xbf16, #tpu.memory_space<vmem>>, %arg3: memref<512x128xbf16, #tpu.memory_space<vmem>>, %arg4: memref<1x128xf32, #tpu.memory_space<vmem>>, %arg5: memref<32x128xbf16, #tpu.memory_space<vmem>>, %arg6: memref<8x128xf32, #tpu.memory_space<vmem>>, %arg7: memref<8x128xf32, #tpu.memory_space<vmem>>) attributes {dimension_semantics = [#tpu.dimension_semantics<parallel>, #tpu.dimension_semantics<parallel>], iteration_bounds = array<i64: 1, 1>, scalar_prefetch = 0 : i64, scratch_operands = 0 : i64, tpu.core_type = #tpu.core_type<tc>, window_params = [{transform_indices = @transform_0, window_bounds = array<i64: 32, 512>}, {transform_indices = @transform_1, window_bounds = array<i64: 512, 128>}, {transform_indices = @transform_2, window_bounds = array<i64: 1, 128>}, {transform_indices = @transform_3, window_bounds = array<i64: 32, 128>}, {transform_indices = @transform_4, window_bounds = array<i64: 8, 128>}, {transform_indices = @transform_5, window_bounds = array<i64: 8, 128>}]} {
    %c0 = arith.constant 0 : index
    %c0_0 = arith.constant 0 : index
    %0 = vector.load %arg2[%c0, %c0_0] : memref<32x512xbf16, #tpu.memory_space<vmem>>, vector<32x512xbf16>
    %c0_1 = arith.constant 0 : index
    %c0_2 = arith.constant 0 : index
    %1 = vector.load %arg3[%c0_1, %c0_2] : memref<512x128xbf16, #tpu.memory_space<vmem>>, vector<512x128xbf16>
    %cst = arith.constant dense<0.000000e+00> : vector<32x128xf32>
    %2 = tpu.matmul %0, %1, %cst {dimension_numbers = #tpu.dot_dimension_numbers<[1], [0], [0], [1], [0, 0, 1, 1], [], []>} : vector<32x512xbf16>, vector<512x128xbf16>, vector<32x128xf32> -> vector<32x128xf32>
    %c0_3 = arith.constant 0 : index
    %c0_4 = arith.constant 0 : index
    %3 = vector.load %arg4[%c0_3, %c0_4] : memref<1x128xf32, #tpu.memory_space<vmem>>, vector<1x128xf32>
    %4 = vector.broadcast %3 : vector<1x128xf32> to vector<32x128xf32>
    %5 = arith.addf %2, %4 : vector<32x128xf32>
    %6 = arith.truncf %5 : vector<32x128xf32> to vector<32x128xbf16>
    %c0_5 = arith.constant 0 : index
    %c0_6 = arith.constant 0 : index
    %7 = vector.load %arg5[%c0_5, %c0_6] : memref<32x128xbf16, #tpu.memory_space<vmem>>, vector<32x128xbf16>
    tpu.vector_store %arg5[%c0_5, %c0_6], %6 {strides = array<i32>} : memref<32x128xbf16, #tpu.memory_space<vmem>>, vector<32x128xbf16>,
    %8 = vector.shape_cast %5 : vector<32x128xf32> to vector<4x8x128xf32>
    %cst_7 = arith.constant dense<0.000000e+00> : vector<8x128xf32>
    %9 = vector.multi_reduction <add>, %8, %cst_7 [0] : vector<4x8x128xf32> to vector<8x128xf32>
    %c0_8 = arith.constant 0 : index
    %c0_9 = arith.constant 0 : index
    %10 = vector.load %arg6[%c0_8, %c0_9] : memref<8x128xf32, #tpu.memory_space<vmem>>, vector<8x128xf32>
    tpu.vector_store %arg6[%c0_8, %c0_9], %9 {strides = array<i32>} : memref<8x128xf32, #tpu.memory_space<vmem>>, vector<8x128xf32>,
    %11 = arith.mulf %8, %8 : vector<4x8x128xf32>
    %cst_10 = arith.constant dense<0.000000e+00> : vector<8x128xf32>
    %12 = vector.multi_reduction <add>, %11, %cst_10 [0] : vector<4x8x128xf32> to vector<8x128xf32>
    %c0_11 = arith.constant 0 : index
    %c0_12 = arith.constant 0 : index
    %13 = vector.load %arg7[%c0_11, %c0_12] : memref<8x128xf32, #tpu.memory_space<vmem>>, vector<8x128xf32>
    tpu.vector_store %arg7[%c0_11, %c0_12], %12 {strides = array<i32>} : memref<8x128xf32, #tpu.memory_space<vmem>>, vector<8x128xf32>,
    return
  }
  func.func @transform_0(%arg0: i32, %arg1: i32) -> (i32, i32) {
    %c0_i32 = arith.constant 0 : i32
    %c0_i32_0 = arith.constant 0 : i32
    return %arg1, %c0_i32 : i32, i32
  }
  func.func @transform_1(%arg0: i32, %arg1: i32) -> (i32, i32) {
    %c0_i32 = arith.constant 0 : i32
    %c0_i32_0 = arith.constant 0 : i32
    return %c0_i32, %arg0 : i32, i32
  }
  func.func @transform_2(%arg0: i32, %arg1: i32) -> (i32, i32) {
    %c0_i32 = arith.constant 0 : i32
    %c0_i32_0 = arith.constant 0 : i32
    return %c0_i32, %arg0 : i32, i32
  }
  func.func @transform_3(%arg0: i32, %arg1: i32) -> (i32, i32) {
    %c0_i32 = arith.constant 0 : i32
    return %arg1, %arg0 : i32, i32
  }
  func.func @transform_4(%arg0: i32, %arg1: i32) -> (i32, i32) {
    %c0_i32 = arith.constant 0 : i32
    return %arg1, %arg0 : i32, i32
  }
  func.func @transform_5(%arg0: i32, %arg1: i32) -> (i32, i32) {
    %c0_i32 = arith.constant 0 : i32
    return %arg1, %arg0 : i32, i32
  }
}

</mosaic_0001>

<llo_original>
// kernel: discriminator_forward.4
$region0: #{discriminator_forward.4}
  #allocation0 [shape = 'u32[]', space=smem, size = 0x4, offset = 0x4, fixed_abs, tag = 'smem constant byte address 0x4 - core index']
  #allocation1 [shape = 'u32[72,128]{1,0:T(1,128)}', space=vmem, size = 0x9000, scoped, tag = 'internal scratch']
  %s0 = inlined_call_operand.vmem [shape: bf16[2048,128], index: 0, kind: input, shape index: {}]
  %s1 = inlined_call_operand.vmem [shape: bf16[128,128], index: 1, kind: input, shape index: {}]
  %s2 = inlined_call_operand.vmem [shape: f32[1,128], index: 2, kind: input, shape index: {}]
  %s3 = inlined_call_operand.vmem [shape: bf16[2048,128], index: 3, kind: output, shape index: {}]
  %s4 = sld [smem:[#allocation0]]
  $region45: #{discriminator_forward.4} parent=0
    _
  %s6 = ssub.s32 1, %s4
  %s7 = scalar_select 0, %s6, %s4
  loop: start=0, step=1, limit=4
  $region2: #{discriminator_forward.4} parent=0 // loop_pre_header
    _
  $region3: #{discriminator_forward.4} parent=0 // loop_header
    %s9 = sphi 0, %s13
    %p10 = scmp.ge.s32.totalorder %s9, 4
    %s16 = sphi 0, %s28
    %s17 = sphi 0, %s24
    %s18 = sphi 0, %s16
    %s19 = sphi 0, %s17
    %s20 = sphi 0, %s18
    %s21 = sphi 0, %s19
    %s31 = sphi 0, %s33
    %s34 = sphi 0, %s31
    %s35 = sphi 0, %s34
    %s51 = sphi 0, %s35
    %s57 = sphi 0, %s59
    %s60 = sphi 0, %s57
    %s61 = sphi 0, %s60
    %s77 = sphi 0, %s61
    %s83 = sphi 0, %s85
    %s86 = sphi 0, %s83
    %s87 = sphi 0, %s86
    %s103 = sphi 0, %s87
    %s111 = sphi 0, %s113
    %s114 = sphi 0, %s111
    %s115 = sphi 0, %s114
    %s131 = sphi 0, %s115
  $region4: #{discriminator_forward.4} parent=0 // loop_header_branch
    %12 = sbr.rel (%p10) target = $region8
  $region5: #{discriminator_forward.4} parent=0 // loop_body
    %s14 = ssub.s32 %s9, 1
    %s15 = ssub.s32 %s9, 2
    %s22 = sadd.s32 1, %s17
    %p23 = scmp.ge.s32.totalorder %s22, 2
    %s24 = scalar_select %p23, 0, %s22
    %s25 = sadd.s32 1, %s16
    %s26 = scalar_select %p23, %s25, %s16
    %p27 = scmp.ge.s32.totalorder %s26, 1
    %s28 = scalar_select %p27, 0, %s26
    %s29 = ssub.s32 %s17, %s24
    %p30 = scmp.eq.s32.totalorder %s29, 0
    %s32 = sadd.s32 %s31, 1
    %s33 = scalar_select %p30, %s31, %s32
    %p36 = pneg %p30
    %p37 = scmp.eq.s32.totalorder %s9, 1
    %p38 = por %p36, %p37
    %p39 = scmp.ne.s32.totalorder %s31, %s34
    %p40 = scmp.eq.s32.totalorder %s9, 0
    %p41 = por %p39, %p40
    %p42 = scmp.ne.s32.totalorder %s31, %s34
    %p43 = scmp.eq.s32.totalorder %s14, 1
    %p44 = por %p42, %p43
    %p45 = scmp.ne.s32.totalorder %s34, %s35
    %p46 = scmp.eq.s32.totalorder %s14, 0
    %p47 = por %p45, %p46
    %p48 = scmp.ne.s32.totalorder %s34, %s35
    %p49 = scmp.eq.s32.totalorder %s15, 1
    %p50 = por %p48, %p49
    %p52 = scmp.ne.s32.totalorder %s35, %s51
    %p53 = scmp.eq.s32.totalorder %s15, 0
    %p54 = por %p52, %p53
    %s55 = ssub.s32 %s16, %s28
    %p56 = scmp.eq.s32.totalorder %s55, 0
    %s58 = sadd.s32 %s57, 1
    %s59 = scalar_select %p56, %s57, %s58
    %p62 = pneg %p56
    %p63 = scmp.eq.s32.totalorder %s9, 1
    %p64 = por %p62, %p63
    %p65 = scmp.ne.s32.totalorder %s57, %s60
    %p66 = scmp.eq.s32.totalorder %s9, 0
    %p67 = por %p65, %p66
    %p68 = scmp.ne.s32.totalorder %s57, %s60
    %p69 = scmp.eq.s32.totalorder %s14, 1
    %p70 = por %p68, %p69
    %p71 = scmp.ne.s32.totalorder %s60, %s61
    %p72 = scmp.eq.s32.totalorder %s14, 0
    %p73 = por %p71, %p72
    %p74 = scmp.ne.s32.totalorder %s60, %s61
    %p75 = scmp.eq.s32.totalorder %s15, 1
    %p76 = por %p74, %p75
    %p78 = scmp.ne.s32.totalorder %s61, %s77
    %p79 = scmp.eq.s32.totalorder %s15, 0
    %p80 = por %p78, %p79
    %s81 = ssub.s32 %s16, %s28
    %p82 = scmp.eq.s32.totalorder %s81, 0
    %s84 = sadd.s32 %s83, 1
    %s85 = scalar_select %p82, %s83, %s84
    %p88 = pneg %p82
    %p89 = scmp.eq.s32.totalorder %s9, 1
    %p90 = por %p88, %p89
    %p91 = scmp.ne.s32.totalorder %s83, %s86
    %p92 = scmp.eq.s32.totalorder %s9, 0
    %p93 = por %p91, %p92
    %p94 = scmp.ne.s32.totalorder %s83, %s86
    %p95 = scmp.eq.s32.totalorder %s14, 1
    %p96 = por %p94, %p95
    %p97 = scmp.ne.s32.totalorder %s86, %s87
    %p98 = scmp.eq.s32.totalorder %s14, 0
    %p99 = por %p97, %p98
    %p100 = scmp.ne.s32.totalorder %s86, %s87
    %p101 = scmp.eq.s32.totalorder %s15, 1
    %p102 = por %p100, %p101
    %p104 = scmp.ne.s32.totalorder %s87, %s103
    %p105 = scmp.eq.s32.totalorder %s15, 0
    %p106 = por %p104, %p105
    %s107 = ssub.s32 %s17, %s24
    %s108 = ssub.s32 %s16, %s28
    %s109 = sor.u32 %s107, %s108
    %p110 = scmp.eq.s32.totalorder %s109, 0
    %s112 = sadd.s32 %s111, 1
    %s113 = scalar_select %p110, %s111, %s112
    %p116 = pneg %p110
    %p117 = scmp.eq.s32.totalorder %s9, 1
    %p118 = por %p116, %p117
    %p119 = scmp.ne.s32.totalorder %s111, %s114
    %p120 = scmp.eq.s32.totalorder %s9, 0
    %p121 = por %p119, %p120
    %p122 = scmp.ne.s32.totalorder %s111, %s114
    %p123 = scmp.eq.s32.totalorder %s14, 1
    %p124 = por %p122, %p123
    %p125 = scmp.ne.s32.totalorder %s114, %s115
    %p126 = scmp.eq.s32.totalorder %s14, 0
    %p127 = por %p125, %p126
    %p128 = scmp.ne.s32.totalorder %s114, %s115
    %p129 = scmp.eq.s32.totalorder %s15, 1
    %p130 = por %p128, %p129
    %p132 = scmp.ne.s32.totalorder %s115, %s131
    %p133 = scmp.eq.s32.totalorder %s15, 0
    %p134 = por %p132, %p133
    %p135 = scmp.le.s32.totalorder 1, %s9
    %p136 = scmp.lt.s32.totalorder %s9, 3
    %p137 = pnand %p135, %p136
    %p138 = pneg %p137
    // Predicated region
    $region9: #{discriminator_forward.4} parent=5 // pred_check
      _
    $region10: #{discriminator_forward.4} parent=5 // pred_check_branch
      %140 = sbr.rel (%p137) target = $region12
    $region11: #{discriminator_forward.4} parent=5 // pred_region
      %s141 = ssub.s32 %s9, 1
      // Predicated region
      $region13: #{discriminator_forward.4} parent=11 // pred_check
        %p142 = pneg %p73
      $region14: #{discriminator_forward.4} parent=11 // pred_check_branch
        %144 = sbr.rel (%p142) target = $region16
      $region15: #{discriminator_forward.4} parent=11 // pred_region
        %p145 = scmp.lt.s32.totalorder %s18, 0
        %s146 = scalar_select %p145, %s18, 0
        %s147 = smul.addr %s146, 4
        %s148 = scalar_lea.vmem %s1, %s147
      $region16: #{discriminator_forward.4} parent=11 // pred_fallthru
        _
      // Predicated region
      $region17: #{discriminator_forward.4} parent=11 // pred_check
        %p149 = pneg %p99
      $region18: #{discriminator_forward.4} parent=11 // pred_check_branch
        %151 = sbr.rel (%p149) target = $region20
      $region19: #{discriminator_forward.4} parent=11 // pred_region
        %p152 = scmp.lt.s32.totalorder %s18, 0
        %s153 = scalar_select %p152, %s18, 0
        %s154 = scalar_lea.vmem %s2, %s153
      $region20: #{discriminator_forward.4} parent=11 // pred_fallthru
        _
    $region12: #{discriminator_forward.4} parent=5 // pred_fallthru
      _
    %p155 = scmp.lt.s32.totalorder %s9, 2
    // Predicated region
    $region21: #{discriminator_forward.4} parent=5 // pred_check
      %p156 = pneg %p155
    $region22: #{discriminator_forward.4} parent=5 // pred_check_branch
      %158 = sbr.rel (%p156) target = $region24
    $region23: #{discriminator_forward.4} parent=5 // pred_region
      // Predicated region
      $region25: #{discriminator_forward.4} parent=23 // pred_check
        %p159 = pneg %p41
      $region26: #{discriminator_forward.4} parent=23 // pred_check_branch
        %161 = sbr.rel (%p159) target = $region28
      $region27: #{discriminator_forward.4} parent=23 // pred_region
        %s162 = smul.u32 128, %s17
        %p163 = scmp.lt.s32.totalorder %s162, 255
        %s164 = scalar_select %p163, %s162, 255
        %s165 = smul.addr %s164, 4
        %s166 = scalar_lea.vmem %s0, %s165
        %s167 = smul.u32 128, %s17
      $region28: #{discriminator_forward.4} parent=23 // pred_fallthru
        _
    $region24: #{discriminator_forward.4} parent=5 // pred_fallthru
      _
    %p168 = scmp.le.s32.totalorder 1, %s9
    %p169 = scmp.lt.s32.totalorder %s9, 3
    %p170 = pnand %p168, %p169
    %p171 = pneg %p170
    // Predicated region
    $region29: #{discriminator_forward.4} parent=5 // pred_check
      _
    $region30: #{discriminator_forward.4} parent=5 // pred_check_branch
      %173 = sbr.rel (%p170) target = $region32
    $region31: #{discriminator_forward.4} parent=5 // pred_region
      %s174 = ssub.s32 %s9, 1
      %s175 = smul.u32 128, %s19
      %p176 = scmp.lt.s32.totalorder %s175, 255
      %s177 = scalar_select %p176, %s175, 255
      %s178 = smul.addr %s177, 4
      %s179 = scalar_lea.vmem %s0, %s178
      %p180 = pneg %p47
      %p181 = pneg %p44
      %p182 = scmp.lt.s32.totalorder %s18, 0
      %s183 = scalar_select %p182, %s18, 0
      %s184 = smul.addr %s183, 4
      %s185 = scalar_lea.vmem %s1, %s184
      %p186 = pneg %p73
      %p187 = pneg %p70
      %p188 = scmp.lt.s32.totalorder %s18, 0
      %s189 = scalar_select %p188, %s18, 0
      %s190 = scalar_lea.vmem %s2, %s189
      %p191 = pneg %p99
      %p192 = pneg %p96
      %p193 = pneg %p127
      %p194 = pneg %p124
      %s195 = smul.u32 128, %s19
      %p196 = scmp.lt.s32.totalorder %s195, 255
      %s197 = scalar_select %p196, %s195, 255
      %p198 = scmp.lt.s32.totalorder %s18, 0
      %s199 = scalar_select %p198, %s18, 0
      %s200 = sadd.s32 %s199, %s197
      %s201 = smul.addr %s200, 4
      %s202 = scalar_lea.vmem %s3, %s201
      %s203 = smul.u32 128, %s19
      %p204 = scmp.lt.s32.totalorder %s203, 255
      %s205 = scalar_select %p204, %s203, 255
      %s206 = smul.addr %s205, 4
      %s207 = scalar_lea.vmem %s0, %s206
      %s208 = smul.u32 128, %s19
      %p209 = scmp.lt.s32.totalorder %s18, 0
      %s210 = scalar_select %p209, %s18, 0
      %s211 = smul.addr %s210, 4
      %s212 = scalar_lea.vmem %s1, %s211
      %p213 = scmp.lt.s32.totalorder %s18, 0
      %s214 = scalar_select %p213, %s18, 0
      %s215 = scalar_lea.vmem %s2, %s214
      %s216 = smul.u32 128, %s19
      %p217 = scmp.lt.s32.totalorder %s216, 255
      %s218 = scalar_select %p217, %s216, 255
      %p219 = scmp.lt.s32.totalorder %s18, 0
      %s220 = scalar_select %p219, %s18, 0
      %s221 = sadd.s32 %s220, %s218
      %s222 = smul.addr %s221, 4
      %s223 = scalar_lea.vmem %s3, %s222
      %s224 = smul.u32 128, %s19
      %v225 = vld [vmem:[%s207] sm:$0xf]
      %v226 = vld [vmem:[%s207 + $0x4] sm:$0xf]
      %v227 = vld [vmem:[%s207 + $0x8] sm:$0xf]
      %v228 = vld [vmem:[%s207 + $0xc] sm:$0xf]
      %v229 = vld [vmem:[%s207 + $0x10] sm:$0xf]
      %v230 = vld [vmem:[%s207 + $0x14] sm:$0xf]
      %v231 = vld [vmem:[%s207 + $0x18] sm:$0xf]
      %v232 = vld [vmem:[%s207 + $0x1c] sm:$0xf]
      %v233 = vld [vmem:[%s207 + $0x20] sm:$0xf]
      %v234 = vld [vmem:[%s207 + $0x24] sm:$0xf]
      %v235 = vld [vmem:[%s207 + $0x28] sm:$0xf]
      %v236 = vld [vmem:[%s207 + $0x2c] sm:$0xf]
      %v237 = vld [vmem:[%s207 + $0x30] sm:$0xf]
      %v238 = vld [vmem:[%s207 + $0x34] sm:$0xf]
      %v239 = vld [vmem:[%s207 + $0x38] sm:$0xf]
      %v240 = vld [vmem:[%s207 + $0x3c] sm:$0xf]
      %v241 = vld [vmem:[%s207 + $0x40] sm:$0xf]
      %v242 = vld [vmem:[%s207 + $0x44] sm:$0xf]
      %v243 = vld [vmem:[%s207 + $0x48] sm:$0xf]
      %v244 = vld [vmem:[%s207 + $0x4c] sm:$0xf]
      %v245 = vld [vmem:[%s207 + $0x50] sm:$0xf]
      %v246 = vld [vmem:[%s207 + $0x54] sm:$0xf]
      %v247 = vld [vmem:[%s207 + $0x58] sm:$0xf]
      %v248 = vld [vmem:[%s207 + $0x5c] sm:$0xf]
      %v249 = vld [vmem:[%s207 + $0x60] sm:$0xf]
      %v250 = vld [vmem:[%s207 + $0x64] sm:$0xf]
      %v251 = vld [vmem:[%s207 + $0x68] sm:$0xf]
      %v252 = vld [vmem:[%s207 + $0x6c] sm:$0xf]
      %v253 = vld [vmem:[%s207 + $0x70] sm:$0xf]
      %v254 = vld [vmem:[%s207 + $0x74] sm:$0xf]
      %v255 = vld [vmem:[%s207 + $0x78] sm:$0xf]
      %v256 = vld [vmem:[%s207 + $0x7c] sm:$0xf]
      %v257 = vld [vmem:[%s207 + $0x80] sm:$0xf]
      %v258 = vld [vmem:[%s207 + $0x84] sm:$0xf]
      %v259 = vld [vmem:[%s207 + $0x88] sm:$0xf]
      %v260 = vld [vmem:[%s207 + $0x8c] sm:$0xf]
      %v261 = vld [vmem:[%s207 + $0x90] sm:$0xf]
      %v262 = vld [vmem:[%s207 + $0x94] sm:$0xf]
      %v263 = vld [vmem:[%s207 + $0x98] sm:$0xf]
      %v264 = vld [vmem:[%s207 + $0x9c] sm:$0xf]
      %v265 = vld [vmem:[%s207 + $0xa0] sm:$0xf]
      %v266 = vld [vmem:[%s207 + $0xa4] sm:$0xf]
      %v267 = vld [vmem:[%s207 + $0xa8] sm:$0xf]
      %v268 = vld [vmem:[%s207 + $0xac] sm:$0xf]
      %v269 = vld [vmem:[%s207 + $0xb0] sm:$0xf]
      %v270 = vld [vmem:[%s207 + $0xb4] sm:$0xf]
      %v271 = vld [vmem:[%s207 + $0xb8] sm:$0xf]
      %v272 = vld [vmem:[%s207 + $0xbc] sm:$0xf]
      %v273 = vld [vmem:[%s207 + $0xc0] sm:$0xf]
      %v274 = vld [vmem:[%s207 + $0xc4] sm:$0xf]
      %v275 = vld [vmem:[%s207 + $0xc8] sm:$0xf]
      %v276 = vld [vmem:[%s207 + $0xcc] sm:$0xf]
      %v277 = vld [vmem:[%s207 + $0xd0] sm:$0xf]
      %v278 = vld [vmem:[%s207 + $0xd4] sm:$0xf]
      %v279 = vld [vmem:[%s207 + $0xd8] sm:$0xf]
      %v280 = vld [vmem:[%s207 + $0xdc] sm:$0xf]
      %v281 = vld [vmem:[%s207 + $0xe0] sm:$0xf]
      %v282 = vld [vmem:[%s207 + $0xe4] sm:$0xf]
      %v283 = vld [vmem:[%s207 + $0xe8] sm:$0xf]
      %v284 = vld [vmem:[%s207 + $0xec] sm:$0xf]
      %v285 = vld [vmem:[%s207 + $0xf0] sm:$0xf]
      %v286 = vld [vmem:[%s207 + $0xf4] sm:$0xf]
      %v287 = vld [vmem:[%s207 + $0xf8] sm:$0xf]
      %v288 = vld [vmem:[%s207 + $0xfc] sm:$0xf]
      %v289 = vld [vmem:[%s207 + $0x100] sm:$0xf]
      %v290 = vld [vmem:[%s207 + $0x104] sm:$0xf]
      %v291 = vld [vmem:[%s207 + $0x108] sm:$0xf]
      %v292 = vld [vmem:[%s207 + $0x10c] sm:$0xf]
      %v293 = vld [vmem:[%s207 + $0x110] sm:$0xf]
      %v294 = vld [vmem:[%s207 + $0x114] sm:$0xf]
      %v295 = vld [vmem:[%s207 + $0x118] sm:$0xf]
      %v296 = vld [vmem:[%s207 + $0x11c] sm:$0xf]
      %v297 = vld [vmem:[%s207 + $0x120] sm:$0xf]
      %v298 = vld [vmem:[%s207 + $0x124] sm:$0xf]
      %v299 = vld [vmem:[%s207 + $0x128] sm:$0xf]
      %v300 = vld [vmem:[%s207 + $0x12c] sm:$0xf]
      %v301 = vld [vmem:[%s207 + $0x130] sm:$0xf]
      %v302 = vld [vmem:[%s207 + $0x134] sm:$0xf]
      %v303 = vld [vmem:[%s207 + $0x138] sm:$0xf]
      %v304 = vld [vmem:[%s207 + $0x13c] sm:$0xf]
      %v305 = vld [vmem:[%s207 + $0x140] sm:$0xf]
      %v306 = vld [vmem:[%s207 + $0x144] sm:$0xf]
      %v307 = vld [vmem:[%s207 + $0x148] sm:$0xf]
      %v308 = vld [vmem:[%s207 + $0x14c] sm:$0xf]
      %v309 = vld [vmem:[%s207 + $0x150] sm:$0xf]
      %v310 = vld [vmem:[%s207 + $0x154] sm:$0xf]
      %v311 = vld [vmem:[%s207 + $0x158] sm:$0xf]
      %v312 = vld [vmem:[%s207 + $0x15c] sm:$0xf]
      %v313 = vld [vmem:[%s207 + $0x160] sm:$0xf]
      %v314 = vld [vmem:[%s207 + $0x164] sm:$0xf]
      %v315 = vld [vmem:[%s207 + $0x168] sm:$0xf]
      %v316 = vld [vmem:[%s207 + $0x16c] sm:$0xf]
      %v317 = vld [vmem:[%s207 + $0x170] sm:$0xf]
      %v318 = vld [vmem:[%s207 + $0x174] sm:$0xf]
      %v319 = vld [vmem:[%s207 + $0x178] sm:$0xf]
      %v320 = vld [vmem:[%s207 + $0x17c] sm:$0xf]
      %v321 = vld [vmem:[%s207 + $0x180] sm:$0xf]
      %v322 = vld [vmem:[%s207 + $0x184] sm:$0xf]
      %v323 = vld [vmem:[%s207 + $0x188] sm:$0xf]
      %v324 = vld [vmem:[%s207 + $0x18c] sm:$0xf]
      %v325 = vld [vmem:[%s207 + $0x190] sm:$0xf]
      %v326 = vld [vmem:[%s207 + $0x194] sm:$0xf]
      %v327 = vld [vmem:[%s207 + $0x198] sm:$0xf]
      %v328 = vld [vmem:[%s207 + $0x19c] sm:$0xf]
      %v329 = vld [vmem:[%s207 + $0x1a0] sm:$0xf]
      %v330 = vld [vmem:[%s207 + $0x1a4] sm:$0xf]
      %v331 = vld [vmem:[%s207 + $0x1a8] sm:$0xf]
      %v332 = vld [vmem:[%s207 + $0x1ac] sm:$0xf]
      %v333 = vld [vmem:[%s207 + $0x1b0] sm:$0xf]
      %v334 = vld [vmem:[%s207 + $0x1b4] sm:$0xf]
      %v335 = vld [vmem:[%s207 + $0x1b8] sm:$0xf]
      %v336 = vld [vmem:[%s207 + $0x1bc] sm:$0xf]
      %v337 = vld [vmem:[%s207 + $0x1c0] sm:$0xf]
      %v338 = vld [vmem:[%s207 + $0x1c4] sm:$0xf]
      %v339 = vld [vmem:[%s207 + $0x1c8] sm:$0xf]
      %v340 = vld [vmem:[%s207 + $0x1cc] sm:$0xf]
      %v341 = vld [vmem:[%s207 + $0x1d0] sm:$0xf]
      %v342 = vld [vmem:[%s207 + $0x1d4] sm:$0xf]
      %v343 = vld [vmem:[%s207 + $0x1d8] sm:$0xf]
      %v344 = vld [vmem:[%s207 + $0x1dc] sm:$0xf]
      %v345 = vld [vmem:[%s207 + $0x1e0] sm:$0xf]
      %v346 = vld [vmem:[%s207 + $0x1e4] sm:$0xf]
      %v347 = vld [vmem:[%s207 + $0x1e8] sm:$0xf]
      %v348 = vld [vmem:[%s207 + $0x1ec] sm:$0xf]
      %v349 = vld [vmem:[%s207 + $0x1f0] sm:$0xf]
      %v350 = vld [vmem:[%s207 + $0x1f4] sm:$0xf]
      %v351 = vld [vmem:[%s207 + $0x1f8] sm:$0xf]
      %v352 = vld [vmem:[%s207 + $0x1fc] sm:$0xf]
      %v353 = vld [vmem:[%s212] sm:$0xf]
      %v354 = vld [vmem:[%s212 + $0x4] sm:$0xf]
      %v355 = vld [vmem:[%s212 + $0x8] sm:$0xf]
      %v356 = vld [vmem:[%s212 + $0xc] sm:$0xf]
      %v357 = vld [vmem:[%s212 + $0x10] sm:$0xf]
      %v358 = vld [vmem:[%s212 + $0x14] sm:$0xf]
      %v359 = vld [vmem:[%s212 + $0x18] sm:$0xf]
      %v360 = vld [vmem:[%s212 + $0x1c] sm:$0xf]
      %v361 = vld [vmem:[%s212 + $0x20] sm:$0xf]
      %v362 = vld [vmem:[%s212 + $0x24] sm:$0xf]
      %v363 = vld [vmem:[%s212 + $0x28] sm:$0xf]
      %v364 = vld [vmem:[%s212 + $0x2c] sm:$0xf]
      %v365 = vld [vmem:[%s212 + $0x30] sm:$0xf]
      %v366 = vld [vmem:[%s212 + $0x34] sm:$0xf]
      %v367 = vld [vmem:[%s212 + $0x38] sm:$0xf]
      %v368 = vld [vmem:[%s212 + $0x3c] sm:$0xf]
      %v369 = vld [vmem:[%s215] sm:$0x1]
      %v371 = vperm.slane %v369, 0
      %v501 = vunpack.c.l.b16 %v225
      %v502 = vunpack.c.l.b16 %v226
      %v503 = vunpack.c.l.b16 %v227
      %v504 = vunpack.c.l.b16 %v228
      %v505 = vunpack.c.l.b16 %v229
      %v506 = vunpack.c.l.b16 %v230
      %v507 = vunpack.c.l.b16 %v231
      %v508 = vunpack.c.l.b16 %v232
      %v509 = vunpack.c.l.b16 %v233
      %v510 = vunpack.c.l.b16 %v234
      %v511 = vunpack.c.l.b16 %v235
      %v512 = vunpack.c.l.b16 %v236
      %v513 = vunpack.c.l.b16 %v237
      %v514 = vunpack.c.l.b16 %v238
      %v515 = vunpack.c.l.b16 %v239
      %v516 = vunpack.c.l.b16 %v240
      %v517 = vunpack.c.l.b16 %v241
      %v518 = vunpack.c.l.b16 %v242
      %v519 = vunpack.c.l.b16 %v243
      %v520 = vunpack.c.l.b16 %v244
      %v521 = vunpack.c.l.b16 %v245
      %v522 = vunpack.c.l.b16 %v246
      %v523 = vunpack.c.l.b16 %v247
      %v524 = vunpack.c.l.b16 %v248
      %v525 = vunpack.c.l.b16 %v249
      %v526 = vunpack.c.l.b16 %v250
      %v527 = vunpack.c.l.b16 %v251
      %v528 = vunpack.c.l.b16 %v252
      %v529 = vunpack.c.l.b16 %v253
      %v530 = vunpack.c.l.b16 %v254
      %v531 = vunpack.c.l.b16 %v255
      %v532 = vunpack.c.l.b16 %v256
      %v533 = vunpack.c.l.b16 %v257
      %v534 = vunpack.c.l.b16 %v258
      %v535 = vunpack.c.l.b16 %v259
      %v536 = vunpack.c.l.b16 %v260
      %v537 = vunpack.c.l.b16 %v261
      %v538 = vunpack.c.l.b16 %v262
      %v539 = vunpack.c.l.b16 %v263
      %v540 = vunpack.c.l.b16 %v264
      %v541 = vunpack.c.l.b16 %v265
      %v542 = vunpack.c.l.b16 %v266
      %v543 = vunpack.c.l.b16 %v267
      %v544 = vunpack.c.l.b16 %v268
      %v545 = vunpack.c.l.b16 %v269
      %v546 = vunpack.c.l.b16 %v270
      %v547 = vunpack.c.l.b16 %v271
      %v548 = vunpack.c.l.b16 %v272
      %v549 = vunpack.c.l.b16 %v273
      %v550 = vunpack.c.l.b16 %v274
      %v551 = vunpack.c.l.b16 %v275
      %v552 = vunpack.c.l.b16 %v276
      %v553 = vunpack.c.l.b16 %v277
      %v554 = vunpack.c.l.b16 %v278
      %v555 = vunpack.c.l.b16 %v279
      %v556 = vunpack.c.l.b16 %v280
      %v557 = vunpack.c.l.b16 %v281
      %v558 = vunpack.c.l.b16 %v282
      %v559 = vunpack.c.l.b16 %v283
      %v560 = vunpack.c.l.b16 %v284
      %v561 = vunpack.c.l.b16 %v285
      %v562 = vunpack.c.l.b16 %v286
      %v563 = vunpack.c.l.b16 %v287
      %v564 = vunpack.c.l.b16 %v288
      %v565 = vunpack.c.l.b16 %v289
      %v566 = vunpack.c.l.b16 %v290
      %v567 = vunpack.c.l.b16 %v291
      %v568 = vunpack.c.l.b16 %v292
      %v569 = vunpack.c.l.b16 %v293
      %v570 = vunpack.c.l.b16 %v294
      %v571 = vunpack.c.l.b16 %v295
      %v572 = vunpack.c.l.b16 %v296
      %v573 = vunpack.c.l.b16 %v297
      %v574 = vunpack.c.l.b16 %v298
      %v575 = vunpack.c.l.b16 %v299
      %v576 = vunpack.c.l.b16 %v300
      %v577 = vunpack.c.l.b16 %v301
      %v578 = vunpack.c.l.b16 %v302
      %v579 = vunpack.c.l.b16 %v303
      %v580 = vunpack.c.l.b16 %v304
      %v581 = vunpack.c.l.b16 %v305
      %v582 = vunpack.c.l.b16 %v306
      %v583 = vunpack.c.l.b16 %v307
      %v584 = vunpack.c.l.b16 %v308
      %v585 = vunpack.c.l.b16 %v309
      %v586 = vunpack.c.l.b16 %v310
      %v587 = vunpack.c.l.b16 %v311
      %v588 = vunpack.c.l.b16 %v312
      %v589 = vunpack.c.l.b16 %v313
      %v590 = vunpack.c.l.b16 %v314
      %v591 = vunpack.c.l.b16 %v315
      %v592 = vunpack.c.l.b16 %v316
      %v593 = vunpack.c.l.b16 %v317
      %v594 = vunpack.c.l.b16 %v318
      %v595 = vunpack.c.l.b16 %v319
      %v596 = vunpack.c.l.b16 %v320
      %v597 = vunpack.c.l.b16 %v321
      %v598 = vunpack.c.l.b16 %v322
      %v599 = vunpack.c.l.b16 %v323
      %v600 = vunpack.c.l.b16 %v324
      %v601 = vunpack.c.l.b16 %v325
      %v602 = vunpack.c.l.b16 %v326
      %v603 = vunpack.c.l.b16 %v327
      %v604 = vunpack.c.l.b16 %v328
      %v605 = vunpack.c.l.b16 %v329
      %v606 = vunpack.c.l.b16 %v330
      %v607 = vunpack.c.l.b16 %v331
      %v608 = vunpack.c.l.b16 %v332
      %v609 = vunpack.c.l.b16 %v333
      %v610 = vunpack.c.l.b16 %v334
      %v611 = vunpack.c.l.b16 %v335
      %v612 = vunpack.c.l.b16 %v336
      %v613 = vunpack.c.l.b16 %v337
      %v614 = vunpack.c.l.b16 %v338
      %v615 = vunpack.c.l.b16 %v339
      %v616 = vunpack.c.l.b16 %v340
      %v617 = vunpack.c.l.b16 %v341
      %v618 = vunpack.c.l.b16 %v342
      %v619 = vunpack.c.l.b16 %v343
      %v620 = vunpack.c.l.b16 %v344
      %v621 = vunpack.c.l.b16 %v345
      %v622 = vunpack.c.l.b16 %v346
      %v623 = vunpack.c.l.b16 %v347
      %v624 = vunpack.c.l.b16 %v348
      %v625 = vunpack.c.l.b16 %v349
      %v626 = vunpack.c.l.b16 %v350
      %v627 = vunpack.c.l.b16 %v351
      %v628 = vunpack.c.l.b16 %v352
      %v629 = vpack.c.b16 %v502, %v501
      %v630 = vpack.c.b16 %v504, %v503
      %v631 = vpack.c.b16 %v506, %v505
      %v632 = vpack.c.b16 %v508, %v507
      %v633 = vpack.c.b16 %v510, %v509
      %v634 = vpack.c.b16 %v512, %v511
      %v635 = vpack.c.b16 %v514, %v513
      %v636 = vpack.c.b16 %v516, %v515
      %v637 = vpack.c.b16 %v518, %v517
      %v638 = vpack.c.b16 %v520, %v519
      %v639 = vpack.c.b16 %v522, %v521
      %v640 = vpack.c.b16 %v524, %v523
      %v641 = vpack.c.b16 %v526, %v525
      %v642 = vpack.c.b16 %v528, %v527
      %v643 = vpack.c.b16 %v530, %v529
      %v644 = vpack.c.b16 %v532, %v531
      %v645 = vpack.c.b16 %v534, %v533
      %v646 = vpack.c.b16 %v536, %v535
      %v647 = vpack.c.b16 %v538, %v537
      %v648 = vpack.c.b16 %v540, %v539
      %v649 = vpack.c.b16 %v542, %v541
      %v650 = vpack.c.b16 %v544, %v543
      %v651 = vpack.c.b16 %v546, %v545
      %v652 = vpack.c.b16 %v548, %v547
      %v653 = vpack.c.b16 %v550, %v549
      %v654 = vpack.c.b16 %v552, %v551
      %v655 = vpack.c.b16 %v554, %v553
      %v656 = vpack.c.b16 %v556, %v555
      %v657 = vpack.c.b16 %v558, %v557
      %v658 = vpack.c.b16 %v560, %v559
      %v659 = vpack.c.b16 %v562, %v561
      %v660 = vpack.c.b16 %v564, %v563
      %v661 = vpack.c.b16 %v566, %v565
      %v662 = vpack.c.b16 %v568, %v567
      %v663 = vpack.c.b16 %v570, %v569
      %v664 = vpack.c.b16 %v572, %v571
      %v665 = vpack.c.b16 %v574, %v573
      %v666 = vpack.c.b16 %v576, %v575
      %v667 = vpack.c.b16 %v578, %v577
      %v668 = vpack.c.b16 %v580, %v579
      %v669 = vpack.c.b16 %v582, %v581
      %v670 = vpack.c.b16 %v584, %v583
      %v671 = vpack.c.b16 %v586, %v585
      %v672 = vpack.c.b16 %v588, %v587
      %v673 = vpack.c.b16 %v590, %v589
      %v674 = vpack.c.b16 %v592, %v591
      %v675 = vpack.c.b16 %v594, %v593
      %v676 = vpack.c.b16 %v596, %v595
      %v677 = vpack.c.b16 %v598, %v597
      %v678 = vpack.c.b16 %v600, %v599
      %v679 = vpack.c.b16 %v602, %v601
      %v680 = vpack.c.b16 %v604, %v603
      %v681 = vpack.c.b16 %v606, %v605
      %v682 = vpack.c.b16 %v608, %v607
      %v683 = vpack.c.b16 %v610, %v609
      %v684 = vpack.c.b16 %v612, %v611
      %v685 = vpack.c.b16 %v614, %v613
      %v686 = vpack.c.b16 %v616, %v615
      %v687 = vpack.c.b16 %v618, %v617
      %v688 = vpack.c.b16 %v620, %v619
      %v689 = vpack.c.b16 %v622, %v621
      %v690 = vpack.c.b16 %v624, %v623
      %v691 = vpack.c.b16 %v626, %v625
      %v692 = vpack.c.b16 %v628, %v627
      %v773 = vunpack.c.l.b16 %v353
      %v774 = vunpack.c.l.b16 %v354
      %v775 = vunpack.c.l.b16 %v355
      %v776 = vunpack.c.l.b16 %v356
      %v777 = vunpack.c.l.b16 %v357
      %v778 = vunpack.c.l.b16 %v358
      %v779 = vunpack.c.l.b16 %v359
      %v780 = vunpack.c.l.b16 %v360
      %v781 = vunpack.c.l.b16 %v361
      %v782 = vunpack.c.l.b16 %v362
      %v783 = vunpack.c.l.b16 %v363
      %v784 = vunpack.c.l.b16 %v364
      %v785 = vunpack.c.l.b16 %v365
      %v786 = vunpack.c.l.b16 %v366
      %v787 = vunpack.c.l.b16 %v367
      %v788 = vunpack.c.l.b16 %v368
      %v789 = vpack.c.b16 %v774, %v773
      %v790 = vpack.c.b16 %v776, %v775
      %v791 = vpack.c.b16 %v778, %v777
      %v792 = vpack.c.b16 %v780, %v779
      %v793 = vpack.c.b16 %v782, %v781
      %v794 = vpack.c.b16 %v784, %v783
      %v795 = vpack.c.b16 %v786, %v785
      %v796 = vpack.c.b16 %v788, %v787
      %805 = vmatpush.bf16.msra.mxu0 %v796
      %806 = vmatpush.bf16.msra.mxu0 %v795
      %807 = vmatpush.bf16.msra.mxu0 %v794
      %808 = vmatpush.bf16.msra.mxu0 %v793
      %809 = vmatpush.bf16.msra.mxu0 %v792
      %810 = vmatpush.bf16.msra.mxu0 %v791
      %811 = vmatpush.bf16.msra.mxu0 %v790
      %812 = vmatpush.bf16.msra.mxu0 %v789
      %813 = vmatmul.bf16.gmra.mxu0 %v629
      %v814 = vpop.f32.mrf.mxu0
      %v815 = vadd.f32 %v371, %v814
      %v816 = vpop.f32.mrf.mxu0
      %v817 = vadd.f32 %v371, %v816
      %818 = vmatmul.bf16.gmra.mxu0 %v630
      %v819 = vpop.f32.mrf.mxu0
      %v820 = vadd.f32 %v371, %v819
      %v821 = vpop.f32.mrf.mxu0
      %v822 = vadd.f32 %v371, %v821
      %823 = vmatmul.bf16.gmra.mxu0 %v631
      %v824 = vpop.f32.mrf.mxu0
      %v825 = vadd.f32 %v371, %v824
      %v826 = vpop.f32.mrf.mxu0
      %v827 = vadd.f32 %v371, %v826
      %828 = vmatmul.bf16.gmra.mxu0 %v632
      %v829 = vpop.f32.mrf.mxu0
      %v830 = vadd.f32 %v371, %v829
      %v831 = vpop.f32.mrf.mxu0
      %v832 = vadd.f32 %v371, %v831
      %833 = vmatmul.bf16.gmra.mxu0 %v633
      %v834 = vpop.f32.mrf.mxu0
      %v835 = vadd.f32 %v371, %v834
      %v836 = vpop.f32.mrf.mxu0
      %v837 = vadd.f32 %v371, %v836
      %838 = vmatmul.bf16.gmra.mxu0 %v634
      %v839 = vpop.f32.mrf.mxu0
      %v840 = vadd.f32 %v371, %v839
      %v841 = vpop.f32.mrf.mxu0
      %v842 = vadd.f32 %v371, %v841
      %843 = vmatmul.bf16.gmra.mxu0 %v635
      %v844 = vpop.f32.mrf.mxu0
      %v845 = vadd.f32 %v371, %v844
      %v846 = vpop.f32.mrf.mxu0
      %v847 = vadd.f32 %v371, %v846
      %848 = vmatmul.bf16.gmra.mxu0 %v636
      %v849 = vpop.f32.mrf.mxu0
      %v850 = vadd.f32 %v371, %v849
      %v851 = vpop.f32.mrf.mxu0
      %v852 = vadd.f32 %v371, %v851
      %853 = vmatmul.bf16.gmra.mxu0 %v637
      %v854 = vpop.f32.mrf.mxu0
      %v855 = vadd.f32 %v371, %v854
      %v856 = vpop.f32.mrf.mxu0
      %v857 = vadd.f32 %v371, %v856
      %858 = vmatmul.bf16.gmra.mxu0 %v638
      %v859 = vpop.f32.mrf.mxu0
      %v860 = vadd.f32 %v371, %v859
      %v861 = vpop.f32.mrf.mxu0
      %v862 = vadd.f32 %v371, %v861
      %863 = vmatmul.bf16.gmra.mxu0 %v639
      %v864 = vpop.f32.mrf.mxu0
      %v865 = vadd.f32 %v371, %v864
      %v866 = vpop.f32.mrf.mxu0
      %v867 = vadd.f32 %v371, %v866
      %868 = vmatmul.bf16.gmra.mxu0 %v640
      %v869 = vpop.f32.mrf.mxu0
      %v870 = vadd.f32 %v371, %v869
      %v871 = vpop.f32.mrf.mxu0
      %v872 = vadd.f32 %v371, %v871
      %873 = vmatmul.bf16.gmra.mxu0 %v641
      %v874 = vpop.f32.mrf.mxu0
      %v875 = vadd.f32 %v371, %v874
      %v876 = vpop.f32.mrf.mxu0
      %v877 = vadd.f32 %v371, %v876
      %878 = vmatmul.bf16.gmra.mxu0 %v642
      %v879 = vpop.f32.mrf.mxu0
      %v880 = vadd.f32 %v371, %v879
      %v881 = vpop.f32.mrf.mxu0
      %v882 = vadd.f32 %v371, %v881
      %883 = vmatmul.bf16.gmra.mxu0 %v643
      %v884 = vpop.f32.mrf.mxu0
      %v885 = vadd.f32 %v371, %v884
      %v886 = vpop.f32.mrf.mxu0
      %v887 = vadd.f32 %v371, %v886
      %888 = vmatmul.bf16.gmra.mxu0 %v644
      %v889 = vpop.f32.mrf.mxu0
      %v890 = vadd.f32 %v371, %v889
      %v891 = vpop.f32.mrf.mxu0
      %v892 = vadd.f32 %v371, %v891
      %893 = vmatmul.bf16.gmra.mxu0 %v645
      %v894 = vpop.f32.mrf.mxu0
      %v895 = vadd.f32 %v371, %v894
      %v896 = vpop.f32.mrf.mxu0
      %v897 = vadd.f32 %v371, %v896
      %898 = vmatmul.bf16.gmra.mxu0 %v646
      %v899 = vpop.f32.mrf.mxu0
      %v900 = vadd.f32 %v371, %v899
      %v901 = vpop.f32.mrf.mxu0
      %v902 = vadd.f32 %v371, %v901
      %903 = vmatmul.bf16.gmra.mxu0 %v647
      %v904 = vpop.f32.mrf.mxu0
      %v905 = vadd.f32 %v371, %v904
      %v906 = vpop.f32.mrf.mxu0
      %v907 = vadd.f32 %v371, %v906
      %908 = vmatmul.bf16.gmra.mxu0 %v648
      %v909 = vpop.f32.mrf.mxu0
      %v910 = vadd.f32 %v371, %v909
      %v911 = vpop.f32.mrf.mxu0
      %v912 = vadd.f32 %v371, %v911
      %913 = vmatmul.bf16.gmra.mxu0 %v649
      %v914 = vpop.f32.mrf.mxu0
      %v915 = vadd.f32 %v371, %v914
      %v916 = vpop.f32.mrf.mxu0
      %v917 = vadd.f32 %v371, %v916
      %918 = vmatmul.bf16.gmra.mxu0 %v650
      %v919 = vpop.f32.mrf.mxu0
      %v920 = vadd.f32 %v371, %v919
      %v921 = vpop.f32.mrf.mxu0
      %v922 = vadd.f32 %v371, %v921
      %923 = vmatmul.bf16.gmra.mxu0 %v651
      %v924 = vpop.f32.mrf.mxu0
      %v925 = vadd.f32 %v371, %v924
      %v926 = vpop.f32.mrf.mxu0
      %v927 = vadd.f32 %v371, %v926
      %928 = vmatmul.bf16.gmra.mxu0 %v652
      %v929 = vpop.f32.mrf.mxu0
      %v930 = vadd.f32 %v371, %v929
      %v931 = vpop.f32.mrf.mxu0
      %v932 = vadd.f32 %v371, %v931
      %933 = vmatmul.bf16.gmra.mxu0 %v653
      %v934 = vpop.f32.mrf.mxu0
      %v935 = vadd.f32 %v371, %v934
      %v936 = vpop.f32.mrf.mxu0
      %v937 = vadd.f32 %v371, %v936
      %938 = vmatmul.bf16.gmra.mxu0 %v654
      %v939 = vpop.f32.mrf.mxu0
      %v940 = vadd.f32 %v371, %v939
      %v941 = vpop.f32.mrf.mxu0
      %v942 = vadd.f32 %v371, %v941
      %943 = vmatmul.bf16.gmra.mxu0 %v655
      %v944 = vpop.f32.mrf.mxu0
      %v945 = vadd.f32 %v371, %v944
      %v946 = vpop.f32.mrf.mxu0
      %v947 = vadd.f32 %v371, %v946
      %948 = vmatmul.bf16.gmra.mxu0 %v656
      %v949 = vpop.f32.mrf.mxu0
      %v950 = vadd.f32 %v371, %v949
      %v951 = vpop.f32.mrf.mxu0
      %v952 = vadd.f32 %v371, %v951
      %953 = vmatmul.bf16.gmra.mxu0 %v657
      %v954 = vpop.f32.mrf.mxu0
      %v955 = vadd.f32 %v371, %v954
      %v956 = vpop.f32.mrf.mxu0
      %v957 = vadd.f32 %v371, %v956
      %958 = vmatmul.bf16.gmra.mxu0 %v658
      %v959 = vpop.f32.mrf.mxu0
      %v960 = vadd.f32 %v371, %v959
      %v961 = vpop.f32.mrf.mxu0
      %v962 = vadd.f32 %v371, %v961
      %963 = vmatmul.bf16.gmra.mxu0 %v659
      %v964 = vpop.f32.mrf.mxu0
      %v965 = vadd.f32 %v371, %v964
      %v966 = vpop.f32.mrf.mxu0
      %v967 = vadd.f32 %v371, %v966
      %968 = vmatmul.bf16.gmra.mxu0 %v660
      %v969 = vpop.f32.mrf.mxu0
      %v970 = vadd.f32 %v371, %v969
      %v971 = vpop.f32.mrf.mxu0
      %v972 = vadd.f32 %v371, %v971
      %973 = vmatmul.bf16.gmra.mxu0 %v661
      %v974 = vpop.f32.mrf.mxu0
      %v975 = vadd.f32 %v371, %v974
      %v976 = vpop.f32.mrf.mxu0
      %v977 = vadd.f32 %v371, %v976
      %978 = vmatmul.bf16.gmra.mxu0 %v662
      %v979 = vpop.f32.mrf.mxu0
      %v980 = vadd.f32 %v371, %v979
      %v981 = vpop.f32.mrf.mxu0
      %v982 = vadd.f32 %v371, %v981
      %983 = vmatmul.bf16.gmra.mxu0 %v663
      %v984 = vpop.f32.mrf.mxu0
      %v985 = vadd.f32 %v371, %v984
      %v986 = vpop.f32.mrf.mxu0
      %v987 = vadd.f32 %v371, %v986
      %988 = vmatmul.bf16.gmra.mxu0 %v664
      %v989 = vpop.f32.mrf.mxu0
      %v990 = vadd.f32 %v371, %v989
      %v991 = vpop.f32.mrf.mxu0
      %v992 = vadd.f32 %v371, %v991
      %993 = vmatmul.bf16.gmra.mxu0 %v665
      %v994 = vpop.f32.mrf.mxu0
      %v995 = vadd.f32 %v371, %v994
      %v996 = vpop.f32.mrf.mxu0
      %v997 = vadd.f32 %v371, %v996
      %998 = vmatmul.bf16.gmra.mxu0 %v666
      %v999 = vpop.f32.mrf.mxu0
      %v1000 = vadd.f32 %v371, %v999
      %v1001 = vpop.f32.mrf.mxu0
      %v1002 = vadd.f32 %v371, %v1001
      %1003 = vmatmul.bf16.gmra.mxu0 %v667
      %v1004 = vpop.f32.mrf.mxu0
      %v1005 = vadd.f32 %v371, %v1004
      %v1006 = vpop.f32.mrf.mxu0
      %v1007 = vadd.f32 %v371, %v1006
      %1008 = vmatmul.bf16.gmra.mxu0 %v668
      %v1009 = vpop.f32.mrf.mxu0
      %v1010 = vadd.f32 %v371, %v1009
      %v1011 = vpop.f32.mrf.mxu0
      %v1012 = vadd.f32 %v371, %v1011
      %1013 = vmatmul.bf16.gmra.mxu0 %v669
      %v1014 = vpop.f32.mrf.mxu0
      %v1015 = vadd.f32 %v371, %v1014
      %v1016 = vpop.f32.mrf.mxu0
      %v1017 = vadd.f32 %v371, %v1016
      %1018 = vmatmul.bf16.gmra.mxu0 %v670
      %v1019 = vpop.f32.mrf.mxu0
      %v1020 = vadd.f32 %v371, %v1019
      %v1021 = vpop.f32.mrf.mxu0
      %v1022 = vadd.f32 %v371, %v1021
      %1023 = vmatmul.bf16.gmra.mxu0 %v671
      %v1024 = vpop.f32.mrf.mxu0
      %v1025 = vadd.f32 %v371, %v1024
      %v1026 = vpop.f32.mrf.mxu0
      %v1027 = vadd.f32 %v371, %v1026
      %1028 = vmatmul.bf16.gmra.mxu0 %v672
      %v1029 = vpop.f32.mrf.mxu0
      %v1030 = vadd.f32 %v371, %v1029
      %v1031 = vpop.f32.mrf.mxu0
      %v1032 = vadd.f32 %v371, %v1031
      %1033 = vmatmul.bf16.gmra.mxu0 %v673
      %v1034 = vpop.f32.mrf.mxu0
      %v1035 = vadd.f32 %v371, %v1034
      %v1036 = vpop.f32.mrf.mxu0
      %v1037 = vadd.f32 %v371, %v1036
      %1038 = vmatmul.bf16.gmra.mxu0 %v674
      %v1039 = vpop.f32.mrf.mxu0
      %v1040 = vadd.f32 %v371, %v1039
      %v1041 = vpop.f32.mrf.mxu0
      %v1042 = vadd.f32 %v371, %v1041
      %1043 = vmatmul.bf16.gmra.mxu0 %v675
      %v1044 = vpop.f32.mrf.mxu0
      %v1045 = vadd.f32 %v371, %v1044
      %v1046 = vpop.f32.mrf.mxu0
      %v1047 = vadd.f32 %v371, %v1046
      %1048 = vmatmul.bf16.gmra.mxu0 %v676
      %v1049 = vpop.f32.mrf.mxu0
      %v1050 = vadd.f32 %v371, %v1049
      %v1051 = vpop.f32.mrf.mxu0
      %v1052 = vadd.f32 %v371, %v1051
      %1053 = vmatmul.bf16.gmra.mxu0 %v677
      %v1054 = vpop.f32.mrf.mxu0
      %v1055 = vadd.f32 %v371, %v1054
      %v1056 = vpop.f32.mrf.mxu0
      %v1057 = vadd.f32 %v371, %v1056
      %1058 = vmatmul.bf16.gmra.mxu0 %v678
      %v1059 = vpop.f32.mrf.mxu0
      %v1060 = vadd.f32 %v371, %v1059
      %v1061 = vpop.f32.mrf.mxu0
      %v1062 = vadd.f32 %v371, %v1061
      %1063 = vmatmul.bf16.gmra.mxu0 %v679
      %v1064 = vpop.f32.mrf.mxu0
      %v1065 = vadd.f32 %v371, %v1064
      %v1066 = vpop.f32.mrf.mxu0
      %v1067 = vadd.f32 %v371, %v1066
      %1068 = vmatmul.bf16.gmra.mxu0 %v680
      %v1069 = vpop.f32.mrf.mxu0
      %v1070 = vadd.f32 %v371, %v1069
      %v1071 = vpop.f32.mrf.mxu0
      %v1072 = vadd.f32 %v371, %v1071
      %1073 = vmatmul.bf16.gmra.mxu0 %v681
      %v1074 = vpop.f32.mrf.mxu0
      %v1075 = vadd.f32 %v371, %v1074
      %v1076 = vpop.f32.mrf.mxu0
      %v1077 = vadd.f32 %v371, %v1076
      %1078 = vmatmul.bf16.gmra.mxu0 %v682
      %v1079 = vpop.f32.mrf.mxu0
      %v1080 = vadd.f32 %v371, %v1079
      %v1081 = vpop.f32.mrf.mxu0
      %v1082 = vadd.f32 %v371, %v1081
      %1083 = vmatmul.bf16.gmra.mxu0 %v683
      %v1084 = vpop.f32.mrf.mxu0
      %v1085 = vadd.f32 %v371, %v1084
      %v1086 = vpop.f32.mrf.mxu0
      %v1087 = vadd.f32 %v371, %v1086
      %1088 = vmatmul.bf16.gmra.mxu0 %v684
      %v1089 = vpop.f32.mrf.mxu0
      %v1090 = vadd.f32 %v371, %v1089
      %v1091 = vpop.f32.mrf.mxu0
      %v1092 = vadd.f32 %v371, %v1091
      %1093 = vmatmul.bf16.gmra.mxu0 %v685
      %v1094 = vpop.f32.mrf.mxu0
      %v1095 = vadd.f32 %v371, %v1094
      %v1096 = vpop.f32.mrf.mxu0
      %v1097 = vadd.f32 %v371, %v1096
      %1098 = vmatmul.bf16.gmra.mxu0 %v686
      %v1099 = vpop.f32.mrf.mxu0
      %v1100 = vadd.f32 %v371, %v1099
      %v1101 = vpop.f32.mrf.mxu0
      %v1102 = vadd.f32 %v371, %v1101
      %1103 = vmatmul.bf16.gmra.mxu0 %v687
      %v1104 = vpop.f32.mrf.mxu0
      %v1105 = vadd.f32 %v371, %v1104
      %v1106 = vpop.f32.mrf.mxu0
      %v1107 = vadd.f32 %v371, %v1106
      %1108 = vmatmul.bf16.gmra.mxu0 %v688
      %v1109 = vpop.f32.mrf.mxu0
      %v1110 = vadd.f32 %v371, %v1109
      %v1111 = vpop.f32.mrf.mxu0
      %v1112 = vadd.f32 %v371, %v1111
      %1113 = vmatmul.bf16.gmra.mxu0 %v689
      %v1114 = vpop.f32.mrf.mxu0
      %v1115 = vadd.f32 %v371, %v1114
      %v1116 = vpop.f32.mrf.mxu0
      %v1117 = vadd.f32 %v371, %v1116
      %1118 = vmatmul.bf16.gmra.mxu0 %v690
      %v1119 = vpop.f32.mrf.mxu0
      %v1120 = vadd.f32 %v371, %v1119
      %v1121 = vpop.f32.mrf.mxu0
      %v1122 = vadd.f32 %v371, %v1121
      %1123 = vmatmul.bf16.gmra.mxu0 %v691
      %v1124 = vpop.f32.mrf.mxu0
      %v1125 = vadd.f32 %v371, %v1124
      %v1126 = vpop.f32.mrf.mxu0
      %v1127 = vadd.f32 %v371, %v1126
      %1128 = vmatmul.bf16.gmra.mxu0 %v692
      %v1129 = vpop.f32.mrf.mxu0
      %v1130 = vadd.f32 %v371, %v1129
      %v1131 = vpop.f32.mrf.mxu0
      %v1132 = vadd.f32 %v371, %v1131
      %1133 = vdwg.mxu0
      %vm1134 = vcmp.gt.f32.partialorder %v815, 0.0
      %vm1135 = vcmp.gt.f32.partialorder %v817, 0.0
      %vm1136 = vcmp.gt.f32.partialorder %v820, 0.0
      %vm1137 = vcmp.gt.f32.partialorder %v822, 0.0
      %vm1138 = vcmp.gt.f32.partialorder %v825, 0.0
      %vm1139 = vcmp.gt.f32.partialorder %v827, 0.0
      %vm1140 = vcmp.gt.f32.partialorder %v830, 0.0
      %vm1141 = vcmp.gt.f32.partialorder %v832, 0.0
      %vm1142 = vcmp.gt.f32.partialorder %v835, 0.0
      %vm1143 = vcmp.gt.f32.partialorder %v837, 0.0
      %vm1144 = vcmp.gt.f32.partialorder %v840, 0.0
      %vm1145 = vcmp.gt.f32.partialorder %v842, 0.0
      %vm1146 = vcmp.gt.f32.partialorder %v845, 0.0
      %vm1147 = vcmp.gt.f32.partialorder %v847, 0.0
      %vm1148 = vcmp.gt.f32.partialorder %v850, 0.0
      %vm1149 = vcmp.gt.f32.partialorder %v852, 0.0
      %vm1150 = vcmp.gt.f32.partialorder %v855, 0.0
      %vm1151 = vcmp.gt.f32.partialorder %v857, 0.0
      %vm1152 = vcmp.gt.f32.partialorder %v860, 0.0
      %vm1153 = vcmp.gt.f32.partialorder %v862, 0.0
      %vm1154 = vcmp.gt.f32.partialorder %v865, 0.0
      %vm1155 = vcmp.gt.f32.partialorder %v867, 0.0
      %vm1156 = vcmp.gt.f32.partialorder %v870, 0.0
      %vm1157 = vcmp.gt.f32.partialorder %v872, 0.0
      %vm1158 = vcmp.gt.f32.partialorder %v875, 0.0
      %vm1159 = vcmp.gt.f32.partialorder %v877, 0.0
      %vm1160 = vcmp.gt.f32.partialorder %v880, 0.0
      %vm1161 = vcmp.gt.f32.partialorder %v882, 0.0
      %vm1162 = vcmp.gt.f32.partialorder %v885, 0.0
      %vm1163 = vcmp.gt.f32.partialorder %v887, 0.0
      %vm1164 = vcmp.gt.f32.partialorder %v890, 0.0
      %vm1165 = vcmp.gt.f32.partialorder %v892, 0.0
      %vm1166 = vcmp.gt.f32.partialorder %v895, 0.0
      %vm1167 = vcmp.gt.f32.partialorder %v897, 0.0
      %vm1168 = vcmp.gt.f32.partialorder %v900, 0.0
      %vm1169 = vcmp.gt.f32.partialorder %v902, 0.0
      %vm1170 = vcmp.gt.f32.partialorder %v905, 0.0
      %vm1171 = vcmp.gt.f32.partialorder %v907, 0.0
      %vm1172 = vcmp.gt.f32.partialorder %v910, 0.0
      %vm1173 = vcmp.gt.f32.partialorder %v912, 0.0
      %vm1174 = vcmp.gt.f32.partialorder %v915, 0.0
      %vm1175 = vcmp.gt.f32.partialorder %v917, 0.0
      %vm1176 = vcmp.gt.f32.partialorder %v920, 0.0
      %vm1177 = vcmp.gt.f32.partialorder %v922, 0.0
      %vm1178 = vcmp.gt.f32.partialorder %v925, 0.0
      %vm1179 = vcmp.gt.f32.partialorder %v927, 0.0
      %vm1180 = vcmp.gt.f32.partialorder %v930, 0.0
      %vm1181 = vcmp.gt.f32.partialorder %v932, 0.0
      %vm1182 = vcmp.gt.f32.partialorder %v935, 0.0
      %vm1183 = vcmp.gt.f32.partialorder %v937, 0.0
      %vm1184 = vcmp.gt.f32.partialorder %v940, 0.0
      %vm1185 = vcmp.gt.f32.partialorder %v942, 0.0
      %vm1186 = vcmp.gt.f32.partialorder %v945, 0.0
      %vm1187 = vcmp.gt.f32.partialorder %v947, 0.0
      %vm1188 = vcmp.gt.f32.partialorder %v950, 0.0
      %vm1189 = vcmp.gt.f32.partialorder %v952, 0.0
      %vm1190 = vcmp.gt.f32.partialorder %v955, 0.0
      %vm1191 = vcmp.gt.f32.partialorder %v957, 0.0
      %vm1192 = vcmp.gt.f32.partialorder %v960, 0.0
      %vm1193 = vcmp.gt.f32.partialorder %v962, 0.0
      %vm1194 = vcmp.gt.f32.partialorder %v965, 0.0
      %vm1195 = vcmp.gt.f32.partialorder %v967, 0.0
      %vm1196 = vcmp.gt.f32.partialorder %v970, 0.0
      %vm1197 = vcmp.gt.f32.partialorder %v972, 0.0
      %vm1198 = vcmp.gt.f32.partialorder %v975, 0.0
      %vm1199 = vcmp.gt.f32.partialorder %v977, 0.0
      %vm1200 = vcmp.gt.f32.partialorder %v980, 0.0
      %vm1201 = vcmp.gt.f32.partialorder %v982, 0.0
      %vm1202 = vcmp.gt.f32.partialorder %v985, 0.0
      %vm1203 = vcmp.gt.f32.partialorder %v987, 0.0
      %vm1204 = vcmp.gt.f32.partialorder %v990, 0.0
      %vm1205 = vcmp.gt.f32.partialorder %v992, 0.0
      %vm1206 = vcmp.gt.f32.partialorder %v995, 0.0
      %vm1207 = vcmp.gt.f32.partialorder %v997, 0.0
      %vm1208 = vcmp.gt.f32.partialorder %v1000, 0.0
      %vm1209 = vcmp.gt.f32.partialorder %v1002, 0.0
      %vm1210 = vcmp.gt.f32.partialorder %v1005, 0.0
      %vm1211 = vcmp.gt.f32.partialorder %v1007, 0.0
      %vm1212 = vcmp.gt.f32.partialorder %v1010, 0.0
      %vm1213 = vcmp.gt.f32.partialorder %v1012, 0.0
      %vm1214 = vcmp.gt.f32.partialorder %v1015, 0.0
      %vm1215 = vcmp.gt.f32.partialorder %v1017, 0.0
      %vm1216 = vcmp.gt.f32.partialorder %v1020, 0.0
      %vm1217 = vcmp.gt.f32.partialorder %v1022, 0.0
      %vm1218 = vcmp.gt.f32.partialorder %v1025, 0.0
      %vm1219 = vcmp.gt.f32.partialorder %v1027, 0.0
      %vm1220 = vcmp.gt.f32.partialorder %v1030, 0.0
      %vm1221 = vcmp.gt.f32.partialorder %v1032, 0.0
      %vm1222 = vcmp.gt.f32.partialorder %v1035, 0.0
      %vm1223 = vcmp.gt.f32.partialorder %v1037, 0.0
      %vm1224 = vcmp.gt.f32.partialorder %v1040, 0.0
      %vm1225 = vcmp.gt.f32.partialorder %v1042, 0.0
      %vm1226 = vcmp.gt.f32.partialorder %v1045, 0.0
      %vm1227 = vcmp.gt.f32.partialorder %v1047, 0.0
      %vm1228 = vcmp.gt.f32.partialorder %v1050, 0.0
      %vm1229 = vcmp.gt.f32.partialorder %v1052, 0.0
      %vm1230 = vcmp.gt.f32.partialorder %v1055, 0.0
      %vm1231 = vcmp.gt.f32.partialorder %v1057, 0.0
      %vm1232 = vcmp.gt.f32.partialorder %v1060, 0.0
      %vm1233 = vcmp.gt.f32.partialorder %v1062, 0.0
      %vm1234 = vcmp.gt.f32.partialorder %v1065, 0.0
      %vm1235 = vcmp.gt.f32.partialorder %v1067, 0.0
      %vm1236 = vcmp.gt.f32.partialorder %v1070, 0.0
      %vm1237 = vcmp.gt.f32.partialorder %v1072, 0.0
      %vm1238 = vcmp.gt.f32.partialorder %v1075, 0.0
      %vm1239 = vcmp.gt.f32.partialorder %v1077, 0.0
      %vm1240 = vcmp.gt.f32.partialorder %v1080, 0.0
      %vm1241 = vcmp.gt.f32.partialorder %v1082, 0.0
      %vm1242 = vcmp.gt.f32.partialorder %v1085, 0.0
      %vm1243 = vcmp.gt.f32.partialorder %v1087, 0.0
      %vm1244 = vcmp.gt.f32.partialorder %v1090, 0.0
      %vm1245 = vcmp.gt.f32.partialorder %v1092, 0.0
      %vm1246 = vcmp.gt.f32.partialorder %v1095, 0.0
      %vm1247 = vcmp.gt.f32.partialorder %v1097, 0.0
      %vm1248 = vcmp.gt.f32.partialorder %v1100, 0.0
      %vm1249 = vcmp.gt.f32.partialorder %v1102, 0.0
      %vm1250 = vcmp.gt.f32.partialorder %v1105, 0.0
      %vm1251 = vcmp.gt.f32.partialorder %v1107, 0.0
      %vm1252 = vcmp.gt.f32.partialorder %v1110, 0.0
      %vm1253 = vcmp.gt.f32.partialorder %v1112, 0.0
      %vm1254 = vcmp.gt.f32.partialorder %v1115, 0.0
      %vm1255 = vcmp.gt.f32.partialorder %v1117, 0.0
      %vm1256 = vcmp.gt.f32.partialorder %v1120, 0.0
      %vm1257 = vcmp.gt.f32.partialorder %v1122, 0.0
      %vm1258 = vcmp.gt.f32.partialorder %v1125, 0.0
      %vm1259 = vcmp.gt.f32.partialorder %v1127, 0.0
      %vm1260 = vcmp.gt.f32.partialorder %v1130, 0.0
      %vm1261 = vcmp.gt.f32.partialorder %v1132, 0.0
      %v1262 = vmul.f32 %v815, 0.2
      %v1263 = vmul.f32 %v817, 0.2
      %v1264 = vmul.f32 %v820, 0.2
      %v1265 = vmul.f32 %v822, 0.2
      %v1266 = vmul.f32 %v825, 0.2
      %v1267 = vmul.f32 %v827, 0.2
      %v1268 = vmul.f32 %v830, 0.2
      %v1269 = vmul.f32 %v832, 0.2
      %v1270 = vmul.f32 %v835, 0.2
      %v1271 = vmul.f32 %v837, 0.2
      %v1272 = vmul.f32 %v840, 0.2
      %v1273 = vmul.f32 %v842, 0.2
      %v1274 = vmul.f32 %v845, 0.2
      %v1275 = vmul.f32 %v847, 0.2
      %v1276 = vmul.f32 %v850, 0.2
      %v1277 = vmul.f32 %v852, 0.2
      %v1278 = vmul.f32 %v855, 0.2
      %v1279 = vmul.f32 %v857, 0.2
      %v1280 = vmul.f32 %v860, 0.2
      %v1281 = vmul.f32 %v862, 0.2
      %v1282 = vmul.f32 %v865, 0.2
      %v1283 = vmul.f32 %v867, 0.2
      %v1284 = vmul.f32 %v870, 0.2
      %v1285 = vmul.f32 %v872, 0.2
      %v1286 = vmul.f32 %v875, 0.2
      %v1287 = vmul.f32 %v877, 0.2
      %v1288 = vmul.f32 %v880, 0.2
      %v1289 = vmul.f32 %v882, 0.2
      %v1290 = vmul.f32 %v885, 0.2
      %v1291 = vmul.f32 %v887, 0.2
      %v1292 = vmul.f32 %v890, 0.2
      %v1293 = vmul.f32 %v892, 0.2
      %v1294 = vmul.f32 %v895, 0.2
      %v1295 = vmul.f32 %v897, 0.2
      %v1296 = vmul.f32 %v900, 0.2
      %v1297 = vmul.f32 %v902, 0.2
      %v1298 = vmul.f32 %v905, 0.2
      %v1299 = vmul.f32 %v907, 0.2
      %v1300 = vmul.f32 %v910, 0.2
      %v1301 = vmul.f32 %v912, 0.2
      %v1302 = vmul.f32 %v915, 0.2
      %v1303 = vmul.f32 %v917, 0.2
      %v1304 = vmul.f32 %v920, 0.2
      %v1305 = vmul.f32 %v922, 0.2
      %v1306 = vmul.f32 %v925, 0.2
      %v1307 = vmul.f32 %v927, 0.2
      %v1308 = vmul.f32 %v930, 0.2
      %v1309 = vmul.f32 %v932, 0.2
      %v1310 = vmul.f32 %v935, 0.2
      %v1311 = vmul.f32 %v937, 0.2
      %v1312 = vmul.f32 %v940, 0.2
      %v1313 = vmul.f32 %v942, 0.2
      %v1314 = vmul.f32 %v945, 0.2
      %v1315 = vmul.f32 %v947, 0.2
      %v1316 = vmul.f32 %v950, 0.2
      %v1317 = vmul.f32 %v952, 0.2
      %v1318 = vmul.f32 %v955, 0.2
      %v1319 = vmul.f32 %v957, 0.2
      %v1320 = vmul.f32 %v960, 0.2
      %v1321 = vmul.f32 %v962, 0.2
      %v1322 = vmul.f32 %v965, 0.2
      %v1323 = vmul.f32 %v967, 0.2
      %v1324 = vmul.f32 %v970, 0.2
      %v1325 = vmul.f32 %v972, 0.2
      %v1326 = vmul.f32 %v975, 0.2
      %v1327 = vmul.f32 %v977, 0.2
      %v1328 = vmul.f32 %v980, 0.2
      %v1329 = vmul.f32 %v982, 0.2
      %v1330 = vmul.f32 %v985, 0.2
      %v1331 = vmul.f32 %v987, 0.2
      %v1332 = vmul.f32 %v990, 0.2
      %v1333 = vmul.f32 %v992, 0.2
      %v1334 = vmul.f32 %v995, 0.2
      %v1335 = vmul.f32 %v997, 0.2
      %v1336 = vmul.f32 %v1000, 0.2
      %v1337 = vmul.f32 %v1002, 0.2
      %v1338 = vmul.f32 %v1005, 0.2
      %v1339 = vmul.f32 %v1007, 0.2
      %v1340 = vmul.f32 %v1010, 0.2
      %v1341 = vmul.f32 %v1012, 0.2
      %v1342 = vmul.f32 %v1015, 0.2
      %v1343 = vmul.f32 %v1017, 0.2
      %v1344 = vmul.f32 %v1020, 0.2
      %v1345 = vmul.f32 %v1022, 0.2
      %v1346 = vmul.f32 %v1025, 0.2
      %v1347 = vmul.f32 %v1027, 0.2
      %v1348 = vmul.f32 %v1030, 0.2
      %v1349 = vmul.f32 %v1032, 0.2
      %v1350 = vmul.f32 %v1035, 0.2
      %v1351 = vmul.f32 %v1037, 0.2
      %v1352 = vmul.f32 %v1040, 0.2
      %v1353 = vmul.f32 %v1042, 0.2
      %v1354 = vmul.f32 %v1045, 0.2
      %v1355 = vmul.f32 %v1047, 0.2
      %v1356 = vmul.f32 %v1050, 0.2
      %v1357 = vmul.f32 %v1052, 0.2
      %v1358 = vmul.f32 %v1055, 0.2
      %v1359 = vmul.f32 %v1057, 0.2
      %v1360 = vmul.f32 %v1060, 0.2
      %v1361 = vmul.f32 %v1062, 0.2
      %v1362 = vmul.f32 %v1065, 0.2
      %v1363 = vmul.f32 %v1067, 0.2
      %v1364 = vmul.f32 %v1070, 0.2
      %v1365 = vmul.f32 %v1072, 0.2
      %v1366 = vmul.f32 %v1075, 0.2
      %v1367 = vmul.f32 %v1077, 0.2
      %v1368 = vmul.f32 %v1080, 0.2
      %v1369 = vmul.f32 %v1082, 0.2
      %v1370 = vmul.f32 %v1085, 0.2
      %v1371 = vmul.f32 %v1087, 0.2
      %v1372 = vmul.f32 %v1090, 0.2
      %v1373 = vmul.f32 %v1092, 0.2
      %v1374 = vmul.f32 %v1095, 0.2
      %v1375 = vmul.f32 %v1097, 0.2
      %v1376 = vmul.f32 %v1100, 0.2
      %v1377 = vmul.f32 %v1102, 0.2
      %v1378 = vmul.f32 %v1105, 0.2
      %v1379 = vmul.f32 %v1107, 0.2
      %v1380 = vmul.f32 %v1110, 0.2
      %v1381 = vmul.f32 %v1112, 0.2
      %v1382 = vmul.f32 %v1115, 0.2
      %v1383 = vmul.f32 %v1117, 0.2
      %v1384 = vmul.f32 %v1120, 0.2
      %v1385 = vmul.f32 %v1122, 0.2
      %v1386 = vmul.f32 %v1125, 0.2
      %v1387 = vmul.f32 %v1127, 0.2
      %v1388 = vmul.f32 %v1130, 0.2
      %v1389 = vmul.f32 %v1132, 0.2
      %v1390 = vsel %vm1134, %v815, %v1262
      %v1391 = vsel %vm1135, %v817, %v1263
      %v1392 = vsel %vm1136, %v820, %v1264
      %v1393 = vsel %vm1137, %v822, %v1265
      %v1394 = vsel %vm1138, %v825, %v1266
      %v1395 = vsel %vm1139, %v827, %v1267
      %v1396 = vsel %vm1140, %v830, %v1268
      %v1397 = vsel %vm1141, %v832, %v1269
      %v1398 = vsel %vm1142, %v835, %v1270
      %v1399 = vsel %vm1143, %v837, %v1271
      %v1400 = vsel %vm1144, %v840, %v1272
      %v1401 = vsel %vm1145, %v842, %v1273
      %v1402 = vsel %vm1146, %v845, %v1274
      %v1403 = vsel %vm1147, %v847, %v1275
      %v1404 = vsel %vm1148, %v850, %v1276
      %v1405 = vsel %vm1149, %v852, %v1277
      %v1406 = vsel %vm1150, %v855, %v1278
      %v1407 = vsel %vm1151, %v857, %v1279
      %v1408 = vsel %vm1152, %v860, %v1280
      %v1409 = vsel %vm1153, %v862, %v1281
      %v1410 = vsel %vm1154, %v865, %v1282
      %v1411 = vsel %vm1155, %v867, %v1283
      %v1412 = vsel %vm1156, %v870, %v1284
      %v1413 = vsel %vm1157, %v872, %v1285
      %v1414 = vsel %vm1158, %v875, %v1286
      %v1415 = vsel %vm1159, %v877, %v1287
      %v1416 = vsel %vm1160, %v880, %v1288
      %v1417 = vsel %vm1161, %v882, %v1289
      %v1418 = vsel %vm1162, %v885, %v1290
      %v1419 = vsel %vm1163, %v887, %v1291
      %v1420 = vsel %vm1164, %v890, %v1292
      %v1421 = vsel %vm1165, %v892, %v1293
      %v1422 = vsel %vm1166, %v895, %v1294
      %v1423 = vsel %vm1167, %v897, %v1295
      %v1424 = vsel %vm1168, %v900, %v1296
      %v1425 = vsel %vm1169, %v902, %v1297
      %v1426 = vsel %vm1170, %v905, %v1298
      %v1427 = vsel %vm1171, %v907, %v1299
      %v1428 = vsel %vm1172, %v910, %v1300
      %v1429 = vsel %vm1173, %v912, %v1301
      %v1430 = vsel %vm1174, %v915, %v1302
      %v1431 = vsel %vm1175, %v917, %v1303
      %v1432 = vsel %vm1176, %v920, %v1304
      %v1433 = vsel %vm1177, %v922, %v1305
      %v1434 = vsel %vm1178, %v925, %v1306
      %v1435 = vsel %vm1179, %v927, %v1307
      %v1436 = vsel %vm1180, %v930, %v1308
      %v1437 = vsel %vm1181, %v932, %v1309
      %v1438 = vsel %vm1182, %v935, %v1310
      %v1439 = vsel %vm1183, %v937, %v1311
      %v1440 = vsel %vm1184, %v940, %v1312
      %v1441 = vsel %vm1185, %v942, %v1313
      %v1442 = vsel %vm1186, %v945, %v1314
      %v1443 = vsel %vm1187, %v947, %v1315
      %v1444 = vsel %vm1188, %v950, %v1316
      %v1445 = vsel %vm1189, %v952, %v1317
      %v1446 = vsel %vm1190, %v955, %v1318
      %v1447 = vsel %vm1191, %v957, %v1319
      %v1448 = vsel %vm1192, %v960, %v1320
      %v1449 = vsel %vm1193, %v962, %v1321
      %v1450 = vsel %vm1194, %v965, %v1322
      %v1451 = vsel %vm1195, %v967, %v1323
      %v1452 = vsel %vm1196, %v970, %v1324
      %v1453 = vsel %vm1197, %v972, %v1325
      %v1454 = vsel %vm1198, %v975, %v1326
      %v1455 = vsel %vm1199, %v977, %v1327
      %v1456 = vsel %vm1200, %v980, %v1328
      %v1457 = vsel %vm1201, %v982, %v1329
      %v1458 = vsel %vm1202, %v985, %v1330
      %v1459 = vsel %vm1203, %v987, %v1331
      %v1460 = vsel %vm1204, %v990, %v1332
      %v1461 = vsel %vm1205, %v992, %v1333
      %v1462 = vsel %vm1206, %v995, %v1334
      %v1463 = vsel %vm1207, %v997, %v1335
      %v1464 = vsel %vm1208, %v1000, %v1336
      %v1465 = vsel %vm1209, %v1002, %v1337
      %v1466 = vsel %vm1210, %v1005, %v1338
      %v1467 = vsel %vm1211, %v1007, %v1339
      %v1468 = vsel %vm1212, %v1010, %v1340
      %v1469 = vsel %vm1213, %v1012, %v1341
      %v1470 = vsel %vm1214, %v1015, %v1342
      %v1471 = vsel %vm1215, %v1017, %v1343
      %v1472 = vsel %vm1216, %v1020, %v1344
      %v1473 = vsel %vm1217, %v1022, %v1345
      %v1474 = vsel %vm1218, %v1025, %v1346
      %v1475 = vsel %vm1219, %v1027, %v1347
      %v1476 = vsel %vm1220, %v1030, %v1348
      %v1477 = vsel %vm1221, %v1032, %v1349
      %v1478 = vsel %vm1222, %v1035, %v1350
      %v1479 = vsel %vm1223, %v1037, %v1351
      %v1480 = vsel %vm1224, %v1040, %v1352
      %v1481 = vsel %vm1225, %v1042, %v1353
      %v1482 = vsel %vm1226, %v1045, %v1354
      %v1483 = vsel %vm1227, %v1047, %v1355
      %v1484 = vsel %vm1228, %v1050, %v1356
      %v1485 = vsel %vm1229, %v1052, %v1357
      %v1486 = vsel %vm1230, %v1055, %v1358
      %v1487 = vsel %vm1231, %v1057, %v1359
      %v1488 = vsel %vm1232, %v1060, %v1360
      %v1489 = vsel %vm1233, %v1062, %v1361
      %v1490 = vsel %vm1234, %v1065, %v1362
      %v1491 = vsel %vm1235, %v1067, %v1363
      %v1492 = vsel %vm1236, %v1070, %v1364
      %v1493 = vsel %vm1237, %v1072, %v1365
      %v1494 = vsel %vm1238, %v1075, %v1366
      %v1495 = vsel %vm1239, %v1077, %v1367
      %v1496 = vsel %vm1240, %v1080, %v1368
      %v1497 = vsel %vm1241, %v1082, %v1369
      %v1498 = vsel %vm1242, %v1085, %v1370
      %v1499 = vsel %vm1243, %v1087, %v1371
      %v1500 = vsel %vm1244, %v1090, %v1372
      %v1501 = vsel %vm1245, %v1092, %v1373
      %v1502 = vsel %vm1246, %v1095, %v1374
      %v1503 = vsel %vm1247, %v1097, %v1375
      %v1504 = vsel %vm1248, %v1100, %v1376
      %v1505 = vsel %vm1249, %v1102, %v1377
      %v1506 = vsel %vm1250, %v1105, %v1378
      %v1507 = vsel %vm1251, %v1107, %v1379
      %v1508 = vsel %vm1252, %v1110, %v1380
      %v1509 = vsel %vm1253, %v1112, %v1381
      %v1510 = vsel %vm1254, %v1115, %v1382
      %v1511 = vsel %vm1255, %v1117, %v1383
      %v1512 = vsel %vm1256, %v1120, %v1384
      %v1513 = vsel %vm1257, %v1122, %v1385
      %v1514 = vsel %vm1258, %v1125, %v1386
      %v1515 = vsel %vm1259, %v1127, %v1387
      %v1516 = vsel %vm1260, %v1130, %v1388
      %v1517 = vsel %vm1261, %v1132, %v1389
      %v1518 = vpack.c.bf16 %v1390, %v1390
      %v1519 = vpack.c.bf16 %v1391, %v1391
      %v1520 = vpack.c.bf16 %v1392, %v1392
      %v1521 = vpack.c.bf16 %v1393, %v1393
      %v1522 = vpack.c.bf16 %v1394, %v1394
      %v1523 = vpack.c.bf16 %v1395, %v1395
      %v1524 = vpack.c.bf16 %v1396, %v1396
      %v1525 = vpack.c.bf16 %v1397, %v1397
      %v1526 = vpack.c.bf16 %v1398, %v1398
      %v1527 = vpack.c.bf16 %v1399, %v1399
      %v1528 = vpack.c.bf16 %v1400, %v1400
      %v1529 = vpack.c.bf16 %v1401, %v1401
      %v1530 = vpack.c.bf16 %v1402, %v1402
      %v1531 = vpack.c.bf16 %v1403, %v1403
      %v1532 = vpack.c.bf16 %v1404, %v1404
      %v1533 = vpack.c.bf16 %v1405, %v1405
      %v1534 = vpack.c.bf16 %v1406, %v1406
      %v1535 = vpack.c.bf16 %v1407, %v1407
      %v1536 = vpack.c.bf16 %v1408, %v1408
      %v1537 = vpack.c.bf16 %v1409, %v1409
      %v1538 = vpack.c.bf16 %v1410, %v1410
      %v1539 = vpack.c.bf16 %v1411, %v1411
      %v1540 = vpack.c.bf16 %v1412, %v1412
      %v1541 = vpack.c.bf16 %v1413, %v1413
      %v1542 = vpack.c.bf16 %v1414, %v1414
      %v1543 = vpack.c.bf16 %v1415, %v1415
      %v1544 = vpack.c.bf16 %v1416, %v1416
      %v1545 = vpack.c.bf16 %v1417, %v1417
      %v1546 = vpack.c.bf16 %v1418, %v1418
      %v1547 = vpack.c.bf16 %v1419, %v1419
      %v1548 = vpack.c.bf16 %v1420, %v1420
      %v1549 = vpack.c.bf16 %v1421, %v1421
      %v1550 = vpack.c.bf16 %v1422, %v1422
      %v1551 = vpack.c.bf16 %v1423, %v1423
      %v1552 = vpack.c.bf16 %v1424, %v1424
      %v1553 = vpack.c.bf16 %v1425, %v1425
      %v1554 = vpack.c.bf16 %v1426, %v1426
      %v1555 = vpack.c.bf16 %v1427, %v1427
      %v1556 = vpack.c.bf16 %v1428, %v1428
      %v1557 = vpack.c.bf16 %v1429, %v1429
      %v1558 = vpack.c.bf16 %v1430, %v1430
      %v1559 = vpack.c.bf16 %v1431, %v1431
      %v1560 = vpack.c.bf16 %v1432, %v1432
      %v1561 = vpack.c.bf16 %v1433, %v1433
      %v1562 = vpack.c.bf16 %v1434, %v1434
      %v1563 = vpack.c.bf16 %v1435, %v1435
      %v1564 = vpack.c.bf16 %v1436, %v1436
      %v1565 = vpack.c.bf16 %v1437, %v1437
      %v1566 = vpack.c.bf16 %v1438, %v1438
      %v1567 = vpack.c.bf16 %v1439, %v1439
      %v1568 = vpack.c.bf16 %v1440, %v1440
      %v1569 = vpack.c.bf16 %v1441, %v1441
      %v1570 = vpack.c.bf16 %v1442, %v1442
      %v1571 = vpack.c.bf16 %v1443, %v1443
      %v1572 = vpack.c.bf16 %v1444, %v1444
      %v1573 = vpack.c.bf16 %v1445, %v1445
      %v1574 = vpack.c.bf16 %v1446, %v1446
      %v1575 = vpack.c.bf16 %v1447, %v1447
      %v1576 = vpack.c.bf16 %v1448, %v1448
      %v1577 = vpack.c.bf16 %v1449, %v1449
      %v1578 = vpack.c.bf16 %v1450, %v1450
      %v1579 = vpack.c.bf16 %v1451, %v1451
      %v1580 = vpack.c.bf16 %v1452, %v1452
      %v1581 = vpack.c.bf16 %v1453, %v1453
      %v1582 = vpack.c.bf16 %v1454, %v1454
      %v1583 = vpack.c.bf16 %v1455, %v1455
      %v1584 = vpack.c.bf16 %v1456, %v1456
      %v1585 = vpack.c.bf16 %v1457, %v1457
      %v1586 = vpack.c.bf16 %v1458, %v1458
      %v1587 = vpack.c.bf16 %v1459, %v1459
      %v1588 = vpack.c.bf16 %v1460, %v1460
      %v1589 = vpack.c.bf16 %v1461, %v1461
      %v1590 = vpack.c.bf16 %v1462, %v1462
      %v1591 = vpack.c.bf16 %v1463, %v1463
      %v1592 = vpack.c.bf16 %v1464, %v1464
      %v1593 = vpack.c.bf16 %v1465, %v1465
      %v1594 = vpack.c.bf16 %v1466, %v1466
      %v1595 = vpack.c.bf16 %v1467, %v1467
      %v1596 = vpack.c.bf16 %v1468, %v1468
      %v1597 = vpack.c.bf16 %v1469, %v1469
      %v1598 = vpack.c.bf16 %v1470, %v1470
      %v1599 = vpack.c.bf16 %v1471, %v1471
      %v1600 = vpack.c.bf16 %v1472, %v1472
      %v1601 = vpack.c.bf16 %v1473, %v1473
      %v1602 = vpack.c.bf16 %v1474, %v1474
      %v1603 = vpack.c.bf16 %v1475, %v1475
      %v1604 = vpack.c.bf16 %v1476, %v1476
      %v1605 = vpack.c.bf16 %v1477, %v1477
      %v1606 = vpack.c.bf16 %v1478, %v1478
      %v1607 = vpack.c.bf16 %v1479, %v1479
      %v1608 = vpack.c.bf16 %v1480, %v1480
      %v1609 = vpack.c.bf16 %v1481, %v1481
      %v1610 = vpack.c.bf16 %v1482, %v1482
      %v1611 = vpack.c.bf16 %v1483, %v1483
      %v1612 = vpack.c.bf16 %v1484, %v1484
      %v1613 = vpack.c.bf16 %v1485, %v1485
      %v1614 = vpack.c.bf16 %v1486, %v1486
      %v1615 = vpack.c.bf16 %v1487, %v1487
      %v1616 = vpack.c.bf16 %v1488, %v1488
      %v1617 = vpack.c.bf16 %v1489, %v1489
      %v1618 = vpack.c.bf16 %v1490, %v1490
      %v1619 = vpack.c.bf16 %v1491, %v1491
      %v1620 = vpack.c.bf16 %v1492, %v1492
      %v1621 = vpack.c.bf16 %v1493, %v1493
      %v1622 = vpack.c.bf16 %v1494, %v1494
      %v1623 = vpack.c.bf16 %v1495, %v1495
      %v1624 = vpack.c.bf16 %v1496, %v1496
      %v1625 = vpack.c.bf16 %v1497, %v1497
      %v1626 = vpack.c.bf16 %v1498, %v1498
      %v1627 = vpack.c.bf16 %v1499, %v1499
      %v1628 = vpack.c.bf16 %v1500, %v1500
      %v1629 = vpack.c.bf16 %v1501, %v1501
      %v1630 = vpack.c.bf16 %v1502, %v1502
      %v1631 = vpack.c.bf16 %v1503, %v1503
      %v1632 = vpack.c.bf16 %v1504, %v1504
      %v1633 = vpack.c.bf16 %v1505, %v1505
      %v1634 = vpack.c.bf16 %v1506, %v1506
      %v1635 = vpack.c.bf16 %v1507, %v1507
      %v1636 = vpack.c.bf16 %v1508, %v1508
      %v1637 = vpack.c.bf16 %v1509, %v1509
      %v1638 = vpack.c.bf16 %v1510, %v1510
      %v1639 = vpack.c.bf16 %v1511, %v1511
      %v1640 = vpack.c.bf16 %v1512, %v1512
      %v1641 = vpack.c.bf16 %v1513, %v1513
      %v1642 = vpack.c.bf16 %v1514, %v1514
      %v1643 = vpack.c.bf16 %v1515, %v1515
      %v1644 = vpack.c.bf16 %v1516, %v1516
      %v1645 = vpack.c.bf16 %v1517, %v1517
      %1646 = vst [vmem:[%s223] sm:$0xf] %v1518
      %1647 = vst [vmem:[%s223 + $0x4] sm:$0xf] %v1519
      %1648 = vst [vmem:[%s223 + $0x8] sm:$0xf] %v1520
      %1649 = vst [vmem:[%s223 + $0xc] sm:$0xf] %v1521
      %1650 = vst [vmem:[%s223 + $0x10] sm:$0xf] %v1522
      %1651 = vst [vmem:[%s223 + $0x14] sm:$0xf] %v1523
      %1652 = vst [vmem:[%s223 + $0x18] sm:$0xf] %v1524
      %1653 = vst [vmem:[%s223 + $0x1c] sm:$0xf] %v1525
      %1654 = vst [vmem:[%s223 + $0x20] sm:$0xf] %v1526
      %1655 = vst [vmem:[%s223 + $0x24] sm:$0xf] %v1527
      %1656 = vst [vmem:[%s223 + $0x28] sm:$0xf] %v1528
      %1657 = vst [vmem:[%s223 + $0x2c] sm:$0xf] %v1529
      %1658 = vst [vmem:[%s223 + $0x30] sm:$0xf] %v1530
      %1659 = vst [vmem:[%s223 + $0x34] sm:$0xf] %v1531
      %1660 = vst [vmem:[%s223 + $0x38] sm:$0xf] %v1532
      %1661 = vst [vmem:[%s223 + $0x3c] sm:$0xf] %v1533
      %1662 = vst [vmem:[%s223 + $0x40] sm:$0xf] %v1534
      %1663 = vst [vmem:[%s223 + $0x44] sm:$0xf] %v1535
      %1664 = vst [vmem:[%s223 + $0x48] sm:$0xf] %v1536
      %1665 = vst [vmem:[%s223 + $0x4c] sm:$0xf] %v1537
      %1666 = vst [vmem:[%s223 + $0x50] sm:$0xf] %v1538
      %1667 = vst [vmem:[%s223 + $0x54] sm:$0xf] %v1539
      %1668 = vst [vmem:[%s223 + $0x58] sm:$0xf] %v1540
      %1669 = vst [vmem:[%s223 + $0x5c] sm:$0xf] %v1541
      %1670 = vst [vmem:[%s223 + $0x60] sm:$0xf] %v1542
      %1671 = vst [vmem:[%s223 + $0x64] sm:$0xf] %v1543
      %1672 = vst [vmem:[%s223 + $0x68] sm:$0xf] %v1544
      %1673 = vst [vmem:[%s223 + $0x6c] sm:$0xf] %v1545
      %1674 = vst [vmem:[%s223 + $0x70] sm:$0xf] %v1546
      %1675 = vst [vmem:[%s223 + $0x74] sm:$0xf] %v1547
      %1676 = vst [vmem:[%s223 + $0x78] sm:$0xf] %v1548
      %1677 = vst [vmem:[%s223 + $0x7c] sm:$0xf] %v1549
      %1678 = vst [vmem:[%s223 + $0x80] sm:$0xf] %v1550
      %1679 = vst [vmem:[%s223 + $0x84] sm:$0xf] %v1551
      %1680 = vst [vmem:[%s223 + $0x88] sm:$0xf] %v1552
      %1681 = vst [vmem:[%s223 + $0x8c] sm:$0xf] %v1553
      %1682 = vst [vmem:[%s223 + $0x90] sm:$0xf] %v1554
      %1683 = vst [vmem:[%s223 + $0x94] sm:$0xf] %v1555
      %1684 = vst [vmem:[%s223 + $0x98] sm:$0xf] %v1556
      %1685 = vst [vmem:[%s223 + $0x9c] sm:$0xf] %v1557
      %1686 = vst [vmem:[%s223 + $0xa0] sm:$0xf] %v1558
      %1687 = vst [vmem:[%s223 + $0xa4] sm:$0xf] %v1559
      %1688 = vst [vmem:[%s223 + $0xa8] sm:$0xf] %v1560
      %1689 = vst [vmem:[%s223 + $0xac] sm:$0xf] %v1561
      %1690 = vst [vmem:[%s223 + $0xb0] sm:$0xf] %v1562
      %1691 = vst [vmem:[%s223 + $0xb4] sm:$0xf] %v1563
      %1692 = vst [vmem:[%s223 + $0xb8] sm:$0xf] %v1564
      %1693 = vst [vmem:[%s223 + $0xbc] sm:$0xf] %v1565
      %1694 = vst [vmem:[%s223 + $0xc0] sm:$0xf] %v1566
      %1695 = vst [vmem:[%s223 + $0xc4] sm:$0xf] %v1567
      %1696 = vst [vmem:[%s223 + $0xc8] sm:$0xf] %v1568
      %1697 = vst [vmem:[%s223 + $0xcc] sm:$0xf] %v1569
      %1698 = vst [vmem:[%s223 + $0xd0] sm:$0xf] %v1570
      %1699 = vst [vmem:[%s223 + $0xd4] sm:$0xf] %v1571
      %1700 = vst [vmem:[%s223 + $0xd8] sm:$0xf] %v1572
      %1701 = vst [vmem:[%s223 + $0xdc] sm:$0xf] %v1573
      %1702 = vst [vmem:[%s223 + $0xe0] sm:$0xf] %v1574
      %1703 = vst [vmem:[%s223 + $0xe4] sm:$0xf] %v1575
      %1704 = vst [vmem:[%s223 + $0xe8] sm:$0xf] %v1576
      %1705 = vst [vmem:[%s223 + $0xec] sm:$0xf] %v1577
      %1706 = vst [vmem:[%s223 + $0xf0] sm:$0xf] %v1578
      %1707 = vst [vmem:[%s223 + $0xf4] sm:$0xf] %v1579
      %1708 = vst [vmem:[%s223 + $0xf8] sm:$0xf] %v1580
      %1709 = vst [vmem:[%s223 + $0xfc] sm:$0xf] %v1581
      %1710 = vst [vmem:[%s223 + $0x100] sm:$0xf] %v1582
      %1711 = vst [vmem:[%s223 + $0x104] sm:$0xf] %v1583
      %1712 = vst [vmem:[%s223 + $0x108] sm:$0xf] %v1584
      %1713 = vst [vmem:[%s223 + $0x10c] sm:$0xf] %v1585
      %1714 = vst [vmem:[%s223 + $0x110] sm:$0xf] %v1586
      %1715 = vst [vmem:[%s223 + $0x114] sm:$0xf] %v1587
      %1716 = vst [vmem:[%s223 + $0x118] sm:$0xf] %v1588
      %1717 = vst [vmem:[%s223 + $0x11c] sm:$0xf] %v1589
      %1718 = vst [vmem:[%s223 + $0x120] sm:$0xf] %v1590
      %1719 = vst [vmem:[%s223 + $0x124] sm:$0xf] %v1591
      %1720 = vst [vmem:[%s223 + $0x128] sm:$0xf] %v1592
      %1721 = vst [vmem:[%s223 + $0x12c] sm:$0xf] %v1593
      %1722 = vst [vmem:[%s223 + $0x130] sm:$0xf] %v1594
      %1723 = vst [vmem:[%s223 + $0x134] sm:$0xf] %v1595
      %1724 = vst [vmem:[%s223 + $0x138] sm:$0xf] %v1596
      %1725 = vst [vmem:[%s223 + $0x13c] sm:$0xf] %v1597
      %1726 = vst [vmem:[%s223 + $0x140] sm:$0xf] %v1598
      %1727 = vst [vmem:[%s223 + $0x144] sm:$0xf] %v1599
      %1728 = vst [vmem:[%s223 + $0x148] sm:$0xf] %v1600
      %1729 = vst [vmem:[%s223 + $0x14c] sm:$0xf] %v1601
      %1730 = vst [vmem:[%s223 + $0x150] sm:$0xf] %v1602
      %1731 = vst [vmem:[%s223 + $0x154] sm:$0xf] %v1603
      %1732 = vst [vmem:[%s223 + $0x158] sm:$0xf] %v1604
      %1733 = vst [vmem:[%s223 + $0x15c] sm:$0xf] %v1605
      %1734 = vst [vmem:[%s223 + $0x160] sm:$0xf] %v1606
      %1735 = vst [vmem:[%s223 + $0x164] sm:$0xf] %v1607
      %1736 = vst [vmem:[%s223 + $0x168] sm:$0xf] %v1608
      %1737 = vst [vmem:[%s223 + $0x16c] sm:$0xf] %v1609
      %1738 = vst [vmem:[%s223 + $0x170] sm:$0xf] %v1610
      %1739 = vst [vmem:[%s223 + $0x174] sm:$0xf] %v1611
      %1740 = vst [vmem:[%s223 + $0x178] sm:$0xf] %v1612
      %1741 = vst [vmem:[%s223 + $0x17c] sm:$0xf] %v1613
      %1742 = vst [vmem:[%s223 + $0x180] sm:$0xf] %v1614
      %1743 = vst [vmem:[%s223 + $0x184] sm:$0xf] %v1615
      %1744 = vst [vmem:[%s223 + $0x188] sm:$0xf] %v1616
      %1745 = vst [vmem:[%s223 + $0x18c] sm:$0xf] %v1617
      %1746 = vst [vmem:[%s223 + $0x190] sm:$0xf] %v1618
      %1747 = vst [vmem:[%s223 + $0x194] sm:$0xf] %v1619
      %1748 = vst [vmem:[%s223 + $0x198] sm:$0xf] %v1620
      %1749 = vst [vmem:[%s223 + $0x19c] sm:$0xf] %v1621
      %1750 = vst [vmem:[%s223 + $0x1a0] sm:$0xf] %v1622
      %1751 = vst [vmem:[%s223 + $0x1a4] sm:$0xf] %v1623
      %1752 = vst [vmem:[%s223 + $0x1a8] sm:$0xf] %v1624
      %1753 = vst [vmem:[%s223 + $0x1ac] sm:$0xf] %v1625
      %1754 = vst [vmem:[%s223 + $0x1b0] sm:$0xf] %v1626
      %1755 = vst [vmem:[%s223 + $0x1b4] sm:$0xf] %v1627
      %1756 = vst [vmem:[%s223 + $0x1b8] sm:$0xf] %v1628
      %1757 = vst [vmem:[%s223 + $0x1bc] sm:$0xf] %v1629
      %1758 = vst [vmem:[%s223 + $0x1c0] sm:$0xf] %v1630
      %1759 = vst [vmem:[%s223 + $0x1c4] sm:$0xf] %v1631
      %1760 = vst [vmem:[%s223 + $0x1c8] sm:$0xf] %v1632
      %1761 = vst [vmem:[%s223 + $0x1cc] sm:$0xf] %v1633
      %1762 = vst [vmem:[%s223 + $0x1d0] sm:$0xf] %v1634
      %1763 = vst [vmem:[%s223 + $0x1d4] sm:$0xf] %v1635
      %1764 = vst [vmem:[%s223 + $0x1d8] sm:$0xf] %v1636
      %1765 = vst [vmem:[%s223 + $0x1dc] sm:$0xf] %v1637
      %1766 = vst [vmem:[%s223 + $0x1e0] sm:$0xf] %v1638
      %1767 = vst [vmem:[%s223 + $0x1e4] sm:$0xf] %v1639
      %1768 = vst [vmem:[%s223 + $0x1e8] sm:$0xf] %v1640
      %1769 = vst [vmem:[%s223 + $0x1ec] sm:$0xf] %v1641
      %1770 = vst [vmem:[%s223 + $0x1f0] sm:$0xf] %v1642
      %1771 = vst [vmem:[%s223 + $0x1f4] sm:$0xf] %v1643
      %1772 = vst [vmem:[%s223 + $0x1f8] sm:$0xf] %v1644
      %1773 = vst [vmem:[%s223 + $0x1fc] sm:$0xf] %v1645
      %s1774 = smul.u32 128, %s19
      %p1775 = scmp.lt.s32.totalorder %s1774, 255
      %s1776 = scalar_select %p1775, %s1774, 255
      %p1777 = scmp.lt.s32.totalorder %s18, 0
      %s1778 = scalar_select %p1777, %s18, 0
      %s1779 = sadd.s32 %s1778, %s1776
      %s1780 = smul.addr %s1779, 4
      %s1781 = scalar_lea.vmem %s3, %s1780
      // Predicated region
      $region33: #{discriminator_forward.4} parent=31 // pred_check
        %p1782 = pneg %p124
      $region34: #{discriminator_forward.4} parent=31 // pred_check_branch
        %1784 = sbr.rel (%p1782) target = $region36
      $region35: #{discriminator_forward.4} parent=31 // pred_region
        %s1785 = smul.u32 128, %s19
      $region36: #{discriminator_forward.4} parent=31 // pred_fallthru
        _
    $region32: #{discriminator_forward.4} parent=5 // pred_fallthru
      _
    %p1786 = scmp.le.s32.totalorder 2, %s9
    // Predicated region
    $region37: #{discriminator_forward.4} parent=5 // pred_check
      %p1787 = pneg %p1786
    $region38: #{discriminator_forward.4} parent=5 // pred_check_branch
      %1789 = sbr.rel (%p1787) target = $region40
    $region39: #{discriminator_forward.4} parent=5 // pred_region
      %s1790 = ssub.s32 %s9, 2
      // Predicated region
      $region41: #{discriminator_forward.4} parent=39 // pred_check
        %p1791 = pneg %p130
      $region42: #{discriminator_forward.4} parent=39 // pred_check_branch
        %1793 = sbr.rel (%p1791) target = $region44
      $region43: #{discriminator_forward.4} parent=39 // pred_region
        %s1794 = smul.u32 128, %s21
        %p1795 = scmp.lt.s32.totalorder %s1794, 255
        %s1796 = scalar_select %p1795, %s1794, 255
        %p1797 = scmp.lt.s32.totalorder %s20, 0
        %s1798 = scalar_select %p1797, %s20, 0
        %s1799 = sadd.s32 %s1798, %s1796
        %s1800 = smul.addr %s1799, 4
        %s1801 = scalar_lea.vmem %s3, %s1800
      $region44: #{discriminator_forward.4} parent=39 // pred_fallthru
        _
    $region40: #{discriminator_forward.4} parent=5 // pred_fallthru
      _
  $region6: #{discriminator_forward.4} parent=0 // loop_footer
    %s13 = sadd.s32 1, %s9
  $region7: #{discriminator_forward.4} parent=0 // loop_footer_branch
    %8 = sbr.rel target = $region3
  $region8: #{discriminator_forward.4} parent=0 // loop_exit
    _

// kernel: discriminator_forward.5
$region0: #{discriminator_forward.5}
  #allocation0 [shape = 'u32[]', space=smem, size = 0x4, offset = 0x4, fixed_abs, tag = 'smem constant byte address 0x4 - core index']
  #allocation1 [shape = 'u32[72,128]{1,0:T(1,128)}', space=vmem, size = 0x9000, scoped, tag = 'internal scratch']
  %s0 = inlined_call_operand.vmem [shape: bf16[512,128], index: 0, kind: input, shape index: {}]
  %s1 = inlined_call_operand.vmem [shape: bf16[128,128], index: 1, kind: input, shape index: {}]
  %s2 = inlined_call_operand.vmem [shape: f32[1,128], index: 2, kind: input, shape index: {}]
  %s3 = inlined_call_operand.vmem [shape: bf16[512,128], index: 3, kind: output, shape index: {0}]
  %s4 = inlined_call_operand.vmem [shape: f32[8,128], index: 4, kind: output, shape index: {1}]
  %s5 = inlined_call_operand.vmem [shape: f32[8,128], index: 5, kind: output, shape index: {2}]
  %6 = xla_tuple %s3, %s4, %s5
  %s7 = sld [smem:[#allocation0]]
  $region38: #{discriminator_forward.5} parent=0
    _
  %s9 = ssub.s32 1, %s7
  %s10 = scalar_select 0, %s9, %s7
  // Predicated region
  $region2: #{discriminator_forward.5} parent=0 // pred_check
    _
  $region3: #{discriminator_forward.5} parent=0 // pred_check_branch
    %12 = sbr.rel (0) target = $region5
  $region4: #{discriminator_forward.5} parent=0 // pred_region
    _
  $region5: #{discriminator_forward.5} parent=0 // pred_fallthru
    _
  // Predicated region
  $region6: #{discriminator_forward.5} parent=0 // pred_check
    _
  $region7: #{discriminator_forward.5} parent=0 // pred_check_branch
    %14 = sbr.rel (0) target = $region9
  $region8: #{discriminator_forward.5} parent=0 // pred_region
    _
  $region9: #{discriminator_forward.5} parent=0 // pred_fallthru
    _
  // Predicated region
  $region10: #{discriminator_forward.5} parent=0 // pred_check
    _
  $region11: #{discriminator_forward.5} parent=0 // pred_check_branch
    %16 = sbr.rel (0) target = $region13
  $region12: #{discriminator_forward.5} parent=0 // pred_region
    _
  $region13: #{discriminator_forward.5} parent=0 // pred_fallthru
    _
  %v17 = vld [vmem:[%s0] sm:$0xf]
  %v18 = vld [vmem:[%s0 + $0x4] sm:$0xf]
  %v19 = vld [vmem:[%s0 + $0x8] sm:$0xf]
  %v20 = vld [vmem:[%s0 + $0xc] sm:$0xf]
  %v21 = vld [vmem:[%s0 + $0x10] sm:$0xf]
  %v22 = vld [vmem:[%s0 + $0x14] sm:$0xf]
  %v23 = vld [vmem:[%s0 + $0x18] sm:$0xf]
  %v24 = vld [vmem:[%s0 + $0x1c] sm:$0xf]
  %v25 = vld [vmem:[%s0 + $0x20] sm:$0xf]
  %v26 = vld [vmem:[%s0 + $0x24] sm:$0xf]
  %v27 = vld [vmem:[%s0 + $0x28] sm:$0xf]
  %v28 = vld [vmem:[%s0 + $0x2c] sm:$0xf]
  %v29 = vld [vmem:[%s0 + $0x30] sm:$0xf]
  %v30 = vld [vmem:[%s0 + $0x34] sm:$0xf]
  %v31 = vld [vmem:[%s0 + $0x38] sm:$0xf]
  %v32 = vld [vmem:[%s0 + $0x3c] sm:$0xf]
  %v33 = vld [vmem:[%s0 + $0x40] sm:$0xf]
  %v34 = vld [vmem:[%s0 + $0x44] sm:$0xf]
  %v35 = vld [vmem:[%s0 + $0x48] sm:$0xf]
  %v36 = vld [vmem:[%s0 + $0x4c] sm:$0xf]
  %v37 = vld [vmem:[%s0 + $0x50] sm:$0xf]
  %v38 = vld [vmem:[%s0 + $0x54] sm:$0xf]
  %v39 = vld [vmem:[%s0 + $0x58] sm:$0xf]
  %v40 = vld [vmem:[%s0 + $0x5c] sm:$0xf]
  %v41 = vld [vmem:[%s0 + $0x60] sm:$0xf]
  %v42 = vld [vmem:[%s0 + $0x64] sm:$0xf]
  %v43 = vld [vmem:[%s0 + $0x68] sm:$0xf]
  %v44 = vld [vmem:[%s0 + $0x6c] sm:$0xf]
  %v45 = vld [vmem:[%s0 + $0x70] sm:$0xf]
  %v46 = vld [vmem:[%s0 + $0x74] sm:$0xf]
  %v47 = vld [vmem:[%s0 + $0x78] sm:$0xf]
  %v48 = vld [vmem:[%s0 + $0x7c] sm:$0xf]
  %v49 = vld [vmem:[%s0 + $0x80] sm:$0xf]
  %v50 = vld [vmem:[%s0 + $0x84] sm:$0xf]
  %v51 = vld [vmem:[%s0 + $0x88] sm:$0xf]
  %v52 = vld [vmem:[%s0 + $0x8c] sm:$0xf]
  %v53 = vld [vmem:[%s0 + $0x90] sm:$0xf]
  %v54 = vld [vmem:[%s0 + $0x94] sm:$0xf]
  %v55 = vld [vmem:[%s0 + $0x98] sm:$0xf]
  %v56 = vld [vmem:[%s0 + $0x9c] sm:$0xf]
  %v57 = vld [vmem:[%s0 + $0xa0] sm:$0xf]
  %v58 = vld [vmem:[%s0 + $0xa4] sm:$0xf]
  %v59 = vld [vmem:[%s0 + $0xa8] sm:$0xf]
  %v60 = vld [vmem:[%s0 + $0xac] sm:$0xf]
  %v61 = vld [vmem:[%s0 + $0xb0] sm:$0xf]
  %v62 = vld [vmem:[%s0 + $0xb4] sm:$0xf]
  %v63 = vld [vmem:[%s0 + $0xb8] sm:$0xf]
  %v64 = vld [vmem:[%s0 + $0xbc] sm:$0xf]
  %v65 = vld [vmem:[%s0 + $0xc0] sm:$0xf]
  %v66 = vld [vmem:[%s0 + $0xc4] sm:$0xf]
  %v67 = vld [vmem:[%s0 + $0xc8] sm:$0xf]
  %v68 = vld [vmem:[%s0 + $0xcc] sm:$0xf]
  %v69 = vld [vmem:[%s0 + $0xd0] sm:$0xf]
  %v70 = vld [vmem:[%s0 + $0xd4] sm:$0xf]
  %v71 = vld [vmem:[%s0 + $0xd8] sm:$0xf]
  %v72 = vld [vmem:[%s0 + $0xdc] sm:$0xf]
  %v73 = vld [vmem:[%s0 + $0xe0] sm:$0xf]
  %v74 = vld [vmem:[%s0 + $0xe4] sm:$0xf]
  %v75 = vld [vmem:[%s0 + $0xe8] sm:$0xf]
  %v76 = vld [vmem:[%s0 + $0xec] sm:$0xf]
  %v77 = vld [vmem:[%s0 + $0xf0] sm:$0xf]
  %v78 = vld [vmem:[%s0 + $0xf4] sm:$0xf]
  %v79 = vld [vmem:[%s0 + $0xf8] sm:$0xf]
  %v80 = vld [vmem:[%s0 + $0xfc] sm:$0xf]
  %v81 = vld [vmem:[%s1] sm:$0xf]
  %v82 = vld [vmem:[%s1 + $0x4] sm:$0xf]
  %v83 = vld [vmem:[%s1 + $0x8] sm:$0xf]
  %v84 = vld [vmem:[%s1 + $0xc] sm:$0xf]
  %v85 = vld [vmem:[%s1 + $0x10] sm:$0xf]
  %v86 = vld [vmem:[%s1 + $0x14] sm:$0xf]
  %v87 = vld [vmem:[%s1 + $0x18] sm:$0xf]
  %v88 = vld [vmem:[%s1 + $0x1c] sm:$0xf]
  %v89 = vld [vmem:[%s1 + $0x20] sm:$0xf]
  %v90 = vld [vmem:[%s1 + $0x24] sm:$0xf]
  %v91 = vld [vmem:[%s1 + $0x28] sm:$0xf]
  %v92 = vld [vmem:[%s1 + $0x2c] sm:$0xf]
  %v93 = vld [vmem:[%s1 + $0x30] sm:$0xf]
  %v94 = vld [vmem:[%s1 + $0x34] sm:$0xf]
  %v95 = vld [vmem:[%s1 + $0x38] sm:$0xf]
  %v96 = vld [vmem:[%s1 + $0x3c] sm:$0xf]
  %v97 = vld [vmem:[%s2] sm:$0x1]
  %v99 = vperm.slane %v97, 0
  %v165 = vunpack.c.l.b16 %v17
  %v166 = vunpack.c.l.b16 %v18
  %v167 = vunpack.c.l.b16 %v19
  %v168 = vunpack.c.l.b16 %v20
  %v169 = vunpack.c.l.b16 %v21
  %v170 = vunpack.c.l.b16 %v22
  %v171 = vunpack.c.l.b16 %v23
  %v172 = vunpack.c.l.b16 %v24
  %v173 = vunpack.c.l.b16 %v25
  %v174 = vunpack.c.l.b16 %v26
  %v175 = vunpack.c.l.b16 %v27
  %v176 = vunpack.c.l.b16 %v28
  %v177 = vunpack.c.l.b16 %v29
  %v178 = vunpack.c.l.b16 %v30
  %v179 = vunpack.c.l.b16 %v31
  %v180 = vunpack.c.l.b16 %v32
  %v181 = vunpack.c.l.b16 %v33
  %v182 = vunpack.c.l.b16 %v34
  %v183 = vunpack.c.l.b16 %v35
  %v184 = vunpack.c.l.b16 %v36
  %v185 = vunpack.c.l.b16 %v37
  %v186 = vunpack.c.l.b16 %v38
  %v187 = vunpack.c.l.b16 %v39
  %v188 = vunpack.c.l.b16 %v40
  %v189 = vunpack.c.l.b16 %v41
  %v190 = vunpack.c.l.b16 %v42
  %v191 = vunpack.c.l.b16 %v43
  %v192 = vunpack.c.l.b16 %v44
  %v193 = vunpack.c.l.b16 %v45
  %v194 = vunpack.c.l.b16 %v46
  %v195 = vunpack.c.l.b16 %v47
  %v196 = vunpack.c.l.b16 %v48
  %v197 = vunpack.c.l.b16 %v49
  %v198 = vunpack.c.l.b16 %v50
  %v199 = vunpack.c.l.b16 %v51
  %v200 = vunpack.c.l.b16 %v52
  %v201 = vunpack.c.l.b16 %v53
  %v202 = vunpack.c.l.b16 %v54
  %v203 = vunpack.c.l.b16 %v55
  %v204 = vunpack.c.l.b16 %v56
  %v205 = vunpack.c.l.b16 %v57
  %v206 = vunpack.c.l.b16 %v58
  %v207 = vunpack.c.l.b16 %v59
  %v208 = vunpack.c.l.b16 %v60
  %v209 = vunpack.c.l.b16 %v61
  %v210 = vunpack.c.l.b16 %v62
  %v211 = vunpack.c.l.b16 %v63
  %v212 = vunpack.c.l.b16 %v64
  %v213 = vunpack.c.l.b16 %v65
  %v214 = vunpack.c.l.b16 %v66
  %v215 = vunpack.c.l.b16 %v67
  %v216 = vunpack.c.l.b16 %v68
  %v217 = vunpack.c.l.b16 %v69
  %v218 = vunpack.c.l.b16 %v70
  %v219 = vunpack.c.l.b16 %v71
  %v220 = vunpack.c.l.b16 %v72
  %v221 = vunpack.c.l.b16 %v73
  %v222 = vunpack.c.l.b16 %v74
  %v223 = vunpack.c.l.b16 %v75
  %v224 = vunpack.c.l.b16 %v76
  %v225 = vunpack.c.l.b16 %v77
  %v226 = vunpack.c.l.b16 %v78
  %v227 = vunpack.c.l.b16 %v79
  %v228 = vunpack.c.l.b16 %v80
  %v229 = vpack.c.b16 %v166, %v165
  %v230 = vpack.c.b16 %v168, %v167
  %v231 = vpack.c.b16 %v170, %v169
  %v232 = vpack.c.b16 %v172, %v171
  %v233 = vpack.c.b16 %v174, %v173
  %v234 = vpack.c.b16 %v176, %v175
  %v235 = vpack.c.b16 %v178, %v177
  %v236 = vpack.c.b16 %v180, %v179
  %v237 = vpack.c.b16 %v182, %v181
  %v238 = vpack.c.b16 %v184, %v183
  %v239 = vpack.c.b16 %v186, %v185
  %v240 = vpack.c.b16 %v188, %v187
  %v241 = vpack.c.b16 %v190, %v189
  %v242 = vpack.c.b16 %v192, %v191
  %v243 = vpack.c.b16 %v194, %v193
  %v244 = vpack.c.b16 %v196, %v195
  %v245 = vpack.c.b16 %v198, %v197
  %v246 = vpack.c.b16 %v200, %v199
  %v247 = vpack.c.b16 %v202, %v201
  %v248 = vpack.c.b16 %v204, %v203
  %v249 = vpack.c.b16 %v206, %v205
  %v250 = vpack.c.b16 %v208, %v207
  %v251 = vpack.c.b16 %v210, %v209
  %v252 = vpack.c.b16 %v212, %v211
  %v253 = vpack.c.b16 %v214, %v213
  %v254 = vpack.c.b16 %v216, %v215
  %v255 = vpack.c.b16 %v218, %v217
  %v256 = vpack.c.b16 %v220, %v219
  %v257 = vpack.c.b16 %v222, %v221
  %v258 = vpack.c.b16 %v224, %v223
  %v259 = vpack.c.b16 %v226, %v225
  %v260 = vpack.c.b16 %v228, %v227
  %v309 = vunpack.c.l.b16 %v81
  %v310 = vunpack.c.l.b16 %v82
  %v311 = vunpack.c.l.b16 %v83
  %v312 = vunpack.c.l.b16 %v84
  %v313 = vunpack.c.l.b16 %v85
  %v314 = vunpack.c.l.b16 %v86
  %v315 = vunpack.c.l.b16 %v87
  %v316 = vunpack.c.l.b16 %v88
  %v317 = vunpack.c.l.b16 %v89
  %v318 = vunpack.c.l.b16 %v90
  %v319 = vunpack.c.l.b16 %v91
  %v320 = vunpack.c.l.b16 %v92
  %v321 = vunpack.c.l.b16 %v93
  %v322 = vunpack.c.l.b16 %v94
  %v323 = vunpack.c.l.b16 %v95
  %v324 = vunpack.c.l.b16 %v96
  %v325 = vpack.c.b16 %v310, %v309
  %v326 = vpack.c.b16 %v312, %v311
  %v327 = vpack.c.b16 %v314, %v313
  %v328 = vpack.c.b16 %v316, %v315
  %v329 = vpack.c.b16 %v318, %v317
  %v330 = vpack.c.b16 %v320, %v319
  %v331 = vpack.c.b16 %v322, %v321
  %v332 = vpack.c.b16 %v324, %v323
  %341 = vmatpush.bf16.msra.mxu0 %v332
  %342 = vmatpush.bf16.msra.mxu0 %v331
  %343 = vmatpush.bf16.msra.mxu0 %v330
  %344 = vmatpush.bf16.msra.mxu0 %v329
  %345 = vmatpush.bf16.msra.mxu0 %v328
  %346 = vmatpush.bf16.msra.mxu0 %v327
  %347 = vmatpush.bf16.msra.mxu0 %v326
  %348 = vmatpush.bf16.msra.mxu0 %v325
  %349 = vmatmul.bf16.gmra.mxu0 %v229
  %v350 = vpop.f32.mrf.mxu0
  %v351 = vadd.f32 %v99, %v350
  %v352 = vpop.f32.mrf.mxu0
  %v353 = vadd.f32 %v99, %v352
  %354 = vmatmul.bf16.gmra.mxu0 %v230
  %v355 = vpop.f32.mrf.mxu0
  %v356 = vadd.f32 %v99, %v355
  %v357 = vpop.f32.mrf.mxu0
  %v358 = vadd.f32 %v99, %v357
  %359 = vmatmul.bf16.gmra.mxu0 %v231
  %v360 = vpop.f32.mrf.mxu0
  %v361 = vadd.f32 %v99, %v360
  %v362 = vpop.f32.mrf.mxu0
  %v363 = vadd.f32 %v99, %v362
  %364 = vmatmul.bf16.gmra.mxu0 %v232
  %v365 = vpop.f32.mrf.mxu0
  %v366 = vadd.f32 %v99, %v365
  %v367 = vpop.f32.mrf.mxu0
  %v368 = vadd.f32 %v99, %v367
  %369 = vmatmul.bf16.gmra.mxu0 %v233
  %v370 = vpop.f32.mrf.mxu0
  %v371 = vadd.f32 %v99, %v370
  %v372 = vpop.f32.mrf.mxu0
  %v373 = vadd.f32 %v99, %v372
  %374 = vmatmul.bf16.gmra.mxu0 %v234
  %v375 = vpop.f32.mrf.mxu0
  %v376 = vadd.f32 %v99, %v375
  %v377 = vpop.f32.mrf.mxu0
  %v378 = vadd.f32 %v99, %v377
  %379 = vmatmul.bf16.gmra.mxu0 %v235
  %v380 = vpop.f32.mrf.mxu0
  %v381 = vadd.f32 %v99, %v380
  %v382 = vpop.f32.mrf.mxu0
  %v383 = vadd.f32 %v99, %v382
  %384 = vmatmul.bf16.gmra.mxu0 %v236
  %v385 = vpop.f32.mrf.mxu0
  %v386 = vadd.f32 %v99, %v385
  %v387 = vpop.f32.mrf.mxu0
  %v388 = vadd.f32 %v99, %v387
  %389 = vmatmul.bf16.gmra.mxu0 %v237
  %v390 = vpop.f32.mrf.mxu0
  %v391 = vadd.f32 %v99, %v390
  %v392 = vpop.f32.mrf.mxu0
  %v393 = vadd.f32 %v99, %v392
  %394 = vmatmul.bf16.gmra.mxu0 %v238
  %v395 = vpop.f32.mrf.mxu0
  %v396 = vadd.f32 %v99, %v395
  %v397 = vpop.f32.mrf.mxu0
  %v398 = vadd.f32 %v99, %v397
  %399 = vmatmul.bf16.gmra.mxu0 %v239
  %v400 = vpop.f32.mrf.mxu0
  %v401 = vadd.f32 %v99, %v400
  %v402 = vpop.f32.mrf.mxu0
  %v403 = vadd.f32 %v99, %v402
  %404 = vmatmul.bf16.gmra.mxu0 %v240
  %v405 = vpop.f32.mrf.mxu0
  %v406 = vadd.f32 %v99, %v405
  %v407 = vpop.f32.mrf.mxu0
  %v408 = vadd.f32 %v99, %v407
  %409 = vmatmul.bf16.gmra.mxu0 %v241
  %v410 = vpop.f32.mrf.mxu0
  %v411 = vadd.f32 %v99, %v410
  %v412 = vpop.f32.mrf.mxu0
  %v413 = vadd.f32 %v99, %v412
  %414 = vmatmul.bf16.gmra.mxu0 %v242
  %v415 = vpop.f32.mrf.mxu0
  %v416 = vadd.f32 %v99, %v415
  %v417 = vpop.f32.mrf.mxu0
  %v418 = vadd.f32 %v99, %v417
  %419 = vmatmul.bf16.gmra.mxu0 %v243
  %v420 = vpop.f32.mrf.mxu0
  %v421 = vadd.f32 %v99, %v420
  %v422 = vpop.f32.mrf.mxu0
  %v423 = vadd.f32 %v99, %v422
  %424 = vmatmul.bf16.gmra.mxu0 %v244
  %v425 = vpop.f32.mrf.mxu0
  %v426 = vadd.f32 %v99, %v425
  %v427 = vpop.f32.mrf.mxu0
  %v428 = vadd.f32 %v99, %v427
  %429 = vmatmul.bf16.gmra.mxu0 %v245
  %v430 = vpop.f32.mrf.mxu0
  %v431 = vadd.f32 %v99, %v430
  %v432 = vpop.f32.mrf.mxu0
  %v433 = vadd.f32 %v99, %v432
  %434 = vmatmul.bf16.gmra.mxu0 %v246
  %v435 = vpop.f32.mrf.mxu0
  %v436 = vadd.f32 %v99, %v435
  %v437 = vpop.f32.mrf.mxu0
  %v438 = vadd.f32 %v99, %v437
  %439 = vmatmul.bf16.gmra.mxu0 %v247
  %v440 = vpop.f32.mrf.mxu0
  %v441 = vadd.f32 %v99, %v440
  %v442 = vpop.f32.mrf.mxu0
  %v443 = vadd.f32 %v99, %v442
  %444 = vmatmul.bf16.gmra.mxu0 %v248
  %v445 = vpop.f32.mrf.mxu0
  %v446 = vadd.f32 %v99, %v445
  %v447 = vpop.f32.mrf.mxu0
  %v448 = vadd.f32 %v99, %v447
  %449 = vmatmul.bf16.gmra.mxu0 %v249
  %v450 = vpop.f32.mrf.mxu0
  %v451 = vadd.f32 %v99, %v450
  %v452 = vpop.f32.mrf.mxu0
  %v453 = vadd.f32 %v99, %v452
  %454 = vmatmul.bf16.gmra.mxu0 %v250
  %v455 = vpop.f32.mrf.mxu0
  %v456 = vadd.f32 %v99, %v455
  %v457 = vpop.f32.mrf.mxu0
  %v458 = vadd.f32 %v99, %v457
  %459 = vmatmul.bf16.gmra.mxu0 %v251
  %v460 = vpop.f32.mrf.mxu0
  %v461 = vadd.f32 %v99, %v460
  %v462 = vpop.f32.mrf.mxu0
  %v463 = vadd.f32 %v99, %v462
  %464 = vmatmul.bf16.gmra.mxu0 %v252
  %v465 = vpop.f32.mrf.mxu0
  %v466 = vadd.f32 %v99, %v465
  %v467 = vpop.f32.mrf.mxu0
  %v468 = vadd.f32 %v99, %v467
  %469 = vmatmul.bf16.gmra.mxu0 %v253
  %v470 = vpop.f32.mrf.mxu0
  %v471 = vadd.f32 %v99, %v470
  %v472 = vpop.f32.mrf.mxu0
  %v473 = vadd.f32 %v99, %v472
  %474 = vmatmul.bf16.gmra.mxu0 %v254
  %v475 = vpop.f32.mrf.mxu0
  %v476 = vadd.f32 %v99, %v475
  %v477 = vpop.f32.mrf.mxu0
  %v478 = vadd.f32 %v99, %v477
  %479 = vmatmul.bf16.gmra.mxu0 %v255
  %v480 = vpop.f32.mrf.mxu0
  %v481 = vadd.f32 %v99, %v480
  %v482 = vpop.f32.mrf.mxu0
  %v483 = vadd.f32 %v99, %v482
  %484 = vmatmul.bf16.gmra.mxu0 %v256
  %v485 = vpop.f32.mrf.mxu0
  %v486 = vadd.f32 %v99, %v485
  %v487 = vpop.f32.mrf.mxu0
  %v488 = vadd.f32 %v99, %v487
  %489 = vmatmul.bf16.gmra.mxu0 %v257
  %v490 = vpop.f32.mrf.mxu0
  %v491 = vadd.f32 %v99, %v490
  %v492 = vpop.f32.mrf.mxu0
  %v493 = vadd.f32 %v99, %v492
  %494 = vmatmul.bf16.gmra.mxu0 %v258
  %v495 = vpop.f32.mrf.mxu0
  %v496 = vadd.f32 %v99, %v495
  %v497 = vpop.f32.mrf.mxu0
  %v498 = vadd.f32 %v99, %v497
  %499 = vmatmul.bf16.gmra.mxu0 %v259
  %v500 = vpop.f32.mrf.mxu0
  %v501 = vadd.f32 %v99, %v500
  %v502 = vpop.f32.mrf.mxu0
  %v503 = vadd.f32 %v99, %v502
  %504 = vmatmul.bf16.gmra.mxu0 %v260
  %v505 = vpop.f32.mrf.mxu0
  %v506 = vadd.f32 %v99, %v505
  %v507 = vpop.f32.mrf.mxu0
  %v508 = vadd.f32 %v99, %v507
  %509 = vdwg.mxu0
  %v510 = vpack.c.bf16 %v351, %v351
  %v511 = vpack.c.bf16 %v353, %v353
  %v512 = vpack.c.bf16 %v356, %v356
  %v513 = vpack.c.bf16 %v358, %v358
  %v514 = vpack.c.bf16 %v361, %v361
  %v515 = vpack.c.bf16 %v363, %v363
  %v516 = vpack.c.bf16 %v366, %v366
  %v517 = vpack.c.bf16 %v368, %v368
  %v518 = vpack.c.bf16 %v371, %v371
  %v519 = vpack.c.bf16 %v373, %v373
  %v520 = vpack.c.bf16 %v376, %v376
  %v521 = vpack.c.bf16 %v378, %v378
  %v522 = vpack.c.bf16 %v381, %v381
  %v523 = vpack.c.bf16 %v383, %v383
  %v524 = vpack.c.bf16 %v386, %v386
  %v525 = vpack.c.bf16 %v388, %v388
  %v526 = vpack.c.bf16 %v391, %v391
  %v527 = vpack.c.bf16 %v393, %v393
  %v528 = vpack.c.bf16 %v396, %v396
  %v529 = vpack.c.bf16 %v398, %v398
  %v530 = vpack.c.bf16 %v401, %v401
  %v531 = vpack.c.bf16 %v403, %v403
  %v532 = vpack.c.bf16 %v406, %v406
  %v533 = vpack.c.bf16 %v408, %v408
  %v534 = vpack.c.bf16 %v411, %v411
  %v535 = vpack.c.bf16 %v413, %v413
  %v536 = vpack.c.bf16 %v416, %v416
  %v537 = vpack.c.bf16 %v418, %v418
  %v538 = vpack.c.bf16 %v421, %v421
  %v539 = vpack.c.bf16 %v423, %v423
  %v540 = vpack.c.bf16 %v426, %v426
  %v541 = vpack.c.bf16 %v428, %v428
  %v542 = vpack.c.bf16 %v431, %v431
  %v543 = vpack.c.bf16 %v433, %v433
  %v544 = vpack.c.bf16 %v436, %v436
  %v545 = vpack.c.bf16 %v438, %v438
  %v546 = vpack.c.bf16 %v441, %v441
  %v547 = vpack.c.bf16 %v443, %v443
  %v548 = vpack.c.bf16 %v446, %v446
  %v549 = vpack.c.bf16 %v448, %v448
  %v550 = vpack.c.bf16 %v451, %v451
  %v551 = vpack.c.bf16 %v453, %v453
  %v552 = vpack.c.bf16 %v456, %v456
  %v553 = vpack.c.bf16 %v458, %v458
  %v554 = vpack.c.bf16 %v461, %v461
  %v555 = vpack.c.bf16 %v463, %v463
  %v556 = vpack.c.bf16 %v466, %v466
  %v557 = vpack.c.bf16 %v468, %v468
  %v558 = vpack.c.bf16 %v471, %v471
  %v559 = vpack.c.bf16 %v473, %v473
  %v560 = vpack.c.bf16 %v476, %v476
  %v561 = vpack.c.bf16 %v478, %v478
  %v562 = vpack.c.bf16 %v481, %v481
  %v563 = vpack.c.bf16 %v483, %v483
  %v564 = vpack.c.bf16 %v486, %v486
  %v565 = vpack.c.bf16 %v488, %v488
  %v566 = vpack.c.bf16 %v491, %v491
  %v567 = vpack.c.bf16 %v493, %v493
  %v568 = vpack.c.bf16 %v496, %v496
  %v569 = vpack.c.bf16 %v498, %v498
  %v570 = vpack.c.bf16 %v501, %v501
  %v571 = vpack.c.bf16 %v503, %v503
  %v572 = vpack.c.bf16 %v506, %v506
  %v573 = vpack.c.bf16 %v508, %v508
  %574 = vst [vmem:[%s3] sm:$0xf] %v510
  %575 = vst [vmem:[%s3 + $0x4] sm:$0xf] %v511
  %576 = vst [vmem:[%s3 + $0x8] sm:$0xf] %v512
  %577 = vst [vmem:[%s3 + $0xc] sm:$0xf] %v513
  %578 = vst [vmem:[%s3 + $0x10] sm:$0xf] %v514
  %579 = vst [vmem:[%s3 + $0x14] sm:$0xf] %v515
  %580 = vst [vmem:[%s3 + $0x18] sm:$0xf] %v516
  %581 = vst [vmem:[%s3 + $0x1c] sm:$0xf] %v517
  %582 = vst [vmem:[%s3 + $0x20] sm:$0xf] %v518
  %583 = vst [vmem:[%s3 + $0x24] sm:$0xf] %v519
  %584 = vst [vmem:[%s3 + $0x28] sm:$0xf] %v520
  %585 = vst [vmem:[%s3 + $0x2c] sm:$0xf] %v521
  %586 = vst [vmem:[%s3 + $0x30] sm:$0xf] %v522
  %587 = vst [vmem:[%s3 + $0x34] sm:$0xf] %v523
  %588 = vst [vmem:[%s3 + $0x38] sm:$0xf] %v524
  %589 = vst [vmem:[%s3 + $0x3c] sm:$0xf] %v525
  %590 = vst [vmem:[%s3 + $0x40] sm:$0xf] %v526
  %591 = vst [vmem:[%s3 + $0x44] sm:$0xf] %v527
  %592 = vst [vmem:[%s3 + $0x48] sm:$0xf] %v528
  %593 = vst [vmem:[%s3 + $0x4c] sm:$0xf] %v529
  %594 = vst [vmem:[%s3 + $0x50] sm:$0xf] %v530
  %595 = vst [vmem:[%s3 + $0x54] sm:$0xf] %v531
  %596 = vst [vmem:[%s3 + $0x58] sm:$0xf] %v532
  %597 = vst [vmem:[%s3 + $0x5c] sm:$0xf] %v533
  %598 = vst [vmem:[%s3 + $0x60] sm:$0xf] %v534
  %599 = vst [vmem:[%s3 + $0x64] sm:$0xf] %v535
  %600 = vst [vmem:[%s3 + $0x68] sm:$0xf] %v536
  %601 = vst [vmem:[%s3 + $0x6c] sm:$0xf] %v537
  %602 = vst [vmem:[%s3 + $0x70] sm:$0xf] %v538
  %603 = vst [vmem:[%s3 + $0x74] sm:$0xf] %v539
  %604 = vst [vmem:[%s3 + $0x78] sm:$0xf] %v540
  %605 = vst [vmem:[%s3 + $0x7c] sm:$0xf] %v541
  %606 = vst [vmem:[%s3 + $0x80] sm:$0xf] %v542
  %607 = vst [vmem:[%s3 + $0x84] sm:$0xf] %v543
  %608 = vst [vmem:[%s3 + $0x88] sm:$0xf] %v544
  %609 = vst [vmem:[%s3 + $0x8c] sm:$0xf] %v545
  %610 = vst [vmem:[%s3 + $0x90] sm:$0xf] %v546
  %611 = vst [vmem:[%s3 + $0x94] sm:$0xf] %v547
  %612 = vst [vmem:[%s3 + $0x98] sm:$0xf] %v548
  %613 = vst [vmem:[%s3 + $0x9c] sm:$0xf] %v549
  %614 = vst [vmem:[%s3 + $0xa0] sm:$0xf] %v550
  %615 = vst [vmem:[%s3 + $0xa4] sm:$0xf] %v551
  %616 = vst [vmem:[%s3 + $0xa8] sm:$0xf] %v552
  %617 = vst [vmem:[%s3 + $0xac] sm:$0xf] %v553
  %618 = vst [vmem:[%s3 + $0xb0] sm:$0xf] %v554
  %619 = vst [vmem:[%s3 + $0xb4] sm:$0xf] %v555
  %620 = vst [vmem:[%s3 + $0xb8] sm:$0xf] %v556
  %621 = vst [vmem:[%s3 + $0xbc] sm:$0xf] %v557
  %622 = vst [vmem:[%s3 + $0xc0] sm:$0xf] %v558
  %623 = vst [vmem:[%s3 + $0xc4] sm:$0xf] %v559
  %624 = vst [vmem:[%s3 + $0xc8] sm:$0xf] %v560
  %625 = vst [vmem:[%s3 + $0xcc] sm:$0xf] %v561
  %626 = vst [vmem:[%s3 + $0xd0] sm:$0xf] %v562
  %627 = vst [vmem:[%s3 + $0xd4] sm:$0xf] %v563
  %628 = vst [vmem:[%s3 + $0xd8] sm:$0xf] %v564
  %629 = vst [vmem:[%s3 + $0xdc] sm:$0xf] %v565
  %630 = vst [vmem:[%s3 + $0xe0] sm:$0xf] %v566
  %631 = vst [vmem:[%s3 + $0xe4] sm:$0xf] %v567
  %632 = vst [vmem:[%s3 + $0xe8] sm:$0xf] %v568
  %633 = vst [vmem:[%s3 + $0xec] sm:$0xf] %v569
  %634 = vst [vmem:[%s3 + $0xf0] sm:$0xf] %v570
  %635 = vst [vmem:[%s3 + $0xf4] sm:$0xf] %v571
  %636 = vst [vmem:[%s3 + $0xf8] sm:$0xf] %v572
  %637 = vst [vmem:[%s3 + $0xfc] sm:$0xf] %v573
  %v638 = vadd.f32 %v351, %v353
  %v639 = vadd.f32 %v638, %v356
  %v640 = vadd.f32 %v639, %v358
  %v641 = vadd.f32 %v640, %v361
  %v642 = vadd.f32 %v641, %v363
  %v643 = vadd.f32 %v642, %v366
  %v644 = vadd.f32 %v643, %v368
  %v645 = vadd.f32 %v644, %v371
  %v646 = vadd.f32 %v645, %v373
  %v647 = vadd.f32 %v646, %v376
  %v648 = vadd.f32 %v647, %v378
  %v649 = vadd.f32 %v648, %v381
  %v650 = vadd.f32 %v649, %v383
  %v651 = vadd.f32 %v650, %v386
  %v652 = vadd.f32 %v651, %v388
  %v653 = vadd.f32 %v652, %v391
  %v654 = vadd.f32 %v653, %v393
  %v655 = vadd.f32 %v654, %v396
  %v656 = vadd.f32 %v655, %v398
  %v657 = vadd.f32 %v656, %v401
  %v658 = vadd.f32 %v657, %v403
  %v659 = vadd.f32 %v658, %v406
  %v660 = vadd.f32 %v659, %v408
  %v661 = vadd.f32 %v660, %v411
  %v662 = vadd.f32 %v661, %v413
  %v663 = vadd.f32 %v662, %v416
  %v664 = vadd.f32 %v663, %v418
  %v665 = vadd.f32 %v664, %v421
  %v666 = vadd.f32 %v665, %v423
  %v667 = vadd.f32 %v666, %v426
  %v668 = vadd.f32 %v667, %v428
  %v669 = vadd.f32 %v668, %v431
  %v670 = vadd.f32 %v669, %v433
  %v671 = vadd.f32 %v670, %v436
  %v672 = vadd.f32 %v671, %v438
  %v673 = vadd.f32 %v672, %v441
  %v674 = vadd.f32 %v673, %v443
  %v675 = vadd.f32 %v674, %v446
  %v676 = vadd.f32 %v675, %v448
  %v677 = vadd.f32 %v676, %v451
  %v678 = vadd.f32 %v677, %v453
  %v679 = vadd.f32 %v678, %v456
  %v680 = vadd.f32 %v679, %v458
  %v681 = vadd.f32 %v680, %v461
  %v682 = vadd.f32 %v681, %v463
  %v683 = vadd.f32 %v682, %v466
  %v684 = vadd.f32 %v683, %v468
  %v685 = vadd.f32 %v684, %v471
  %v686 = vadd.f32 %v685, %v473
  %v687 = vadd.f32 %v686, %v476
  %v688 = vadd.f32 %v687, %v478
  %v689 = vadd.f32 %v688, %v481
  %v690 = vadd.f32 %v689, %v483
  %v691 = vadd.f32 %v690, %v486
  %v692 = vadd.f32 %v691, %v488
  %v693 = vadd.f32 %v692, %v491
  %v694 = vadd.f32 %v693, %v493
  %v695 = vadd.f32 %v694, %v496
  %v696 = vadd.f32 %v695, %v498
  %v697 = vadd.f32 %v696, %v501
  %v698 = vadd.f32 %v697, %v503
  %v699 = vadd.f32 %v698, %v506
  %v700 = vadd.f32 %v699, %v508
  %701 = vst [vmem:[%s4] sm:$0xff] %v700
  %v702 = vmul.f32 %v351, %v351
  %v703 = vmul.f32 %v353, %v353
  %v704 = vmul.f32 %v356, %v356
  %v705 = vmul.f32 %v358, %v358
  %v706 = vmul.f32 %v361, %v361
  %v707 = vmul.f32 %v363, %v363
  %v708 = vmul.f32 %v366, %v366
  %v709 = vmul.f32 %v368, %v368
  %v710 = vmul.f32 %v371, %v371
  %v711 = vmul.f32 %v373, %v373
  %v712 = vmul.f32 %v376, %v376
  %v713 = vmul.f32 %v378, %v378
  %v714 = vmul.f32 %v381, %v381
  %v715 = vmul.f32 %v383, %v383
  %v716 = vmul.f32 %v386, %v386
  %v717 = vmul.f32 %v388, %v388
  %v718 = vmul.f32 %v391, %v391
  %v719 = vmul.f32 %v393, %v393
  %v720 = vmul.f32 %v396, %v396
  %v721 = vmul.f32 %v398, %v398
  %v722 = vmul.f32 %v401, %v401
  %v723 = vmul.f32 %v403, %v403
  %v724 = vmul.f32 %v406, %v406
  %v725 = vmul.f32 %v408, %v408
  %v726 = vmul.f32 %v411, %v411
  %v727 = vmul.f32 %v413, %v413
  %v728 = vmul.f32 %v416, %v416
  %v729 = vmul.f32 %v418, %v418
  %v730 = vmul.f32 %v421, %v421
  %v731 = vmul.f32 %v423, %v423
  %v732 = vmul.f32 %v426, %v426
  %v733 = vmul.f32 %v428, %v428
  %v734 = vmul.f32 %v431, %v431
  %v735 = vmul.f32 %v433, %v433
  %v736 = vmul.f32 %v436, %v436
  %v737 = vmul.f32 %v438, %v438
  %v738 = vmul.f32 %v441, %v441
  %v739 = vmul.f32 %v443, %v443
  %v740 = vmul.f32 %v446, %v446
  %v741 = vmul.f32 %v448, %v448
  %v742 = vmul.f32 %v451, %v451
  %v743 = vmul.f32 %v453, %v453
  %v744 = vmul.f32 %v456, %v456
  %v745 = vmul.f32 %v458, %v458
  %v746 = vmul.f32 %v461, %v461
  %v747 = vmul.f32 %v463, %v463
  %v748 = vmul.f32 %v466, %v466
  %v749 = vmul.f32 %v468, %v468
  %v750 = vmul.f32 %v471, %v471
  %v751 = vmul.f32 %v473, %v473
  %v752 = vmul.f32 %v476, %v476
  %v753 = vmul.f32 %v478, %v478
  %v754 = vmul.f32 %v481, %v481
  %v755 = vmul.f32 %v483, %v483
  %v756 = vmul.f32 %v486, %v486
  %v757 = vmul.f32 %v488, %v488
  %v758 = vmul.f32 %v491, %v491
  %v759 = vmul.f32 %v493, %v493
  %v760 = vmul.f32 %v496, %v496
  %v761 = vmul.f32 %v498, %v498
  %v762 = vmul.f32 %v501, %v501
  %v763 = vmul.f32 %v503, %v503
  %v764 = vmul.f32 %v506, %v506
  %v765 = vmul.f32 %v508, %v508
  %v766 = vadd.f32 %v702, %v703
  %v767 = vadd.f32 %v766, %v704
  %v768 = vadd.f32 %v767, %v705
  %v769 = vadd.f32 %v768, %v706
  %v770 = vadd.f32 %v769, %v707
  %v771 = vadd.f32 %v770, %v708
  %v772 = vadd.f32 %v771, %v709
  %v773 = vadd.f32 %v772, %v710
  %v774 = vadd.f32 %v773, %v711
  %v775 = vadd.f32 %v774, %v712
  %v776 = vadd.f32 %v775, %v713
  %v777 = vadd.f32 %v776, %v714
  %v778 = vadd.f32 %v777, %v715
  %v779 = vadd.f32 %v778, %v716
  %v780 = vadd.f32 %v779, %v717
  %v781 = vadd.f32 %v780, %v718
  %v782 = vadd.f32 %v781, %v719
  %v783 = vadd.f32 %v782, %v720
  %v784 = vadd.f32 %v783, %v721
  %v785 = vadd.f32 %v784, %v722
  %v786 = vadd.f32 %v785, %v723
  %v787 = vadd.f32 %v786, %v724
  %v788 = vadd.f32 %v787, %v725
  %v789 = vadd.f32 %v788, %v726
  %v790 = vadd.f32 %v789, %v727
  %v791 = vadd.f32 %v790, %v728
  %v792 = vadd.f32 %v791, %v729
  %v793 = vadd.f32 %v792, %v730
  %v794 = vadd.f32 %v793, %v731
  %v795 = vadd.f32 %v794, %v732
  %v796 = vadd.f32 %v795, %v733
  %v797 = vadd.f32 %v796, %v734
  %v798 = vadd.f32 %v797, %v735
  %v799 = vadd.f32 %v798, %v736
  %v800 = vadd.f32 %v799, %v737
  %v801 = vadd.f32 %v800, %v738
  %v802 = vadd.f32 %v801, %v739
  %v803 = vadd.f32 %v802, %v740
  %v804 = vadd.f32 %v803, %v741
  %v805 = vadd.f32 %v804, %v742
  %v806 = vadd.f32 %v805, %v743
  %v807 = vadd.f32 %v806, %v744
  %v808 = vadd.f32 %v807, %v745
  %v809 = vadd.f32 %v808, %v746
  %v810 = vadd.f32 %v809, %v747
  %v811 = vadd.f32 %v810, %v748
  %v812 = vadd.f32 %v811, %v749
  %v813 = vadd.f32 %v812, %v750
  %v814 = vadd.f32 %v813, %v751
  %v815 = vadd.f32 %v814, %v752
  %v816 = vadd.f32 %v815, %v753
  %v817 = vadd.f32 %v816, %v754
  %v818 = vadd.f32 %v817, %v755
  %v819 = vadd.f32 %v818, %v756
  %v820 = vadd.f32 %v819, %v757
  %v821 = vadd.f32 %v820, %v758
  %v822 = vadd.f32 %v821, %v759
  %v823 = vadd.f32 %v822, %v760
  %v824 = vadd.f32 %v823, %v761
  %v825 = vadd.f32 %v824, %v762
  %v826 = vadd.f32 %v825, %v763
  %v827 = vadd.f32 %v826, %v764
  %v828 = vadd.f32 %v827, %v765
  %829 = vst [vmem:[%s5] sm:$0xff] %v828
  // Predicated region
  $region14: #{discriminator_forward.5} parent=0 // pred_check
    _
  $region15: #{discriminator_forward.5} parent=0 // pred_check_branch
    %831 = sbr.rel (0) target = $region17
  $region16: #{discriminator_forward.5} parent=0 // pred_region
    _
  $region17: #{discriminator_forward.5} parent=0 // pred_fallthru
    _
  // Predicated region
  $region18: #{discriminator_forward.5} parent=0 // pred_check
    _
  $region19: #{discriminator_forward.5} parent=0 // pred_check_branch
    %833 = sbr.rel (0) target = $region21
  $region20: #{discriminator_forward.5} parent=0 // pred_region
    _
  $region21: #{discriminator_forward.5} parent=0 // pred_fallthru
    _
  // Predicated region
  $region22: #{discriminator_forward.5} parent=0 // pred_check
    _
  $region23: #{discriminator_forward.5} parent=0 // pred_check_branch
    %835 = sbr.rel (0) target = $region25
  $region24: #{discriminator_forward.5} parent=0 // pred_region
    _
  $region25: #{discriminator_forward.5} parent=0 // pred_fallthru
    _
  // Predicated region
  $region26: #{discriminator_forward.5} parent=0 // pred_check
    _
  $region27: #{discriminator_forward.5} parent=0 // pred_check_branch
    %837 = sbr.rel (0) target = $region29
  $region28: #{discriminator_forward.5} parent=0 // pred_region
    _
  $region29: #{discriminator_forward.5} parent=0 // pred_fallthru
    _
  // Predicated region
  $region30: #{discriminator_forward.5} parent=0 // pred_check
    _
  $region31: #{discriminator_forward.5} parent=0 // pred_check_branch
    %839 = sbr.rel (0) target = $region33
  $region32: #{discriminator_forward.5} parent=0 // pred_region
    _
  $region33: #{discriminator_forward.5} parent=0 // pred_fallthru
    _
  // Predicated region
  $region34: #{discriminator_forward.5} parent=0 // pred_check
    _
  $region35: #{discriminator_forward.5} parent=0 // pred_check_branch
    %841 = sbr.rel (0) target = $region37
  $region36: #{discriminator_forward.5} parent=0 // pred_region
    _
  $region37: #{discriminator_forward.5} parent=0 // pred_fallthru
    _

// kernel: discriminator_forward.6
$region0: #{discriminator_forward.6}
  #allocation0 [shape = 'u32[]', space=smem, size = 0x4, offset = 0x4, fixed_abs, tag = 'smem constant byte address 0x4 - core index']
  #allocation1 [shape = 'u32[72,128]{1,0:T(1,128)}', space=vmem, size = 0x9000, scoped, tag = 'internal scratch']
  %s0 = inlined_call_operand.vmem [shape: bf16[128,256], index: 0, kind: input, shape index: {}]
  %s1 = inlined_call_operand.vmem [shape: bf16[256,128], index: 1, kind: input, shape index: {}]
  %s2 = inlined_call_operand.vmem [shape: f32[1,128], index: 2, kind: input, shape index: {}]
  %s3 = inlined_call_operand.vmem [shape: bf16[128,128], index: 3, kind: output, shape index: {0}]
  %s4 = inlined_call_operand.vmem [shape: f32[8,128], index: 4, kind: output, shape index: {1}]
  %s5 = inlined_call_operand.vmem [shape: f32[8,128], index: 5, kind: output, shape index: {2}]
  %6 = xla_tuple %s3, %s4, %s5
  %s7 = sld [smem:[#allocation0]]
  $region38: #{discriminator_forward.6} parent=0
    _
  %s9 = ssub.s32 1, %s7
  %s10 = scalar_select 0, %s9, %s7
  // Predicated region
  $region2: #{discriminator_forward.6} parent=0 // pred_check
    _
  $region3: #{discriminator_forward.6} parent=0 // pred_check_branch
    %12 = sbr.rel (0) target = $region5
  $region4: #{discriminator_forward.6} parent=0 // pred_region
    _
  $region5: #{discriminator_forward.6} parent=0 // pred_fallthru
    _
  // Predicated region
  $region6: #{discriminator_forward.6} parent=0 // pred_check
    _
  $region7: #{discriminator_forward.6} parent=0 // pred_check_branch
    %14 = sbr.rel (0) target = $region9
  $region8: #{discriminator_forward.6} parent=0 // pred_region
    _
  $region9: #{discriminator_forward.6} parent=0 // pred_fallthru
    _
  // Predicated region
  $region10: #{discriminator_forward.6} parent=0 // pred_check
    _
  $region11: #{discriminator_forward.6} parent=0 // pred_check_branch
    %16 = sbr.rel (0) target = $region13
  $region12: #{discriminator_forward.6} parent=0 // pred_region
    _
  $region13: #{discriminator_forward.6} parent=0 // pred_fallthru
    _
  %v17 = vld [vmem:[%s0] sm:$0xff]
  %v18 = vld [vmem:[%s0 + $0x8] sm:$0xff]
  %v19 = vld [vmem:[%s0 + $0x10] sm:$0xff]
  %v20 = vld [vmem:[%s0 + $0x18] sm:$0xff]
  %v21 = vld [vmem:[%s0 + $0x20] sm:$0xff]
  %v22 = vld [vmem:[%s0 + $0x28] sm:$0xff]
  %v23 = vld [vmem:[%s0 + $0x30] sm:$0xff]
  %v24 = vld [vmem:[%s0 + $0x38] sm:$0xff]
  %v25 = vld [vmem:[%s0 + $0x40] sm:$0xff]
  %v26 = vld [vmem:[%s0 + $0x48] sm:$0xff]
  %v27 = vld [vmem:[%s0 + $0x50] sm:$0xff]
  %v28 = vld [vmem:[%s0 + $0x58] sm:$0xff]
  %v29 = vld [vmem:[%s0 + $0x60] sm:$0xff]
  %v30 = vld [vmem:[%s0 + $0x68] sm:$0xff]
  %v31 = vld [vmem:[%s0 + $0x70] sm:$0xff]
  %v32 = vld [vmem:[%s0 + $0x78] sm:$0xff]
  %v33 = vld [vmem:[%s1] sm:$0xf]
  %v34 = vld [vmem:[%s1 + $0x4] sm:$0xf]
  %v35 = vld [vmem:[%s1 + $0x8] sm:$0xf]
  %v36 = vld [vmem:[%s1 + $0xc] sm:$0xf]
  %v37 = vld [vmem:[%s1 + $0x10] sm:$0xf]
  %v38 = vld [vmem:[%s1 + $0x14] sm:$0xf]
  %v39 = vld [vmem:[%s1 + $0x18] sm:$0xf]
  %v40 = vld [vmem:[%s1 + $0x1c] sm:$0xf]
  %v41 = vld [vmem:[%s1 + $0x20] sm:$0xf]
  %v42 = vld [vmem:[%s1 + $0x24] sm:$0xf]
  %v43 = vld [vmem:[%s1 + $0x28] sm:$0xf]
  %v44 = vld [vmem:[%s1 + $0x2c] sm:$0xf]
  %v45 = vld [vmem:[%s1 + $0x30] sm:$0xf]
  %v46 = vld [vmem:[%s1 + $0x34] sm:$0xf]
  %v47 = vld [vmem:[%s1 + $0x38] sm:$0xf]
  %v48 = vld [vmem:[%s1 + $0x3c] sm:$0xf]
  %v49 = vld [vmem:[%s1 + $0x40] sm:$0xf]
  %v50 = vld [vmem:[%s1 + $0x44] sm:$0xf]
  %v51 = vld [vmem:[%s1 + $0x48] sm:$0xf]
  %v52 = vld [vmem:[%s1 + $0x4c] sm:$0xf]
  %v53 = vld [vmem:[%s1 + $0x50] sm:$0xf]
  %v54 = vld [vmem:[%s1 + $0x54] sm:$0xf]
  %v55 = vld [vmem:[%s1 + $0x58] sm:$0xf]
  %v56 = vld [vmem:[%s1 + $0x5c] sm:$0xf]
  %v57 = vld [vmem:[%s1 + $0x60] sm:$0xf]
  %v58 = vld [vmem:[%s1 + $0x64] sm:$0xf]
  %v59 = vld [vmem:[%s1 + $0x68] sm:$0xf]
  %v60 = vld [vmem:[%s1 + $0x6c] sm:$0xf]
  %v61 = vld [vmem:[%s1 + $0x70] sm:$0xf]
  %v62 = vld [vmem:[%s1 + $0x74] sm:$0xf]
  %v63 = vld [vmem:[%s1 + $0x78] sm:$0xf]
  %v64 = vld [vmem:[%s1 + $0x7c] sm:$0xf]
  %v65 = vld [vmem:[%s2] sm:$0x1]
  %v67 = vperm.slane %v65, 0
  %v85 = vunpack.c.l.b16 %v17
  %v86 = vunpack.c.h.b16 %v17
  %v87 = vunpack.c.l.b16 %v18
  %v88 = vunpack.c.h.b16 %v18
  %v89 = vunpack.c.l.b16 %v19
  %v90 = vunpack.c.h.b16 %v19
  %v91 = vunpack.c.l.b16 %v20
  %v92 = vunpack.c.h.b16 %v20
  %v93 = vunpack.c.l.b16 %v21
  %v94 = vunpack.c.h.b16 %v21
  %v95 = vunpack.c.l.b16 %v22
  %v96 = vunpack.c.h.b16 %v22
  %v97 = vunpack.c.l.b16 %v23
  %v98 = vunpack.c.h.b16 %v23
  %v99 = vunpack.c.l.b16 %v24
  %v100 = vunpack.c.h.b16 %v24
  %v101 = vunpack.c.l.b16 %v25
  %v102 = vunpack.c.h.b16 %v25
  %v103 = vunpack.c.l.b16 %v26
  %v104 = vunpack.c.h.b16 %v26
  %v105 = vunpack.c.l.b16 %v27
  %v106 = vunpack.c.h.b16 %v27
  %v107 = vunpack.c.l.b16 %v28
  %v108 = vunpack.c.h.b16 %v28
  %v109 = vunpack.c.l.b16 %v29
  %v110 = vunpack.c.h.b16 %v29
  %v111 = vunpack.c.l.b16 %v30
  %v112 = vunpack.c.h.b16 %v30
  %v113 = vunpack.c.l.b16 %v31
  %v114 = vunpack.c.h.b16 %v31
  %v115 = vunpack.c.l.b16 %v32
  %v116 = vunpack.c.h.b16 %v32
  %v117 = vpack.c.b16 %v87, %v85
  %v118 = vpack.c.b16 %v88, %v86
  %v119 = vpack.c.b16 %v91, %v89
  %v120 = vpack.c.b16 %v92, %v90
  %v121 = vpack.c.b16 %v95, %v93
  %v122 = vpack.c.b16 %v96, %v94
  %v123 = vpack.c.b16 %v99, %v97
  %v124 = vpack.c.b16 %v100, %v98
  %v125 = vpack.c.b16 %v103, %v101
  %v126 = vpack.c.b16 %v104, %v102
  %v127 = vpack.c.b16 %v107, %v105
  %v128 = vpack.c.b16 %v108, %v106
  %v129 = vpack.c.b16 %v111, %v109
  %v130 = vpack.c.b16 %v112, %v110
  %v131 = vpack.c.b16 %v115, %v113
  %v132 = vpack.c.b16 %v116, %v114
  %v181 = vunpack.c.l.b16 %v33
  %v182 = vunpack.c.l.b16 %v34
  %v183 = vunpack.c.l.b16 %v35
  %v184 = vunpack.c.l.b16 %v36
  %v185 = vunpack.c.l.b16 %v37
  %v186 = vunpack.c.l.b16 %v38
  %v187 = vunpack.c.l.b16 %v39
  %v188 = vunpack.c.l.b16 %v40
  %v189 = vunpack.c.l.b16 %v41
  %v190 = vunpack.c.l.b16 %v42
  %v191 = vunpack.c.l.b16 %v43
  %v192 = vunpack.c.l.b16 %v44
  %v193 = vunpack.c.l.b16 %v45
  %v194 = vunpack.c.l.b16 %v46
  %v195 = vunpack.c.l.b16 %v47
  %v196 = vunpack.c.l.b16 %v48
  %v197 = vunpack.c.l.b16 %v49
  %v198 = vunpack.c.l.b16 %v50
  %v199 = vunpack.c.l.b16 %v51
  %v200 = vunpack.c.l.b16 %v52
  %v201 = vunpack.c.l.b16 %v53
  %v202 = vunpack.c.l.b16 %v54
  %v203 = vunpack.c.l.b16 %v55
  %v204 = vunpack.c.l.b16 %v56
  %v205 = vunpack.c.l.b16 %v57
  %v206 = vunpack.c.l.b16 %v58
  %v207 = vunpack.c.l.b16 %v59
  %v208 = vunpack.c.l.b16 %v60
  %v209 = vunpack.c.l.b16 %v61
  %v210 = vunpack.c.l.b16 %v62
  %v211 = vunpack.c.l.b16 %v63
  %v212 = vunpack.c.l.b16 %v64
  %v213 = vpack.c.b16 %v182, %v181
  %v214 = vpack.c.b16 %v184, %v183
  %v215 = vpack.c.b16 %v186, %v185
  %v216 = vpack.c.b16 %v188, %v187
  %v217 = vpack.c.b16 %v190, %v189
  %v218 = vpack.c.b16 %v192, %v191
  %v219 = vpack.c.b16 %v194, %v193
  %v220 = vpack.c.b16 %v196, %v195
  %v221 = vpack.c.b16 %v198, %v197
  %v222 = vpack.c.b16 %v200, %v199
  %v223 = vpack.c.b16 %v202, %v201
  %v224 = vpack.c.b16 %v204, %v203
  %v225 = vpack.c.b16 %v206, %v205
  %v226 = vpack.c.b16 %v208, %v207
  %v227 = vpack.c.b16 %v210, %v209
  %v228 = vpack.c.b16 %v212, %v211
  %245 = vmatpush.bf16.msra.mxu0 %v220
  %246 = vmatpush.bf16.msra.mxu0 %v219
  %247 = vmatpush.bf16.msra.mxu0 %v218
  %248 = vmatpush.bf16.msra.mxu0 %v217
  %249 = vmatpush.bf16.msra.mxu0 %v216
  %250 = vmatpush.bf16.msra.mxu0 %v215
  %251 = vmatpush.bf16.msra.mxu0 %v214
  %252 = vmatpush.bf16.msra.mxu0 %v213
  %253 = vmatmul.bf16.gmra.mxu0 %v117
  %v254 = vpop.f32.mrf.mxu0
  %v255 = vadd.f32 %v67, %v254
  %v256 = vpop.f32.mrf.mxu0
  %v257 = vadd.f32 %v67, %v256
  %258 = vmatmul.bf16.gmra.mxu0 %v119
  %v259 = vpop.f32.mrf.mxu0
  %v260 = vadd.f32 %v67, %v259
  %v261 = vpop.f32.mrf.mxu0
  %v262 = vadd.f32 %v67, %v261
  %263 = vmatmul.bf16.gmra.mxu0 %v121
  %v264 = vpop.f32.mrf.mxu0
  %v265 = vadd.f32 %v67, %v264
  %v266 = vpop.f32.mrf.mxu0
  %v267 = vadd.f32 %v67, %v266
  %268 = vmatmul.bf16.gmra.mxu0 %v123
  %v269 = vpop.f32.mrf.mxu0
  %v270 = vadd.f32 %v67, %v269
  %v271 = vpop.f32.mrf.mxu0
  %v272 = vadd.f32 %v67, %v271
  %273 = vmatmul.bf16.gmra.mxu0 %v125
  %v274 = vpop.f32.mrf.mxu0
  %v275 = vadd.f32 %v67, %v274
  %v276 = vpop.f32.mrf.mxu0
  %v277 = vadd.f32 %v67, %v276
  %278 = vmatmul.bf16.gmra.mxu0 %v127
  %v279 = vpop.f32.mrf.mxu0
  %v280 = vadd.f32 %v67, %v279
  %v281 = vpop.f32.mrf.mxu0
  %v282 = vadd.f32 %v67, %v281
  %283 = vmatmul.bf16.gmra.mxu0 %v129
  %v284 = vpop.f32.mrf.mxu0
  %v285 = vadd.f32 %v67, %v284
  %v286 = vpop.f32.mrf.mxu0
  %v287 = vadd.f32 %v67, %v286
  %288 = vmatmul.bf16.gmra.mxu0 %v131
  %v289 = vpop.f32.mrf.mxu0
  %v290 = vadd.f32 %v67, %v289
  %v291 = vpop.f32.mrf.mxu0
  %v292 = vadd.f32 %v67, %v291
  %293 = vdwg.mxu0
  %294 = vmatpush.bf16.msra.mxu0 %v228
  %295 = vmatpush.bf16.msra.mxu0 %v227
  %296 = vmatpush.bf16.msra.mxu0 %v226
  %297 = vmatpush.bf16.msra.mxu0 %v225
  %298 = vmatpush.bf16.msra.mxu0 %v224
  %299 = vmatpush.bf16.msra.mxu0 %v223
  %300 = vmatpush.bf16.msra.mxu0 %v222
  %301 = vmatpush.bf16.msra.mxu0 %v221
  %302 = vmatmul.bf16.gmra.mxu0 %v118
  %v303 = vpop.f32.mrf.mxu0
  %v304 = vadd.f32 %v255, %v303
  %v305 = vpop.f32.mrf.mxu0
  %v306 = vadd.f32 %v257, %v305
  %307 = vmatmul.bf16.gmra.mxu0 %v120
  %v308 = vpop.f32.mrf.mxu0
  %v309 = vadd.f32 %v260, %v308
  %v310 = vpop.f32.mrf.mxu0
  %v311 = vadd.f32 %v262, %v310
  %312 = vmatmul.bf16.gmra.mxu0 %v122
  %v313 = vpop.f32.mrf.mxu0
  %v314 = vadd.f32 %v265, %v313
  %v315 = vpop.f32.mrf.mxu0
  %v316 = vadd.f32 %v267, %v315
  %317 = vmatmul.bf16.gmra.mxu0 %v124
  %v318 = vpop.f32.mrf.mxu0
  %v319 = vadd.f32 %v270, %v318
  %v320 = vpop.f32.mrf.mxu0
  %v321 = vadd.f32 %v272, %v320
  %322 = vmatmul.bf16.gmra.mxu0 %v126
  %v323 = vpop.f32.mrf.mxu0
  %v324 = vadd.f32 %v275, %v323
  %v325 = vpop.f32.mrf.mxu0
  %v326 = vadd.f32 %v277, %v325
  %327 = vmatmul.bf16.gmra.mxu0 %v128
  %v328 = vpop.f32.mrf.mxu0
  %v329 = vadd.f32 %v280, %v328
  %v330 = vpop.f32.mrf.mxu0
  %v331 = vadd.f32 %v282, %v330
  %332 = vmatmul.bf16.gmra.mxu0 %v130
  %v333 = vpop.f32.mrf.mxu0
  %v334 = vadd.f32 %v285, %v333
  %v335 = vpop.f32.mrf.mxu0
  %v336 = vadd.f32 %v287, %v335
  %337 = vmatmul.bf16.gmra.mxu0 %v132
  %v338 = vpop.f32.mrf.mxu0
  %v339 = vadd.f32 %v290, %v338
  %v340 = vpop.f32.mrf.mxu0
  %v341 = vadd.f32 %v292, %v340
  %342 = vdwg.mxu0
  %v343 = vpack.c.bf16 %v304, %v304
  %v344 = vpack.c.bf16 %v306, %v306
  %v345 = vpack.c.bf16 %v309, %v309
  %v346 = vpack.c.bf16 %v311, %v311
  %v347 = vpack.c.bf16 %v314, %v314
  %v348 = vpack.c.bf16 %v316, %v316
  %v349 = vpack.c.bf16 %v319, %v319
  %v350 = vpack.c.bf16 %v321, %v321
  %v351 = vpack.c.bf16 %v324, %v324
  %v352 = vpack.c.bf16 %v326, %v326
  %v353 = vpack.c.bf16 %v329, %v329
  %v354 = vpack.c.bf16 %v331, %v331
  %v355 = vpack.c.bf16 %v334, %v334
  %v356 = vpack.c.bf16 %v336, %v336
  %v357 = vpack.c.bf16 %v339, %v339
  %v358 = vpack.c.bf16 %v341, %v341
  %359 = vst [vmem:[%s3] sm:$0xf] %v343
  %360 = vst [vmem:[%s3 + $0x4] sm:$0xf] %v344
  %361 = vst [vmem:[%s3 + $0x8] sm:$0xf] %v345
  %362 = vst [vmem:[%s3 + $0xc] sm:$0xf] %v346
  %363 = vst [vmem:[%s3 + $0x10] sm:$0xf] %v347
  %364 = vst [vmem:[%s3 + $0x14] sm:$0xf] %v348
  %365 = vst [vmem:[%s3 + $0x18] sm:$0xf] %v349
  %366 = vst [vmem:[%s3 + $0x1c] sm:$0xf] %v350
  %367 = vst [vmem:[%s3 + $0x20] sm:$0xf] %v351
  %368 = vst [vmem:[%s3 + $0x24] sm:$0xf] %v352
  %369 = vst [vmem:[%s3 + $0x28] sm:$0xf] %v353
  %370 = vst [vmem:[%s3 + $0x2c] sm:$0xf] %v354
  %371 = vst [vmem:[%s3 + $0x30] sm:$0xf] %v355
  %372 = vst [vmem:[%s3 + $0x34] sm:$0xf] %v356
  %373 = vst [vmem:[%s3 + $0x38] sm:$0xf] %v357
  %374 = vst [vmem:[%s3 + $0x3c] sm:$0xf] %v358
  %v375 = vadd.f32 %v304, %v306
  %v376 = vadd.f32 %v375, %v309
  %v377 = vadd.f32 %v376, %v311
  %v378 = vadd.f32 %v377, %v314
  %v379 = vadd.f32 %v378, %v316
  %v380 = vadd.f32 %v379, %v319
  %v381 = vadd.f32 %v380, %v321
  %v382 = vadd.f32 %v381, %v324
  %v383 = vadd.f32 %v382, %v326
  %v384 = vadd.f32 %v383, %v329
  %v385 = vadd.f32 %v384, %v331
  %v386 = vadd.f32 %v385, %v334
  %v387 = vadd.f32 %v386, %v336
  %v388 = vadd.f32 %v387, %v339
  %v389 = vadd.f32 %v388, %v341
  %390 = vst [vmem:[%s4] sm:$0xff] %v389
  %v391 = vmul.f32 %v304, %v304
  %v392 = vmul.f32 %v306, %v306
  %v393 = vmul.f32 %v309, %v309
  %v394 = vmul.f32 %v311, %v311
  %v395 = vmul.f32 %v314, %v314
  %v396 = vmul.f32 %v316, %v316
  %v397 = vmul.f32 %v319, %v319
  %v398 = vmul.f32 %v321, %v321
  %v399 = vmul.f32 %v324, %v324
  %v400 = vmul.f32 %v326, %v326
  %v401 = vmul.f32 %v329, %v329
  %v402 = vmul.f32 %v331, %v331
  %v403 = vmul.f32 %v334, %v334
  %v404 = vmul.f32 %v336, %v336
  %v405 = vmul.f32 %v339, %v339
  %v406 = vmul.f32 %v341, %v341
  %v407 = vadd.f32 %v391, %v392
  %v408 = vadd.f32 %v407, %v393
  %v409 = vadd.f32 %v408, %v394
  %v410 = vadd.f32 %v409, %v395
  %v411 = vadd.f32 %v410, %v396
  %v412 = vadd.f32 %v411, %v397
  %v413 = vadd.f32 %v412, %v398
  %v414 = vadd.f32 %v413, %v399
  %v415 = vadd.f32 %v414, %v400
  %v416 = vadd.f32 %v415, %v401
  %v417 = vadd.f32 %v416, %v402
  %v418 = vadd.f32 %v417, %v403
  %v419 = vadd.f32 %v418, %v404
  %v420 = vadd.f32 %v419, %v405
  %v421 = vadd.f32 %v420, %v406
  %422 = vst [vmem:[%s5] sm:$0xff] %v421
  // Predicated region
  $region14: #{discriminator_forward.6} parent=0 // pred_check
    _
  $region15: #{discriminator_forward.6} parent=0 // pred_check_branch
    %424 = sbr.rel (0) target = $region17
  $region16: #{discriminator_forward.6} parent=0 // pred_region
    _
  $region17: #{discriminator_forward.6} parent=0 // pred_fallthru
    _
  // Predicated region
  $region18: #{discriminator_forward.6} parent=0 // pred_check
    _
  $region19: #{discriminator_forward.6} parent=0 // pred_check_branch
    %426 = sbr.rel (0) target = $region21
  $region20: #{discriminator_forward.6} parent=0 // pred_region
    _
  $region21: #{discriminator_forward.6} parent=0 // pred_fallthru
    _
  // Predicated region
  $region22: #{discriminator_forward.6} parent=0 // pred_check
    _
  $region23: #{discriminator_forward.6} parent=0 // pred_check_branch
    %428 = sbr.rel (0) target = $region25
  $region24: #{discriminator_forward.6} parent=0 // pred_region
    _
  $region25: #{discriminator_forward.6} parent=0 // pred_fallthru
    _
  // Predicated region
  $region26: #{discriminator_forward.6} parent=0 // pred_check
    _
  $region27: #{discriminator_forward.6} parent=0 // pred_check_branch
    %430 = sbr.rel (0) target = $region29
  $region28: #{discriminator_forward.6} parent=0 // pred_region
    _
  $region29: #{discriminator_forward.6} parent=0 // pred_fallthru
    _
  // Predicated region
  $region30: #{discriminator_forward.6} parent=0 // pred_check
    _
  $region31: #{discriminator_forward.6} parent=0 // pred_check_branch
    %432 = sbr.rel (0) target = $region33
  $region32: #{discriminator_forward.6} parent=0 // pred_region
    _
  $region33: #{discriminator_forward.6} parent=0 // pred_fallthru
    _
  // Predicated region
  $region34: #{discriminator_forward.6} parent=0 // pred_check
    _
  $region35: #{discriminator_forward.6} parent=0 // pred_check_branch
    %434 = sbr.rel (0) target = $region37
  $region36: #{discriminator_forward.6} parent=0 // pred_region
    _
  $region37: #{discriminator_forward.6} parent=0 // pred_fallthru
    _

// kernel: discriminator_forward.7
$region0: #{discriminator_forward.7}
  #allocation0 [shape = 'u32[]', space=smem, size = 0x4, offset = 0x4, fixed_abs, tag = 'smem constant byte address 0x4 - core index']
  #allocation1 [shape = 'u32[72,128]{1,0:T(1,128)}', space=vmem, size = 0x9000, scoped, tag = 'internal scratch']
  %s0 = inlined_call_operand.vmem [shape: bf16[32,512], index: 0, kind: input, shape index: {}]
  %s1 = inlined_call_operand.vmem [shape: bf16[512,128], index: 1, kind: input, shape index: {}]
  %s2 = inlined_call_operand.vmem [shape: f32[1,128], index: 2, kind: input, shape index: {}]
  %s3 = inlined_call_operand.vmem [shape: bf16[32,128], index: 3, kind: output, shape index: {0}]
  %s4 = inlined_call_operand.vmem [shape: f32[8,128], index: 4, kind: output, shape index: {1}]
  %s5 = inlined_call_operand.vmem [shape: f32[8,128], index: 5, kind: output, shape index: {2}]
  %6 = xla_tuple %s3, %s4, %s5
  %s7 = sld [smem:[#allocation0]]
  $region38: #{discriminator_forward.7} parent=0
    _
  %s9 = ssub.s32 1, %s7
  %s10 = scalar_select 0, %s9, %s7
  // Predicated region
  $region2: #{discriminator_forward.7} parent=0 // pred_check
    _
  $region3: #{discriminator_forward.7} parent=0 // pred_check_branch
    %12 = sbr.rel (0) target = $region5
  $region4: #{discriminator_forward.7} parent=0 // pred_region
    _
  $region5: #{discriminator_forward.7} parent=0 // pred_fallthru
    _
  // Predicated region
  $region6: #{discriminator_forward.7} parent=0 // pred_check
    _
  $region7: #{discriminator_forward.7} parent=0 // pred_check_branch
    %14 = sbr.rel (0) target = $region9
  $region8: #{discriminator_forward.7} parent=0 // pred_region
    _
  $region9: #{discriminator_forward.7} parent=0 // pred_fallthru
    _
  // Predicated region
  $region10: #{discriminator_forward.7} parent=0 // pred_check
    _
  $region11: #{discriminator_forward.7} parent=0 // pred_check_branch
    %16 = sbr.rel (0) target = $region13
  $region12: #{discriminator_forward.7} parent=0 // pred_region
    _
  $region13: #{discriminator_forward.7} parent=0 // pred_fallthru
    _
  %v17 = vld [vmem:[%s0] sm:$0xff]
  %v18 = vld [vmem:[%s0 + $0x8] sm:$0xff]
  %v19 = vld [vmem:[%s0 + $0x10] sm:$0xff]
  %v20 = vld [vmem:[%s0 + $0x18] sm:$0xff]
  %v21 = vld [vmem:[%s0 + $0x20] sm:$0xff]
  %v22 = vld [vmem:[%s0 + $0x28] sm:$0xff]
  %v23 = vld [vmem:[%s0 + $0x30] sm:$0xff]
  %v24 = vld [vmem:[%s0 + $0x38] sm:$0xff]
  %v25 = vld [vmem:[%s1] sm:$0xf]
  %v26 = vld [vmem:[%s1 + $0x4] sm:$0xf]
  %v27 = vld [vmem:[%s1 + $0x8] sm:$0xf]
  %v28 = vld [vmem:[%s1 + $0xc] sm:$0xf]
  %v29 = vld [vmem:[%s1 + $0x10] sm:$0xf]
  %v30 = vld [vmem:[%s1 + $0x14] sm:$0xf]
  %v31 = vld [vmem:[%s1 + $0x18] sm:$0xf]
  %v32 = vld [vmem:[%s1 + $0x1c] sm:$0xf]
  %v33 = vld [vmem:[%s1 + $0x20] sm:$0xf]
  %v34 = vld [vmem:[%s1 + $0x24] sm:$0xf]
  %v35 = vld [vmem:[%s1 + $0x28] sm:$0xf]
  %v36 = vld [vmem:[%s1 + $0x2c] sm:$0xf]
  %v37 = vld [vmem:[%s1 + $0x30] sm:$0xf]
  %v38 = vld [vmem:[%s1 + $0x34] sm:$0xf]
  %v39 = vld [vmem:[%s1 + $0x38] sm:$0xf]
  %v40 = vld [vmem:[%s1 + $0x3c] sm:$0xf]
  %v41 = vld [vmem:[%s1 + $0x40] sm:$0xf]
  %v42 = vld [vmem:[%s1 + $0x44] sm:$0xf]
  %v43 = vld [vmem:[%s1 + $0x48] sm:$0xf]
  %v44 = vld [vmem:[%s1 + $0x4c] sm:$0xf]
  %v45 = vld [vmem:[%s1 + $0x50] sm:$0xf]
  %v46 = vld [vmem:[%s1 + $0x54] sm:$0xf]
  %v47 = vld [vmem:[%s1 + $0x58] sm:$0xf]
  %v48 = vld [vmem:[%s1 + $0x5c] sm:$0xf]
  %v49 = vld [vmem:[%s1 + $0x60] sm:$0xf]
  %v50 = vld [vmem:[%s1 + $0x64] sm:$0xf]
  %v51 = vld [vmem:[%s1 + $0x68] sm:$0xf]
  %v52 = vld [vmem:[%s1 + $0x6c] sm:$0xf]
  %v53 = vld [vmem:[%s1 + $0x70] sm:$0xf]
  %v54 = vld [vmem:[%s1 + $0x74] sm:$0xf]
  %v55 = vld [vmem:[%s1 + $0x78] sm:$0xf]
  %v56 = vld [vmem:[%s1 + $0x7c] sm:$0xf]
  %v57 = vld [vmem:[%s1 + $0x80] sm:$0xf]
  %v58 = vld [vmem:[%s1 + $0x84] sm:$0xf]
  %v59 = vld [vmem:[%s1 + $0x88] sm:$0xf]
  %v60 = vld [vmem:[%s1 + $0x8c] sm:$0xf]
  %v61 = vld [vmem:[%s1 + $0x90] sm:$0xf]
  %v62 = vld [vmem:[%s1 + $0x94] sm:$0xf]
  %v63 = vld [vmem:[%s1 + $0x98] sm:$0xf]
  %v64 = vld [vmem:[%s1 + $0x9c] sm:$0xf]
  %v65 = vld [vmem:[%s1 + $0xa0] sm:$0xf]
  %v66 = vld [vmem:[%s1 + $0xa4] sm:$0xf]
  %v67 = vld [vmem:[%s1 + $0xa8] sm:$0xf]
  %v68 = vld [vmem:[%s1 + $0xac] sm:$0xf]
  %v69 = vld [vmem:[%s1 + $0xb0] sm:$0xf]
  %v70 = vld [vmem:[%s1 + $0xb4] sm:$0xf]
  %v71 = vld [vmem:[%s1 + $0xb8] sm:$0xf]
  %v72 = vld [vmem:[%s1 + $0xbc] sm:$0xf]
  %v73 = vld [vmem:[%s1 + $0xc0] sm:$0xf]
  %v74 = vld [vmem:[%s1 + $0xc4] sm:$0xf]
  %v75 = vld [vmem:[%s1 + $0xc8] sm:$0xf]
  %v76 = vld [vmem:[%s1 + $0xcc] sm:$0xf]
  %v77 = vld [vmem:[%s1 + $0xd0] sm:$0xf]
  %v78 = vld [vmem:[%s1 + $0xd4] sm:$0xf]
  %v79 = vld [vmem:[%s1 + $0xd8] sm:$0xf]
  %v80 = vld [vmem:[%s1 + $0xdc] sm:$0xf]
  %v81 = vld [vmem:[%s1 + $0xe0] sm:$0xf]
  %v82 = vld [vmem:[%s1 + $0xe4] sm:$0xf]
  %v83 = vld [vmem:[%s1 + $0xe8] sm:$0xf]
  %v84 = vld [vmem:[%s1 + $0xec] sm:$0xf]
  %v85 = vld [vmem:[%s1 + $0xf0] sm:$0xf]
  %v86 = vld [vmem:[%s1 + $0xf4] sm:$0xf]
  %v87 = vld [vmem:[%s1 + $0xf8] sm:$0xf]
  %v88 = vld [vmem:[%s1 + $0xfc] sm:$0xf]
  %v89 = vld [vmem:[%s2] sm:$0x1]
  %v91 = vperm.slane %v89, 0
  %v101 = vunpack.c.l.b16 %v17
  %v102 = vunpack.c.h.b16 %v17
  %v103 = vunpack.c.l.b16 %v18
  %v104 = vunpack.c.h.b16 %v18
  %v105 = vunpack.c.l.b16 %v19
  %v106 = vunpack.c.h.b16 %v19
  %v107 = vunpack.c.l.b16 %v20
  %v108 = vunpack.c.h.b16 %v20
  %v109 = vunpack.c.l.b16 %v21
  %v110 = vunpack.c.h.b16 %v21
  %v111 = vunpack.c.l.b16 %v22
  %v112 = vunpack.c.h.b16 %v22
  %v113 = vunpack.c.l.b16 %v23
  %v114 = vunpack.c.h.b16 %v23
  %v115 = vunpack.c.l.b16 %v24
  %v116 = vunpack.c.h.b16 %v24
  %v117 = vpack.c.b16 %v105, %v101
  %v118 = vpack.c.b16 %v106, %v102
  %v119 = vpack.c.b16 %v107, %v103
  %v120 = vpack.c.b16 %v108, %v104
  %v121 = vpack.c.b16 %v113, %v109
  %v122 = vpack.c.b16 %v114, %v110
  %v123 = vpack.c.b16 %v115, %v111
  %v124 = vpack.c.b16 %v116, %v112
  %v197 = vunpack.c.l.b16 %v25
  %v198 = vunpack.c.l.b16 %v26
  %v199 = vunpack.c.l.b16 %v27
  %v200 = vunpack.c.l.b16 %v28
  %v201 = vunpack.c.l.b16 %v29
  %v202 = vunpack.c.l.b16 %v30
  %v203 = vunpack.c.l.b16 %v31
  %v204 = vunpack.c.l.b16 %v32
  %v205 = vunpack.c.l.b16 %v33
  %v206 = vunpack.c.l.b16 %v34
  %v207 = vunpack.c.l.b16 %v35
  %v208 = vunpack.c.l.b16 %v36
  %v209 = vunpack.c.l.b16 %v37
  %v210 = vunpack.c.l.b16 %v38
  %v211 = vunpack.c.l.b16 %v39
  %v212 = vunpack.c.l.b16 %v40
  %v213 = vunpack.c.l.b16 %v41
  %v214 = vunpack.c.l.b16 %v42
  %v215 = vunpack.c.l.b16 %v43
  %v216 = vunpack.c.l.b16 %v44
  %v217 = vunpack.c.l.b16 %v45
  %v218 = vunpack.c.l.b16 %v46
  %v219 = vunpack.c.l.b16 %v47
  %v220 = vunpack.c.l.b16 %v48
  %v221 = vunpack.c.l.b16 %v49
  %v222 = vunpack.c.l.b16 %v50
  %v223 = vunpack.c.l.b16 %v51
  %v224 = vunpack.c.l.b16 %v52
  %v225 = vunpack.c.l.b16 %v53
  %v226 = vunpack.c.l.b16 %v54
  %v227 = vunpack.c.l.b16 %v55
  %v228 = vunpack.c.l.b16 %v56
  %v229 = vunpack.c.l.b16 %v57
  %v230 = vunpack.c.l.b16 %v58
  %v231 = vunpack.c.l.b16 %v59
  %v232 = vunpack.c.l.b16 %v60
  %v233 = vunpack.c.l.b16 %v61
  %v234 = vunpack.c.l.b16 %v62
  %v235 = vunpack.c.l.b16 %v63
  %v236 = vunpack.c.l.b16 %v64
  %v237 = vunpack.c.l.b16 %v65
  %v238 = vunpack.c.l.b16 %v66
  %v239 = vunpack.c.l.b16 %v67
  %v240 = vunpack.c.l.b16 %v68
  %v241 = vunpack.c.l.b16 %v69
  %v242 = vunpack.c.l.b16 %v70
  %v243 = vunpack.c.l.b16 %v71
  %v244 = vunpack.c.l.b16 %v72
  %v245 = vunpack.c.l.b16 %v73
  %v246 = vunpack.c.l.b16 %v74
  %v247 = vunpack.c.l.b16 %v75
  %v248 = vunpack.c.l.b16 %v76
  %v249 = vunpack.c.l.b16 %v77
  %v250 = vunpack.c.l.b16 %v78
  %v251 = vunpack.c.l.b16 %v79
  %v252 = vunpack.c.l.b16 %v80
  %v253 = vunpack.c.l.b16 %v81
  %v254 = vunpack.c.l.b16 %v82
  %v255 = vunpack.c.l.b16 %v83
  %v256 = vunpack.c.l.b16 %v84
  %v257 = vunpack.c.l.b16 %v85
  %v258 = vunpack.c.l.b16 %v86
  %v259 = vunpack.c.l.b16 %v87
  %v260 = vunpack.c.l.b16 %v88
  %v261 = vpack.c.b16 %v198, %v197
  %v262 = vpack.c.b16 %v200, %v199
  %v263 = vpack.c.b16 %v202, %v201
  %v264 = vpack.c.b16 %v204, %v203
  %v265 = vpack.c.b16 %v206, %v205
  %v266 = vpack.c.b16 %v208, %v207
  %v267 = vpack.c.b16 %v210, %v209
  %v268 = vpack.c.b16 %v212, %v211
  %v269 = vpack.c.b16 %v214, %v213
  %v270 = vpack.c.b16 %v216, %v215
  %v271 = vpack.c.b16 %v218, %v217
  %v272 = vpack.c.b16 %v220, %v219
  %v273 = vpack.c.b16 %v222, %v221
  %v274 = vpack.c.b16 %v224, %v223
  %v275 = vpack.c.b16 %v226, %v225
  %v276 = vpack.c.b16 %v228, %v227
  %v277 = vpack.c.b16 %v230, %v229
  %v278 = vpack.c.b16 %v232, %v231
  %v279 = vpack.c.b16 %v234, %v233
  %v280 = vpack.c.b16 %v236, %v235
  %v281 = vpack.c.b16 %v238, %v237
  %v282 = vpack.c.b16 %v240, %v239
  %v283 = vpack.c.b16 %v242, %v241
  %v284 = vpack.c.b16 %v244, %v243
  %v285 = vpack.c.b16 %v246, %v245
  %v286 = vpack.c.b16 %v248, %v247
  %v287 = vpack.c.b16 %v250, %v249
  %v288 = vpack.c.b16 %v252, %v251
  %v289 = vpack.c.b16 %v254, %v253
  %v290 = vpack.c.b16 %v256, %v255
  %v291 = vpack.c.b16 %v258, %v257
  %v292 = vpack.c.b16 %v260, %v259
  %325 = vmatpush.bf16.msra.mxu0 %v268
  %326 = vmatpush.bf16.msra.mxu0 %v267
  %327 = vmatpush.bf16.msra.mxu0 %v266
  %328 = vmatpush.bf16.msra.mxu0 %v265
  %329 = vmatpush.bf16.msra.mxu0 %v264
  %330 = vmatpush.bf16.msra.mxu0 %v263
  %331 = vmatpush.bf16.msra.mxu0 %v262
  %332 = vmatpush.bf16.msra.mxu0 %v261
  %333 = vmatmul.bf16.gmra.mxu0 %v117
  %v334 = vpop.f32.mrf.mxu0
  %v335 = vadd.f32 %v91, %v334
  %v336 = vpop.f32.mrf.mxu0
  %v337 = vadd.f32 %v91, %v336
  %338 = vmatmul.bf16.gmra.mxu0 %v121
  %v339 = vpop.f32.mrf.mxu0
  %v340 = vadd.f32 %v91, %v339
  %v341 = vpop.f32.mrf.mxu0
  %v342 = vadd.f32 %v91, %v341
  %343 = vdwg.mxu0
  %344 = vmatpush.bf16.msra.mxu0 %v276
  %345 = vmatpush.bf16.msra.mxu0 %v275
  %346 = vmatpush.bf16.msra.mxu0 %v274
  %347 = vmatpush.bf16.msra.mxu0 %v273
  %348 = vmatpush.bf16.msra.mxu0 %v272
  %349 = vmatpush.bf16.msra.mxu0 %v271
  %350 = vmatpush.bf16.msra.mxu0 %v270
  %351 = vmatpush.bf16.msra.mxu0 %v269
  %352 = vmatmul.bf16.gmra.mxu0 %v118
  %v353 = vpop.f32.mrf.mxu0
  %v354 = vadd.f32 %v335, %v353
  %v355 = vpop.f32.mrf.mxu0
  %v356 = vadd.f32 %v337, %v355
  %357 = vmatmul.bf16.gmra.mxu0 %v122
  %v358 = vpop.f32.mrf.mxu0
  %v359 = vadd.f32 %v340, %v358
  %v360 = vpop.f32.mrf.mxu0
  %v361 = vadd.f32 %v342, %v360
  %362 = vdwg.mxu0
  %363 = vmatpush.bf16.msra.mxu0 %v284
  %364 = vmatpush.bf16.msra.mxu0 %v283
  %365 = vmatpush.bf16.msra.mxu0 %v282
  %366 = vmatpush.bf16.msra.mxu0 %v281
  %367 = vmatpush.bf16.msra.mxu0 %v280
  %368 = vmatpush.bf16.msra.mxu0 %v279
  %369 = vmatpush.bf16.msra.mxu0 %v278
  %370 = vmatpush.bf16.msra.mxu0 %v277
  %371 = vmatmul.bf16.gmra.mxu0 %v119
  %v372 = vpop.f32.mrf.mxu0
  %v373 = vadd.f32 %v354, %v372
  %v374 = vpop.f32.mrf.mxu0
  %v375 = vadd.f32 %v356, %v374
  %376 = vmatmul.bf16.gmra.mxu0 %v123
  %v377 = vpop.f32.mrf.mxu0
  %v378 = vadd.f32 %v359, %v377
  %v379 = vpop.f32.mrf.mxu0
  %v380 = vadd.f32 %v361, %v379
  %381 = vdwg.mxu0
  %382 = vmatpush.bf16.msra.mxu0 %v292
  %383 = vmatpush.bf16.msra.mxu0 %v291
  %384 = vmatpush.bf16.msra.mxu0 %v290
  %385 = vmatpush.bf16.msra.mxu0 %v289
  %386 = vmatpush.bf16.msra.mxu0 %v288
  %387 = vmatpush.bf16.msra.mxu0 %v287
  %388 = vmatpush.bf16.msra.mxu0 %v286
  %389 = vmatpush.bf16.msra.mxu0 %v285
  %390 = vmatmul.bf16.gmra.mxu0 %v120
  %v391 = vpop.f32.mrf.mxu0
  %v392 = vadd.f32 %v373, %v391
  %v393 = vpop.f32.mrf.mxu0
  %v394 = vadd.f32 %v375, %v393
  %395 = vmatmul.bf16.gmra.mxu0 %v124
  %v396 = vpop.f32.mrf.mxu0
  %v397 = vadd.f32 %v378, %v396
  %v398 = vpop.f32.mrf.mxu0
  %v399 = vadd.f32 %v380, %v398
  %400 = vdwg.mxu0
  %v401 = vpack.c.bf16 %v392, %v392
  %v402 = vpack.c.bf16 %v394, %v394
  %v403 = vpack.c.bf16 %v397, %v397
  %v404 = vpack.c.bf16 %v399, %v399
  %405 = vst [vmem:[%s3] sm:$0xf] %v401
  %406 = vst [vmem:[%s3 + $0x4] sm:$0xf] %v402
  %407 = vst [vmem:[%s3 + $0x8] sm:$0xf] %v403
  %408 = vst [vmem:[%s3 + $0xc] sm:$0xf] %v404
  %v409 = vadd.f32 %v392, %v394
  %v410 = vadd.f32 %v409, %v397
  %v411 = vadd.f32 %v410, %v399
  %412 = vst [vmem:[%s4] sm:$0xff] %v411
  %v413 = vmul.f32 %v392, %v392
  %v414 = vmul.f32 %v394, %v394
  %v415 = vmul.f32 %v397, %v397
  %v416 = vmul.f32 %v399, %v399
  %v417 = vadd.f32 %v413, %v414
  %v418 = vadd.f32 %v417, %v415
  %v419 = vadd.f32 %v418, %v416
  %420 = vst [vmem:[%s5] sm:$0xff] %v419
  // Predicated region
  $region14: #{discriminator_forward.7} parent=0 // pred_check
    _
  $region15: #{discriminator_forward.7} parent=0 // pred_check_branch
    %422 = sbr.rel (0) target = $region17
  $region16: #{discriminator_forward.7} parent=0 // pred_region
    _
  $region17: #{discriminator_forward.7} parent=0 // pred_fallthru
    _
  // Predicated region
  $region18: #{discriminator_forward.7} parent=0 // pred_check
    _
  $region19: #{discriminator_forward.7} parent=0 // pred_check_branch
    %424 = sbr.rel (0) target = $region21
  $region20: #{discriminator_forward.7} parent=0 // pred_region
    _
  $region21: #{discriminator_forward.7} parent=0 // pred_fallthru
    _
  // Predicated region
  $region22: #{discriminator_forward.7} parent=0 // pred_check
    _
  $region23: #{discriminator_forward.7} parent=0 // pred_check_branch
    %426 = sbr.rel (0) target = $region25
  $region24: #{discriminator_forward.7} parent=0 // pred_region
    _
  $region25: #{discriminator_forward.7} parent=0 // pred_fallthru
    _
  // Predicated region
  $region26: #{discriminator_forward.7} parent=0 // pred_check
    _
  $region27: #{discriminator_forward.7} parent=0 // pred_check_branch
    %428 = sbr.rel (0) target = $region29
  $region28: #{discriminator_forward.7} parent=0 // pred_region
    _
  $region29: #{discriminator_forward.7} parent=0 // pred_fallthru
    _
  // Predicated region
  $region30: #{discriminator_forward.7} parent=0 // pred_check
    _
  $region31: #{discriminator_forward.7} parent=0 // pred_check_branch
    %430 = sbr.rel (0) target = $region33
  $region32: #{discriminator_forward.7} parent=0 // pred_region
    _
  $region33: #{discriminator_forward.7} parent=0 // pred_fallthru
    _
  // Predicated region
  $region34: #{discriminator_forward.7} parent=0 // pred_check
    _
  $region35: #{discriminator_forward.7} parent=0 // pred_check_branch
    %432 = sbr.rel (0) target = $region37
  $region36: #{discriminator_forward.7} parent=0 // pred_region
    _
  $region37: #{discriminator_forward.7} parent=0 // pred_fallthru
    _

</llo_original>
